<compile_context>
chip_gen: v5e
topology: v5e:2x2
jax: 0.10.0
libtpu: 0.0.40
codegen_flags: <defaults>
</compile_context>

<pallas_src>
import functools

import jax
import jax.numpy as jnp
from jax import lax
from jax.experimental import pallas as pl
from jax.experimental.pallas import tpu as pltpu


# Contraction dims below this stay on the VPU (broadcast-MAC); at/above they go
# to the MXU.  For realistic (>=128-channel) stages on v6e/v7x set
# _MXU_IN_DTYPE = jnp.bfloat16 to halve MXU input bytes (accumulation stays
# f32); kept f32 here so the small test matches the f32 reference exactly and
# stays valid on v5e.
_MXU_MIN_K = 8
_MXU_IN_DTYPE = jnp.float32


def _pointwise_conv(x, w):
    """1x1 conv: x [R, Wd, K] (channels-last) @ w [K, C] -> [R, Wd, C], f32."""
    R, Wd, K = x.shape
    C = w.shape[1]
    if K < _MXU_MIN_K:
        # Tiny contraction: K unrolled broadcast-mul-adds on the VPU (a reshape
        # to feed the MXU would cost more in relayout than it saves).
        acc = x[:, :, 0:1] * w[0:1, :]
        for k in range(1, K):
            acc = acc + x[:, :, k:k + 1] * w[k:k + 1, :]
        return acc.astype(jnp.float32)
    # MXU path: collapse the leading dims (sublane-clean when Wd % 8 == 0).
    y = jnp.dot(x.reshape(R * Wd, K).astype(_MXU_IN_DTYPE),
                w.astype(_MXU_IN_DTYPE),
                preferred_element_type=jnp.float32)
    return y.reshape(R, Wd, C)


def _make_fused_kernel(*, stride, padding, TR, rows_in, Wp, Wout,
                       nblk, bot_pad, use_res):
    """Fused InvertedResidual kernel for one (batch, row-block) grid step."""

    def kernel(x_ref, w1_ref, wd_ref, w3_ref, pv_ref, b3_ref, o_ref, h_scr):
        hid = h_scr.shape[-1]
        i = pl.program_id(1)
        row0 = i * (TR * stride)

        # ---- 1x1 expand (BN scale folded into w1) + bias + PReLU ------------
        xwin = x_ref[pl.ds(row0, rows_in), :, :]           # (rows_in, Wp, cin)
        h = _pointwise_conv(xwin, w1_ref[...])             # (rows_in, Wp, hid)
        h = h + pv_ref[0:1, :]                             # b1
        h = jnp.where(h >= 0.0, h, pv_ref[1:2, :] * h)     # PReLU(alpha1)
        h_scr[...] = h                                     # stays in VMEM

        # ---- zero the 3x3-conv padding ring by direct stores -----------------
        # (the reference zero-pads the *activated* expanded tensor; with the
        # zero-padded input the padded positions hold PReLU(b1), so store 0s)
        if padding > 0:
            zcol = jnp.zeros((rows_in, padding, hid), jnp.float32)
            h_scr[:, 0:padding, :] = zcol
            h_scr[:, Wp - padding:Wp, :] = zcol

            @pl.when(i == 0)
            def _():
                h_scr[0:padding, :, :] = jnp.zeros((padding, Wp, hid),
                                                   jnp.float32)

            if bot_pad > 0:
                @pl.when(i == nblk - 1)
                def _():
                    h_scr[rows_in - bot_pad:rows_in, :, :] = jnp.zeros(
                        (bot_pad, Wp, hid), jnp.float32)

        # ---- 3x3 depthwise (BN scale folded into wd) + bias + PReLU ----------
        wd = wd_ref[...]                                   # (9, hid)
        acc = None
        for kh in range(3):
            if stride == 1:
                # One aligned full-width read per kh; kw shifts are register
                # slices instead of 9 sublane-offset VMEM reads.
                rowblk = h_scr[pl.ds(kh, TR), :, :]        # (TR, Wp, hid)
            for kw in range(3):
                k = 3 * kh + kw
                if stride == 1:
                    tap = rowblk[:, kw:kw + Wout, :]
                else:
                    tap = h_scr[pl.ds(kh, TR, stride=stride),
                                pl.ds(kw, Wout, stride=stride), :]
                t = tap * wd[k:k + 1, :]
                acc = t if acc is None else acc + t
        g = acc + pv_ref[2:3, :]                           # b2
        g = jnp.where(g >= 0.0, g, pv_ref[3:4, :] * g)     # PReLU(alpha2)

        # ---- 1x1 project (BN scale folded into w3) + bias (+ residual) -------
        y = _pointwise_conv(g, w3_ref[...])                # (TR, Wout, cout)
        y = y + b3_ref[...]                                # b3
        if use_res:
            # Residual read straight from the padded input plane
            # (stride==1, cin==cout, Wout==W guaranteed by the wrapper assert).
            y = y + x_ref[pl.ds(padding + i * TR, TR), pl.ds(padding, Wout), :]
        # NOTE: with tiny cout every vst is masked; a (W, C)->lane fold would
        # need an end-to-end relayout that is not worth it at these shapes.
        o_ref[...] = y

    return kernel


def _round_up(v, m):
    return ((v + m - 1) // m) * m


def _block_bytes(rows, w, c, dtype_bytes=4):
    """Bytes of a channels-last (rows, w, c) VMEM block after (8,128) tiling."""
    return rows * _round_up(max(w, 1), 8) * _round_up(max(c, 1), 128) * dtype_bytes


def _pick_row_tile(N, Hout, Hp, Wp, Wout, cin, hid, cout, stride,
                   vmem_budget_bytes=12 << 20):
    """Largest divisor of Hout whose padded-tile VMEM footprint fits the budget.
    Budget is conservative (fits v5e's 16 MiB scoped default); for large
    configs raise it together with CompilerParams(vmem_limit_bytes=...)."""
    # TR-independent footprint: full padded input plane (double-buffered) plus
    # the folded weights / packed per-channel vectors.
    fixed = 2 * _block_bytes(Hp, Wp, cin)
    fixed += 2 * (_block_bytes(1, cin, hid)      # w1 (folded)
                  + _block_bytes(1, 9, hid)      # wd (folded)
                  + _block_bytes(1, hid, cout)   # w3 (folded)
                  + _block_bytes(1, 4, hid)      # [b1,a1,b2,a2]
                  + _block_bytes(1, 1, cout))    # b3

    def tile_bytes(tr):
        rows_in = (tr - 1) * stride + 3
        return (fixed
                + _block_bytes(rows_in, Wp, hid)        # expanded VMEM scratch
                + 2 * _block_bytes(tr, Wout, cout)      # double-buffered output
                + _block_bytes(rows_in, Wp, hid)        # expand-phase live values
                + 2 * _block_bytes(tr, Wout, hid))      # depthwise acc / tap temps

    divisors = [d for d in range(1, Hout + 1) if Hout % d == 0]
    fitting = [d for d in divisors if tile_bytes(d) <= vmem_budget_bytes] or [1]
    best = max(fitting)
    # v7x megacore: only shrink TR when batch*row-blocks would otherwise leave
    # a TensorCore idle (on v5e/v6e this preference would just cost tile size).
    if N * (Hout // best) < 2:
        multi = [d for d in fitting if Hout // d >= 2]
        if multi:
            best = max(multi)
    return best


# ----------------------------------------------------------------------------
# Forward pass (single fused Pallas kernel)
# ----------------------------------------------------------------------------
@functools.partial(jax.jit, static_argnames=("stride", "padding", "use_res"))
def invres_forward(x_nchw, p, stride, padding, use_res):
    N, cin, H, W = x_nchw.shape
    hid = p["w1"].shape[1]
    cout = p["w3"].shape[1]

    Hp, Wp = H + 2 * padding, W + 2 * padding
    Hout = (Hp - 3) // stride + 1
    Wout = (Wp - 3) // stride + 1
    if use_res:
        assert stride == 1 and cin == cout and Hout == H and Wout == W, (
            "residual connection requires matching input/output shapes")

    x = jnp.transpose(x_nchw, (0, 2, 3, 1)).astype(jnp.float32)      # NHWC
    xp = jnp.pad(x, ((0, 0), (padding, padding), (padding, padding), (0, 0)))

    # ---- fold the eval-mode BN scales into the conv weights ------------------
    w1f = p["w1"] * p["s1"]                              # (cin, hid)
    wdf = (p["wd"] * p["s2"][0]).reshape(9, hid)         # (kh*3+kw, hid)
    w3f = p["w3"] * p["s3"]                              # (hid, cout)
    pvec = jnp.concatenate([p["b1"], p["a1"], p["b2"], p["a2"]], axis=0)  # (4,hid)
    b3 = p["b3"]                                         # (1, cout)

    TR = _pick_row_tile(N, Hout, Hp, Wp, Wout, cin, hid, cout, stride)
    nblk = Hout // TR
    rows_in = (TR - 1) * stride + 3
    # With this, only the first/last row blocks ever touch the padded rows.
    assert padding <= TR * stride, "padding larger than a row tile is unsupported"
    bot_pad = min(max(0, (Hout - 1) * stride + 3 - (padding + H)), rows_in)

    kernel = _make_fused_kernel(stride=stride, padding=padding, TR=TR,
                                rows_in=rows_in, Wp=Wp, Wout=Wout,
                                nblk=nblk, bot_pad=bot_pad, use_res=use_res)

    in_specs = [
        # Full padded plane per batch image: block index only changes with n,
        # so the inner row-block loop never re-DMAs it (no wrapper gather, no
        # halo-duplicated HBM traffic).
        pl.BlockSpec((None, Hp, Wp, cin), lambda n, i: (n, 0, 0, 0)),
        pl.BlockSpec((cin, hid), lambda n, i: (0, 0)),
        pl.BlockSpec((9, hid), lambda n, i: (0, 0)),
        pl.BlockSpec((hid, cout), lambda n, i: (0, 0)),
        pl.BlockSpec((4, hid), lambda n, i: (0, 0)),
        pl.BlockSpec((1, cout), lambda n, i: (0, 0)),
    ]

    out = pl.pallas_call(
        kernel,
        out_shape=jax.ShapeDtypeStruct((N, Hout, Wout, cout), jnp.float32),
        grid=(N, nblk),
        in_specs=in_specs,
        out_specs=pl.BlockSpec((None, TR, Wout, cout), lambda n, i: (n, i, 0, 0)),
        scratch_shapes=[pltpu.VMEM((rows_in, Wp, hid), jnp.float32)],
        compiler_params=pltpu.CompilerParams(
            dimension_semantics=("parallel", "parallel")),
    )(xp, w1f, wdf, w3f, pvec, b3)

    return jnp.transpose(out, (0, 3, 1, 2))              # back to NCHW


# ----------------------------------------------------------------------------
# Parameter construction (deterministic, synthetic; eval-mode BN as scale/bias)
# ----------------------------------------------------------------------------
def _fold_bn(gamma, beta, mean, var, eps=1e-5):
    scale = gamma / jnp.sqrt(var + eps)
    bias = beta - mean * scale
    return scale[None, :], bias[None, :]


def init_params(key, inp, oup, expand_ratio=6):
    hid = inp * expand_ratio
    ks = jax.random.split(key, 16)

    def bn(k, c):
        k1, k2, k3, k4 = jax.random.split(k, 4)
        gamma = 1.0 + 0.1 * jax.random.normal(k1, (c,), jnp.float32)
        beta = 0.1 * jax.random.normal(k2, (c,), jnp.float32)
        mean = 0.1 * jax.random.normal(k3, (c,), jnp.float32)
        var = jax.random.uniform(k4, (c,), jnp.float32, 0.5, 1.5)
        return _fold_bn(gamma, beta, mean, var)

    # Conv weights stored channels-last:
    #   w1[cin, hid]  <->  torch Conv2d(inp,hid,1).weight[hid,cin,1,1]
    #   wd[3,3,hid]   <->  torch depthwise weight[hid,1,3,3]
    #   w3[hid, oup]  <->  torch Conv2d(hid,oup,1).weight[oup,hid,1,1]
    w1 = 0.2 * jax.random.normal(ks[0], (inp, hid), jnp.float32)
    wd = 0.2 * jax.random.normal(ks[1], (3, 3, hid), jnp.float32)
    w3 = 0.2 * jax.random.normal(ks[2], (hid, oup), jnp.float32)
    s1, b1 = bn(ks[3], hid)
    s2, b2 = bn(ks[4], hid)
    s3, b3 = bn(ks[5], oup)
    a1 = jnp.full((1, hid), 0.25, jnp.float32)            # PReLU default init
    a2 = jnp.full((1, hid), 0.25, jnp.float32)
    return dict(w1=w1, wd=wd, w3=w3, s1=s1, b1=b1, s2=s2, b2=b2, s3=s3, b3=b3,
                a1=a1, a2=a2)


# ----------------------------------------------------------------------------
# Pure-JAX reference mirroring the PyTorch forward (eval-mode BN, no folding)
# ----------------------------------------------------------------------------
def ref_forward(x_nchw, p, stride, padding, use_res):
    x = jnp.transpose(x_nchw, (0, 2, 3, 1)).astype(jnp.float32)
    hid = p["w1"].shape[1]

    h = jnp.einsum("nhwc,cd->nhwd", x, p["w1"])
    h = h * p["s1"][0] + p["b1"][0]
    h = jnp.where(h >= 0, h, p["a1"][0] * h)

    wd_hwio = p["wd"][:, :, None, :]                      # [3,3,1,hid]
    h = lax.conv_general_dilated(
        h, wd_hwio, (stride, stride),
        [(padding, padding), (padding, padding)],
        dimension_numbers=("NHWC", "HWIO", "NHWC"),
        feature_group_count=hid)
    h = h * p["s2"][0] + p["b2"][0]
    h = jnp.where(h >= 0, h, p["a2"][0] * h)

    h = jnp.einsum("nhwc,cd->nhwd", h, p["w3"])
    h = h * p["s3"][0] + p["b3"][0]
    if use_res:
        h = h + x
    return jnp.transpose(h, (0, 3, 1, 2))


if __name__ == "__main__":
    # Module config: InvertedResidual(inp=4, oup=4, stride=1, padding=1,
    #                                 use_res_connect=True, expand_ratio=6)
    inp, oup, stride, padding, use_res = 4, 4, 1, 1, True

    key = jax.random.PRNGKey(0)
    kx, kp = jax.random.split(key)
    x = jax.random.normal(kx, (2, inp, 16, 16), jnp.float32)   # NCHW like PyTorch
    params = init_params(kp, inp, oup)

    out = invres_forward(x, params, stride, padding, use_res)
    out = jax.block_until_ready(out)

    ref = ref_forward(x, params, stride, padding, use_res)
    assert out.shape == ref.shape == (2, oup, 16, 16)
    assert jnp.allclose(out, ref, atol=1e-4, rtol=1e-4), "mismatch vs reference"

    print("KERNEL_OK")
</pallas_src>

<mosaic_0001>
module attributes {stable_mosaic.version = 11 : i64} {
  func.func @kernel(%arg0: i32, %arg1: i32, %arg2: memref<1x18x18x4xf32, #tpu.memory_space<vmem>>, %arg3: memref<4x24xf32, #tpu.memory_space<vmem>>, %arg4: memref<9x24xf32, #tpu.memory_space<vmem>>, %arg5: memref<24x4xf32, #tpu.memory_space<vmem>>, %arg6: memref<4x24xf32, #tpu.memory_space<vmem>>, %arg7: memref<1x4xf32, #tpu.memory_space<vmem>>, %arg8: memref<1x16x16x4xf32, #tpu.memory_space<vmem>>, %arg9: memref<18x18x24xf32, #tpu.memory_space<vmem>>) attributes {dimension_semantics = [#tpu.dimension_semantics<parallel>, #tpu.dimension_semantics<parallel>], iteration_bounds = array<i64: 2, 1>, scalar_prefetch = 0 : i64, scratch_operands = 1 : i64, tpu.core_type = #tpu.core_type<tc>, window_params = [{transform_indices = @transform_0, window_bounds = array<i64: 1, 18, 18, 4>}, {pipeline_mode = #tpu.pipeline_mode<synchronous>, transform_indices = @transform_1, window_bounds = array<i64: 4, 24>}, {pipeline_mode = #tpu.pipeline_mode<synchronous>, transform_indices = @transform_2, window_bounds = array<i64: 9, 24>}, {pipeline_mode = #tpu.pipeline_mode<synchronous>, transform_indices = @transform_3, window_bounds = array<i64: 24, 4>}, {pipeline_mode = #tpu.pipeline_mode<synchronous>, transform_indices = @transform_4, window_bounds = array<i64: 4, 24>}, {pipeline_mode = #tpu.pipeline_mode<synchronous>, transform_indices = @transform_5, window_bounds = array<i64: 1, 4>}, {transform_indices = @transform_6, window_bounds = array<i64: 1, 16, 16, 4>}]} {
    %c16_i32 = arith.constant 16 : i32
    %0 = arith.muli %arg1, %c16_i32 : i32
    %c0 = arith.constant 0 : index
    %1 = arith.index_cast %0 : i32 to index
    %c0_0 = arith.constant 0 : index
    %c0_1 = arith.constant 0 : index
    %2 = vector.load %arg2[%c0, %1, %c0_0, %c0_1] : memref<1x18x18x4xf32, #tpu.memory_space<vmem>>, vector<1x18x18x4xf32>
    %3 = vector.shape_cast %2 : vector<1x18x18x4xf32> to vector<18x18x4xf32>
    %c0_2 = arith.constant 0 : index
    %c0_3 = arith.constant 0 : index
    %4 = vector.load %arg3[%c0_2, %c0_3] : memref<4x24xf32, #tpu.memory_space<vmem>>, vector<4x24xf32>
    %5 = vector.extract_strided_slice %3 {offsets = [0, 0, 0], sizes = [18, 18, 1], strides = [1, 1, 1]} : vector<18x18x4xf32> to vector<18x18x1xf32>
    %6 = vector.extract_strided_slice %4 {offsets = [0, 0], sizes = [1, 24], strides = [1, 1]} : vector<4x24xf32> to vector<1x24xf32>
    %7 = vector.shape_cast %6 : vector<1x24xf32> to vector<1x1x24xf32>
    %8 = vector.broadcast %5 : vector<18x18x1xf32> to vector<18x18x24xf32>
    %9 = vector.broadcast %7 : vector<1x1x24xf32> to vector<18x18x24xf32>
    %10 = arith.mulf %8, %9 : vector<18x18x24xf32>
    %11 = vector.extract_strided_slice %3 {offsets = [0, 0, 1], sizes = [18, 18, 1], strides = [1, 1, 1]} : vector<18x18x4xf32> to vector<18x18x1xf32>
    %12 = vector.extract_strided_slice %4 {offsets = [1, 0], sizes = [1, 24], strides = [1, 1]} : vector<4x24xf32> to vector<1x24xf32>
    %13 = vector.shape_cast %12 : vector<1x24xf32> to vector<1x1x24xf32>
    %14 = vector.broadcast %11 : vector<18x18x1xf32> to vector<18x18x24xf32>
    %15 = vector.broadcast %13 : vector<1x1x24xf32> to vector<18x18x24xf32>
    %16 = arith.mulf %14, %15 : vector<18x18x24xf32>
    %17 = arith.addf %10, %16 : vector<18x18x24xf32>
    %18 = vector.extract_strided_slice %3 {offsets = [0, 0, 2], sizes = [18, 18, 1], strides = [1, 1, 1]} : vector<18x18x4xf32> to vector<18x18x1xf32>
    %19 = vector.extract_strided_slice %4 {offsets = [2, 0], sizes = [1, 24], strides = [1, 1]} : vector<4x24xf32> to vector<1x24xf32>
    %20 = vector.shape_cast %19 : vector<1x24xf32> to vector<1x1x24xf32>
    %21 = vector.broadcast %18 : vector<18x18x1xf32> to vector<18x18x24xf32>
    %22 = vector.broadcast %20 : vector<1x1x24xf32> to vector<18x18x24xf32>
    %23 = arith.mulf %21, %22 : vector<18x18x24xf32>
    %24 = arith.addf %17, %23 : vector<18x18x24xf32>
    %25 = vector.extract_strided_slice %3 {offsets = [0, 0, 3], sizes = [18, 18, 1], strides = [1, 1, 1]} : vector<18x18x4xf32> to vector<18x18x1xf32>
    %26 = vector.extract_strided_slice %4 {offsets = [3, 0], sizes = [1, 24], strides = [1, 1]} : vector<4x24xf32> to vector<1x24xf32>
    %27 = vector.shape_cast %26 : vector<1x24xf32> to vector<1x1x24xf32>
    %28 = vector.broadcast %25 : vector<18x18x1xf32> to vector<18x18x24xf32>
    %29 = vector.broadcast %27 : vector<1x1x24xf32> to vector<18x18x24xf32>
    %30 = arith.mulf %28, %29 : vector<18x18x24xf32>
    %31 = arith.addf %24, %30 : vector<18x18x24xf32>
    %c0_4 = arith.constant 0 : index
    %c0_5 = arith.constant 0 : index
    %32 = vector.load %arg6[%c0_4, %c0_5] : memref<4x24xf32, #tpu.memory_space<vmem>>, vector<1x24xf32>
    %33 = vector.shape_cast %32 : vector<1x24xf32> to vector<1x1x24xf32>
    %34 = vector.broadcast %33 : vector<1x1x24xf32> to vector<18x18x24xf32>
    %35 = arith.addf %31, %34 : vector<18x18x24xf32>
    %cst = arith.constant 0.000000e+00 : f32
    %36 = vector.broadcast %cst : f32 to vector<18x18x24xf32>
    %37 = arith.cmpf oge, %35, %36 : vector<18x18x24xf32>
    %c1 = arith.constant 1 : index
    %c0_6 = arith.constant 0 : index
    %38 = vector.load %arg6[%c1, %c0_6] : memref<4x24xf32, #tpu.memory_space<vmem>>, vector<1x24xf32>
    %39 = vector.shape_cast %38 : vector<1x24xf32> to vector<1x1x24xf32>
    %40 = vector.broadcast %39 : vector<1x1x24xf32> to vector<18x18x24xf32>
    %41 = arith.mulf %40, %35 : vector<18x18x24xf32>
    %42 = arith.select %37, %35, %41 : vector<18x18x24xi1>, vector<18x18x24xf32>
    %c0_7 = arith.constant 0 : index
    %c0_8 = arith.constant 0 : index
    %c0_9 = arith.constant 0 : index
    %43 = vector.load %arg9[%c0_7, %c0_8, %c0_9] : memref<18x18x24xf32, #tpu.memory_space<vmem>>, vector<18x18x24xf32>
    tpu.vector_store %arg9[%c0_7, %c0_8, %c0_9], %42 {strides = array<i32>} : memref<18x18x24xf32, #tpu.memory_space<vmem>>, vector<18x18x24xf32>,
    %cst_10 = arith.constant 0.000000e+00 : f32
    %44 = vector.broadcast %cst_10 : f32 to vector<18x1x24xf32>
    %c0_11 = arith.constant 0 : index
    %c0_12 = arith.constant 0 : index
    %c0_13 = arith.constant 0 : index
    %45 = vector.load %arg9[%c0_11, %c0_12, %c0_13] : memref<18x18x24xf32, #tpu.memory_space<vmem>>, vector<18x1x24xf32>
    tpu.vector_store %arg9[%c0_11, %c0_12, %c0_13], %44 {strides = array<i32>} : memref<18x18x24xf32, #tpu.memory_space<vmem>>, vector<18x1x24xf32>,
    %c0_14 = arith.constant 0 : index
    %c17 = arith.constant 17 : index
    %c0_15 = arith.constant 0 : index
    %46 = vector.load %arg9[%c0_14, %c17, %c0_15] : memref<18x18x24xf32, #tpu.memory_space<vmem>>, vector<18x1x24xf32>
    tpu.vector_store %arg9[%c0_14, %c17, %c0_15], %44 {strides = array<i32>} : memref<18x18x24xf32, #tpu.memory_space<vmem>>, vector<18x1x24xf32>,
    %c0_i32 = arith.constant 0 : i32
    %47 = arith.cmpi eq, %arg1, %c0_i32 : i32
    %48 = arith.extui %47 : i1 to i32
    %c0_i32_16 = arith.constant 0 : i32
    %49 = arith.cmpi ne, %48, %c0_i32_16 : i32
    scf.if %49 {
      %cst_46 = arith.constant 0.000000e+00 : f32
      %138 = vector.broadcast %cst_46 : f32 to vector<1x18x24xf32>
      %c0_47 = arith.constant 0 : index
      %c0_48 = arith.constant 0 : index
      %c0_49 = arith.constant 0 : index
      %139 = vector.load %arg9[%c0_47, %c0_48, %c0_49] : memref<18x18x24xf32, #tpu.memory_space<vmem>>, vector<1x18x24xf32>
      tpu.vector_store %arg9[%c0_47, %c0_48, %c0_49], %138 {strides = array<i32>} : memref<18x18x24xf32, #tpu.memory_space<vmem>>, vector<1x18x24xf32>,
    } else {
    }
    %c0_i32_17 = arith.constant 0 : i32
    %50 = arith.cmpi eq, %arg1, %c0_i32_17 : i32
    %51 = arith.extui %50 : i1 to i32
    %c0_i32_18 = arith.constant 0 : i32
    %52 = arith.cmpi ne, %51, %c0_i32_18 : i32
    scf.if %52 {
      %cst_46 = arith.constant 0.000000e+00 : f32
      %138 = vector.broadcast %cst_46 : f32 to vector<1x18x24xf32>
      %c17_47 = arith.constant 17 : index
      %c0_48 = arith.constant 0 : index
      %c0_49 = arith.constant 0 : index
      %139 = vector.load %arg9[%c17_47, %c0_48, %c0_49] : memref<18x18x24xf32, #tpu.memory_space<vmem>>, vector<1x18x24xf32>
      tpu.vector_store %arg9[%c17_47, %c0_48, %c0_49], %138 {strides = array<i32>} : memref<18x18x24xf32, #tpu.memory_space<vmem>>, vector<1x18x24xf32>,
    } else {
    }
    %c0_19 = arith.constant 0 : index
    %c0_20 = arith.constant 0 : index
    %53 = vector.load %arg4[%c0_19, %c0_20] : memref<9x24xf32, #tpu.memory_space<vmem>>, vector<9x24xf32>
    %c0_21 = arith.constant 0 : index
    %c0_22 = arith.constant 0 : index
    %c0_23 = arith.constant 0 : index
    %54 = vector.load %arg9[%c0_21, %c0_22, %c0_23] : memref<18x18x24xf32, #tpu.memory_space<vmem>>, vector<16x18x24xf32>
    %55 = vector.extract_strided_slice %54 {offsets = [0, 0, 0], sizes = [16, 16, 24], strides = [1, 1, 1]} : vector<16x18x24xf32> to vector<16x16x24xf32>
    %56 = vector.extract_strided_slice %53 {offsets = [0, 0], sizes = [1, 24], strides = [1, 1]} : vector<9x24xf32> to vector<1x24xf32>
    %57 = vector.shape_cast %56 : vector<1x24xf32> to vector<1x1x24xf32>
    %58 = vector.broadcast %57 : vector<1x1x24xf32> to vector<16x16x24xf32>
    %59 = arith.mulf %55, %58 : vector<16x16x24xf32>
    %60 = vector.extract_strided_slice %54 {offsets = [0, 1, 0], sizes = [16, 16, 24], strides = [1, 1, 1]} : vector<16x18x24xf32> to vector<16x16x24xf32>
    %61 = vector.extract_strided_slice %53 {offsets = [1, 0], sizes = [1, 24], strides = [1, 1]} : vector<9x24xf32> to vector<1x24xf32>
    %62 = vector.shape_cast %61 : vector<1x24xf32> to vector<1x1x24xf32>
    %63 = vector.broadcast %62 : vector<1x1x24xf32> to vector<16x16x24xf32>
    %64 = arith.mulf %60, %63 : vector<16x16x24xf32>
    %65 = arith.addf %59, %64 : vector<16x16x24xf32>
    %66 = vector.extract_strided_slice %54 {offsets = [0, 2, 0], sizes = [16, 16, 24], strides = [1, 1, 1]} : vector<16x18x24xf32> to vector<16x16x24xf32>
    %67 = vector.extract_strided_slice %53 {offsets = [2, 0], sizes = [1, 24], strides = [1, 1]} : vector<9x24xf32> to vector<1x24xf32>
    %68 = vector.shape_cast %67 : vector<1x24xf32> to vector<1x1x24xf32>
    %69 = vector.broadcast %68 : vector<1x1x24xf32> to vector<16x16x24xf32>
    %70 = arith.mulf %66, %69 : vector<16x16x24xf32>
    %71 = arith.addf %65, %70 : vector<16x16x24xf32>
    %c1_24 = arith.constant 1 : index
    %c0_25 = arith.constant 0 : index
    %c0_26 = arith.constant 0 : index
    %72 = vector.load %arg9[%c1_24, %c0_25, %c0_26] : memref<18x18x24xf32, #tpu.memory_space<vmem>>, vector<16x18x24xf32>
    %73 = vector.extract_strided_slice %72 {offsets = [0, 0, 0], sizes = [16, 16, 24], strides = [1, 1, 1]} : vector<16x18x24xf32> to vector<16x16x24xf32>
    %74 = vector.extract_strided_slice %53 {offsets = [3, 0], sizes = [1, 24], strides = [1, 1]} : vector<9x24xf32> to vector<1x24xf32>
    %75 = vector.shape_cast %74 : vector<1x24xf32> to vector<1x1x24xf32>
    %76 = vector.broadcast %75 : vector<1x1x24xf32> to vector<16x16x24xf32>
    %77 = arith.mulf %73, %76 : vector<16x16x24xf32>
    %78 = arith.addf %71, %77 : vector<16x16x24xf32>
    %79 = vector.extract_strided_slice %72 {offsets = [0, 1, 0], sizes = [16, 16, 24], strides = [1, 1, 1]} : vector<16x18x24xf32> to vector<16x16x24xf32>
    %80 = vector.extract_strided_slice %53 {offsets = [4, 0], sizes = [1, 24], strides = [1, 1]} : vector<9x24xf32> to vector<1x24xf32>
    %81 = vector.shape_cast %80 : vector<1x24xf32> to vector<1x1x24xf32>
    %82 = vector.broadcast %81 : vector<1x1x24xf32> to vector<16x16x24xf32>
    %83 = arith.mulf %79, %82 : vector<16x16x24xf32>
    %84 = arith.addf %78, %83 : vector<16x16x24xf32>
    %85 = vector.extract_strided_slice %72 {offsets = [0, 2, 0], sizes = [16, 16, 24], strides = [1, 1, 1]} : vector<16x18x24xf32> to vector<16x16x24xf32>
    %86 = vector.extract_strided_slice %53 {offsets = [5, 0], sizes = [1, 24], strides = [1, 1]} : vector<9x24xf32> to vector<1x24xf32>
    %87 = vector.shape_cast %86 : vector<1x24xf32> to vector<1x1x24xf32>
    %88 = vector.broadcast %87 : vector<1x1x24xf32> to vector<16x16x24xf32>
    %89 = arith.mulf %85, %88 : vector<16x16x24xf32>
    %90 = arith.addf %84, %89 : vector<16x16x24xf32>
    %c2 = arith.constant 2 : index
    %c0_27 = arith.constant 0 : index
    %c0_28 = arith.constant 0 : index
    %91 = vector.load %arg9[%c2, %c0_27, %c0_28] : memref<18x18x24xf32, #tpu.memory_space<vmem>>, vector<16x18x24xf32>
    %92 = vector.extract_strided_slice %91 {offsets = [0, 0, 0], sizes = [16, 16, 24], strides = [1, 1, 1]} : vector<16x18x24xf32> to vector<16x16x24xf32>
    %93 = vector.extract_strided_slice %53 {offsets = [6, 0], sizes = [1, 24], strides = [1, 1]} : vector<9x24xf32> to vector<1x24xf32>
    %94 = vector.shape_cast %93 : vector<1x24xf32> to vector<1x1x24xf32>
    %95 = vector.broadcast %94 : vector<1x1x24xf32> to vector<16x16x24xf32>
    %96 = arith.mulf %92, %95 : vector<16x16x24xf32>
    %97 = arith.addf %90, %96 : vector<16x16x24xf32>
    %98 = vector.extract_strided_slice %91 {offsets = [0, 1, 0], sizes = [16, 16, 24], strides = [1, 1, 1]} : vector<16x18x24xf32> to vector<16x16x24xf32>
    %99 = vector.extract_strided_slice %53 {offsets = [7, 0], sizes = [1, 24], strides = [1, 1]} : vector<9x24xf32> to vector<1x24xf32>
    %100 = vector.shape_cast %99 : vector<1x24xf32> to vector<1x1x24xf32>
    %101 = vector.broadcast %100 : vector<1x1x24xf32> to vector<16x16x24xf32>
    %102 = arith.mulf %98, %101 : vector<16x16x24xf32>
    %103 = arith.addf %97, %102 : vector<16x16x24xf32>
    %104 = vector.extract_strided_slice %91 {offsets = [0, 2, 0], sizes = [16, 16, 24], strides = [1, 1, 1]} : vector<16x18x24xf32> to vector<16x16x24xf32>
    %105 = vector.extract_strided_slice %53 {offsets = [8, 0], sizes = [1, 24], strides = [1, 1]} : vector<9x24xf32> to vector<1x24xf32>
    %106 = vector.shape_cast %105 : vector<1x24xf32> to vector<1x1x24xf32>
    %107 = vector.broadcast %106 : vector<1x1x24xf32> to vector<16x16x24xf32>
    %108 = arith.mulf %104, %107 : vector<16x16x24xf32>
    %109 = arith.addf %103, %108 : vector<16x16x24xf32>
    %c2_29 = arith.constant 2 : index
    %c0_30 = arith.constant 0 : index
    %110 = vector.load %arg6[%c2_29, %c0_30] : memref<4x24xf32, #tpu.memory_space<vmem>>, vector<1x24xf32>
    %111 = vector.shape_cast %110 : vector<1x24xf32> to vector<1x1x24xf32>
    %112 = vector.broadcast %111 : vector<1x1x24xf32> to vector<16x16x24xf32>
    %113 = arith.addf %109, %112 : vector<16x16x24xf32>
    %cst_31 = arith.constant 0.000000e+00 : f32
    %114 = vector.broadcast %cst_31 : f32 to vector<16x16x24xf32>
    %115 = arith.cmpf oge, %113, %114 : vector<16x16x24xf32>
    %c3 = arith.constant 3 : index
    %c0_32 = arith.constant 0 : index
    %116 = vector.load %arg6[%c3, %c0_32] : memref<4x24xf32, #tpu.memory_space<vmem>>, vector<1x24xf32>
    %117 = vector.shape_cast %116 : vector<1x24xf32> to vector<1x1x24xf32>
    %118 = vector.broadcast %117 : vector<1x1x24xf32> to vector<16x16x24xf32>
    %119 = arith.mulf %118, %113 : vector<16x16x24xf32>
    %120 = arith.select %115, %113, %119 : vector<16x16x24xi1>, vector<16x16x24xf32>
    %c0_33 = arith.constant 0 : index
    %c0_34 = arith.constant 0 : index
    %121 = vector.load %arg5[%c0_33, %c0_34] : memref<24x4xf32, #tpu.memory_space<vmem>>, vector<24x4xf32>
    %122 = vector.shape_cast %120 : vector<16x16x24xf32> to vector<256x24xf32>
    %cst_35 = arith.constant dense<0.000000e+00> : vector<256x4xf32>
    %123 = tpu.matmul %122, %121, %cst_35 {dimension_numbers = #tpu.dot_dimension_numbers<[1], [0], [0], [1], [0, 0, 1, 1], [], []>} : vector<256x24xf32>, vector<24x4xf32>, vector<256x4xf32> -> vector<256x4xf32>
    %124 = vector.shape_cast %123 : vector<256x4xf32> to vector<16x16x4xf32>
    %c0_36 = arith.constant 0 : index
    %c0_37 = arith.constant 0 : index
    %125 = vector.load %arg7[%c0_36, %c0_37] : memref<1x4xf32, #tpu.memory_space<vmem>>, vector<1x4xf32>
    %126 = vector.shape_cast %125 : vector<1x4xf32> to vector<1x1x4xf32>
    %127 = vector.broadcast %126 : vector<1x1x4xf32> to vector<16x16x4xf32>
    %128 = arith.addf %124, %127 : vector<16x16x4xf32>
    %c16_i32_38 = arith.constant 16 : i32
    %129 = arith.muli %arg1, %c16_i32_38 : i32
    %c1_i32 = arith.constant 1 : i32
    %130 = arith.addi %c1_i32, %129 : i32
    %c0_39 = arith.constant 0 : index
    %131 = arith.index_cast %130 : i32 to index
    %c1_40 = arith.constant 1 : index
    %c0_41 = arith.constant 0 : index
    %132 = vector.load %arg2[%c0_39, %131, %c1_40, %c0_41] : memref<1x18x18x4xf32, #tpu.memory_space<vmem>>, vector<1x16x16x4xf32>
    %133 = vector.shape_cast %132 : vector<1x16x16x4xf32> to vector<16x16x4xf32>
    %134 = arith.addf %128, %133 : vector<16x16x4xf32>
    %c0_42 = arith.constant 0 : index
    %c0_43 = arith.constant 0 : index
    %c0_44 = arith.constant 0 : index
    %c0_45 = arith.constant 0 : index
    %135 = vector.load %arg8[%c0_42, %c0_43, %c0_44, %c0_45] : memref<1x16x16x4xf32, #tpu.memory_space<vmem>>, vector<1x16x16x4xf32>
    %136 = vector.shape_cast %135 : vector<1x16x16x4xf32> to vector<16x16x4xf32>
    %137 = vector.shape_cast %134 : vector<16x16x4xf32> to vector<1x16x16x4xf32>
    tpu.vector_store %arg8[%c0_42, %c0_43, %c0_44, %c0_45], %137 {strides = array<i32>} : memref<1x16x16x4xf32, #tpu.memory_space<vmem>>, vector<1x16x16x4xf32>,
    return
  }
  func.func @transform_0(%arg0: i32, %arg1: i32) -> (i32, i32, i32, i32) {
    %c0_i32 = arith.constant 0 : i32
    %c0_i32_0 = arith.constant 0 : i32
    %c0_i32_1 = arith.constant 0 : i32
    %c0_i32_2 = arith.constant 0 : i32
    return %arg0, %c0_i32, %c0_i32_0, %c0_i32_1 : i32, i32, i32, i32
  }
  func.func @transform_1(%arg0: i32, %arg1: i32) -> (i32, i32) {
    %c0_i32 = arith.constant 0 : i32
    %c0_i32_0 = arith.constant 0 : i32
    %c0_i32_1 = arith.constant 0 : i32
    return %c0_i32, %c0_i32_0 : i32, i32
  }
  func.func @transform_2(%arg0: i32, %arg1: i32) -> (i32, i32) {
    %c0_i32 = arith.constant 0 : i32
    %c0_i32_0 = arith.constant 0 : i32
    %c0_i32_1 = arith.constant 0 : i32
    return %c0_i32, %c0_i32_0 : i32, i32
  }
  func.func @transform_3(%arg0: i32, %arg1: i32) -> (i32, i32) {
    %c0_i32 = arith.constant 0 : i32
    %c0_i32_0 = arith.constant 0 : i32
    %c0_i32_1 = arith.constant 0 : i32
    return %c0_i32, %c0_i32_0 : i32, i32
  }
  func.func @transform_4(%arg0: i32, %arg1: i32) -> (i32, i32) {
    %c0_i32 = arith.constant 0 : i32
    %c0_i32_0 = arith.constant 0 : i32
    %c0_i32_1 = arith.constant 0 : i32
    return %c0_i32, %c0_i32_0 : i32, i32
  }
  func.func @transform_5(%arg0: i32, %arg1: i32) -> (i32, i32) {
    %c0_i32 = arith.constant 0 : i32
    %c0_i32_0 = arith.constant 0 : i32
    %c0_i32_1 = arith.constant 0 : i32
    return %c0_i32, %c0_i32_0 : i32, i32
  }
  func.func @transform_6(%arg0: i32, %arg1: i32) -> (i32, i32, i32, i32) {
    %c0_i32 = arith.constant 0 : i32
    %c0_i32_0 = arith.constant 0 : i32
    %c0_i32_1 = arith.constant 0 : i32
    return %arg0, %arg1, %c0_i32, %c0_i32_0 : i32, i32, i32, i32
  }
}

</mosaic_0001>

<llo_original>
// kernel: invres_forward.1
$region0: #{invres_forward.1}
  #allocation0 [shape = 'u32[]', space=smem, size = 0x4, offset = 0x4, fixed_abs, tag = 'smem constant byte address 0x4 - core index']
  #allocation1 [shape = 'u32[72,128]{1,0:T(1,128)}', space=vmem, size = 0x9000, scoped, tag = 'internal scratch']
  #allocation2 [shape = 'f32[18,18,24]{2,1,0:T(8,128)}', space=vmem, size = 0x36000, scoped, tag = 'scratch operand']
  %s0 = inlined_call_operand.vmem [shape: f32[2,18,18,4], index: 0, kind: input, shape index: {}]
  %s1 = inlined_call_operand.vmem [shape: f32[4,24], index: 1, kind: input, shape index: {}]
  %s2 = inlined_call_operand.vmem [shape: f32[9,24], index: 2, kind: input, shape index: {}]
  %s3 = inlined_call_operand.vmem [shape: f32[24,4], index: 3, kind: input, shape index: {}]
  %s4 = inlined_call_operand.vmem [shape: f32[4,24], index: 4, kind: input, shape index: {}]
  %s5 = inlined_call_operand.vmem [shape: f32[1,4], index: 5, kind: input, shape index: {}]
  %s6 = inlined_call_operand.vmem [shape: f32[2,16,16,4], index: 6, kind: output, shape index: {}]
  %s7 = sld [smem:[#allocation0]]
  $region61: #{invres_forward.1} parent=0
    _
  %s9 = ssub.s32 1, %s7
  %s10 = scalar_select 0, %s9, %s7
  loop: start=0, step=1, limit=4
  $region2: #{invres_forward.1} parent=0 // loop_pre_header
    _
  $region3: #{invres_forward.1} parent=0 // loop_header
    %s12 = sphi 0, %s16
    %p13 = scmp.ge.s32.totalorder %s12, 4
    %s19 = sphi 0, %s31
    %s20 = sphi 0, %s27
    %s21 = sphi 0, %s19
    %s22 = sphi 0, %s20
    %s23 = sphi 0, %s21
    %s24 = sphi 0, %s22
    %s34 = sphi 0, %s36
    %s37 = sphi 0, %s34
    %s38 = sphi 0, %s37
    %s54 = sphi 0, %s38
    %s58 = sphi 0, %s58
    %s60 = sphi 0, %s58
    %s61 = sphi 0, %s60
    %s75 = sphi 0, %s61
    %s79 = sphi 0, %s79
    %s81 = sphi 0, %s79
    %s82 = sphi 0, %s81
    %s96 = sphi 0, %s82
    %s100 = sphi 0, %s100
    %s102 = sphi 0, %s100
    %s103 = sphi 0, %s102
    %s117 = sphi 0, %s103
    %s121 = sphi 0, %s121
    %s123 = sphi 0, %s121
    %s124 = sphi 0, %s123
    %s138 = sphi 0, %s124
    %s142 = sphi 0, %s142
    %s144 = sphi 0, %s142
    %s145 = sphi 0, %s144
    %s159 = sphi 0, %s145
    %s167 = sphi 0, %s169
    %s170 = sphi 0, %s167
    %s171 = sphi 0, %s170
    %s187 = sphi 0, %s171
  $region4: #{invres_forward.1} parent=0 // loop_header_branch
    %15 = sbr.rel (%p13) target = $region8
  $region5: #{invres_forward.1} parent=0 // loop_body
    %s17 = ssub.s32 %s12, 1
    %s18 = ssub.s32 %s12, 2
    %s25 = sadd.s32 1, %s20
    %p26 = scmp.ge.s32.totalorder %s25, 1
    %s27 = scalar_select %p26, 0, %s25
    %s28 = sadd.s32 1, %s19
    %s29 = scalar_select %p26, %s28, %s19
    %p30 = scmp.ge.s32.totalorder %s29, 2
    %s31 = scalar_select %p30, 0, %s29
    %s32 = ssub.s32 %s19, %s31
    %p33 = scmp.eq.s32.totalorder %s32, 0
    %s35 = sadd.s32 %s34, 1
    %s36 = scalar_select %p33, %s34, %s35
    %p39 = pneg %p33
    %p40 = scmp.eq.s32.totalorder %s12, 1
    %p41 = por %p39, %p40
    %p42 = scmp.ne.s32.totalorder %s34, %s37
    %p43 = scmp.eq.s32.totalorder %s12, 0
    %p44 = por %p42, %p43
    %p45 = scmp.ne.s32.totalorder %s34, %s37
    %p46 = scmp.eq.s32.totalorder %s17, 1
    %p47 = por %p45, %p46
    %p48 = scmp.ne.s32.totalorder %s37, %s38
    %p49 = scmp.eq.s32.totalorder %s17, 0
    %p50 = por %p48, %p49
    %p51 = scmp.ne.s32.totalorder %s37, %s38
    %p52 = scmp.eq.s32.totalorder %s18, 1
    %p53 = por %p51, %p52
    %p55 = scmp.ne.s32.totalorder %s38, %s54
    %p56 = scmp.eq.s32.totalorder %s18, 0
    %p57 = por %p55, %p56
    %s59 = sadd.s32 %s58, 1
    %p62 = scmp.eq.s32.totalorder %s12, 1
    %p63 = scmp.ne.s32.totalorder %s58, %s60
    %p64 = scmp.eq.s32.totalorder %s12, 0
    %p65 = por %p63, %p64
    %p66 = scmp.ne.s32.totalorder %s58, %s60
    %p67 = scmp.eq.s32.totalorder %s17, 1
    %p68 = por %p66, %p67
    %p69 = scmp.ne.s32.totalorder %s60, %s61
    %p70 = scmp.eq.s32.totalorder %s17, 0
    %p71 = por %p69, %p70
    %p72 = scmp.ne.s32.totalorder %s60, %s61
    %p73 = scmp.eq.s32.totalorder %s18, 1
    %p74 = por %p72, %p73
    %p76 = scmp.ne.s32.totalorder %s61, %s75
    %p77 = scmp.eq.s32.totalorder %s18, 0
    %p78 = por %p76, %p77
    %s80 = sadd.s32 %s79, 1
    %p83 = scmp.eq.s32.totalorder %s12, 1
    %p84 = scmp.ne.s32.totalorder %s79, %s81
    %p85 = scmp.eq.s32.totalorder %s12, 0
    %p86 = por %p84, %p85
    %p87 = scmp.ne.s32.totalorder %s79, %s81
    %p88 = scmp.eq.s32.totalorder %s17, 1
    %p89 = por %p87, %p88
    %p90 = scmp.ne.s32.totalorder %s81, %s82
    %p91 = scmp.eq.s32.totalorder %s17, 0
    %p92 = por %p90, %p91
    %p93 = scmp.ne.s32.totalorder %s81, %s82
    %p94 = scmp.eq.s32.totalorder %s18, 1
    %p95 = por %p93, %p94
    %p97 = scmp.ne.s32.totalorder %s82, %s96
    %p98 = scmp.eq.s32.totalorder %s18, 0
    %p99 = por %p97, %p98
    %s101 = sadd.s32 %s100, 1
    %p104 = scmp.eq.s32.totalorder %s12, 1
    %p105 = scmp.ne.s32.totalorder %s100, %s102
    %p106 = scmp.eq.s32.totalorder %s12, 0
    %p107 = por %p105, %p106
    %p108 = scmp.ne.s32.totalorder %s100, %s102
    %p109 = scmp.eq.s32.totalorder %s17, 1
    %p110 = por %p108, %p109
    %p111 = scmp.ne.s32.totalorder %s102, %s103
    %p112 = scmp.eq.s32.totalorder %s17, 0
    %p113 = por %p111, %p112
    %p114 = scmp.ne.s32.totalorder %s102, %s103
    %p115 = scmp.eq.s32.totalorder %s18, 1
    %p116 = por %p114, %p115
    %p118 = scmp.ne.s32.totalorder %s103, %s117
    %p119 = scmp.eq.s32.totalorder %s18, 0
    %p120 = por %p118, %p119
    %s122 = sadd.s32 %s121, 1
    %p125 = scmp.eq.s32.totalorder %s12, 1
    %p126 = scmp.ne.s32.totalorder %s121, %s123
    %p127 = scmp.eq.s32.totalorder %s12, 0
    %p128 = por %p126, %p127
    %p129 = scmp.ne.s32.totalorder %s121, %s123
    %p130 = scmp.eq.s32.totalorder %s17, 1
    %p131 = por %p129, %p130
    %p132 = scmp.ne.s32.totalorder %s123, %s124
    %p133 = scmp.eq.s32.totalorder %s17, 0
    %p134 = por %p132, %p133
    %p135 = scmp.ne.s32.totalorder %s123, %s124
    %p136 = scmp.eq.s32.totalorder %s18, 1
    %p137 = por %p135, %p136
    %p139 = scmp.ne.s32.totalorder %s124, %s138
    %p140 = scmp.eq.s32.totalorder %s18, 0
    %p141 = por %p139, %p140
    %s143 = sadd.s32 %s142, 1
    %p146 = scmp.eq.s32.totalorder %s12, 1
    %p147 = scmp.ne.s32.totalorder %s142, %s144
    %p148 = scmp.eq.s32.totalorder %s12, 0
    %p149 = por %p147, %p148
    %p150 = scmp.ne.s32.totalorder %s142, %s144
    %p151 = scmp.eq.s32.totalorder %s17, 1
    %p152 = por %p150, %p151
    %p153 = scmp.ne.s32.totalorder %s144, %s145
    %p154 = scmp.eq.s32.totalorder %s17, 0
    %p155 = por %p153, %p154
    %p156 = scmp.ne.s32.totalorder %s144, %s145
    %p157 = scmp.eq.s32.totalorder %s18, 1
    %p158 = por %p156, %p157
    %p160 = scmp.ne.s32.totalorder %s145, %s159
    %p161 = scmp.eq.s32.totalorder %s18, 0
    %p162 = por %p160, %p161
    %s163 = ssub.s32 %s19, %s31
    %s164 = ssub.s32 %s20, %s27
    %s165 = sor.u32 %s163, %s164
    %p166 = scmp.eq.s32.totalorder %s165, 0
    %s168 = sadd.s32 %s167, 1
    %s169 = scalar_select %p166, %s167, %s168
    %p172 = pneg %p166
    %p173 = scmp.eq.s32.totalorder %s12, 1
    %p174 = por %p172, %p173
    %p175 = scmp.ne.s32.totalorder %s167, %s170
    %p176 = scmp.eq.s32.totalorder %s12, 0
    %p177 = por %p175, %p176
    %p178 = scmp.ne.s32.totalorder %s167, %s170
    %p179 = scmp.eq.s32.totalorder %s17, 1
    %p180 = por %p178, %p179
    %p181 = scmp.ne.s32.totalorder %s170, %s171
    %p182 = scmp.eq.s32.totalorder %s17, 0
    %p183 = por %p181, %p182
    %p184 = scmp.ne.s32.totalorder %s170, %s171
    %p185 = scmp.eq.s32.totalorder %s18, 1
    %p186 = por %p184, %p185
    %p188 = scmp.ne.s32.totalorder %s171, %s187
    %p189 = scmp.eq.s32.totalorder %s18, 0
    %p190 = por %p188, %p189
    %p191 = scmp.le.s32.totalorder 1, %s12
    %p192 = scmp.lt.s32.totalorder %s12, 3
    %p193 = pnand %p191, %p192
    %p194 = pneg %p193
    // Predicated region
    $region9: #{invres_forward.1} parent=5 // pred_check
      _
    $region10: #{invres_forward.1} parent=5 // pred_check_branch
      %196 = sbr.rel (%p193) target = $region12
    $region11: #{invres_forward.1} parent=5 // pred_region
      %s197 = ssub.s32 %s12, 1
      // Predicated region
      $region13: #{invres_forward.1} parent=11 // pred_check
        %p198 = pneg %p71
      $region14: #{invres_forward.1} parent=11 // pred_check_branch
        %200 = sbr.rel (%p198) target = $region16
      $region15: #{invres_forward.1} parent=11 // pred_region
        _
      $region16: #{invres_forward.1} parent=11 // pred_fallthru
        _
      // Predicated region
      $region17: #{invres_forward.1} parent=11 // pred_check
        %p201 = pneg %p92
      $region18: #{invres_forward.1} parent=11 // pred_check_branch
        %203 = sbr.rel (%p201) target = $region20
      $region19: #{invres_forward.1} parent=11 // pred_region
        _
      $region20: #{invres_forward.1} parent=11 // pred_fallthru
        _
      // Predicated region
      $region21: #{invres_forward.1} parent=11 // pred_check
        %p204 = pneg %p113
      $region22: #{invres_forward.1} parent=11 // pred_check_branch
        %206 = sbr.rel (%p204) target = $region24
      $region23: #{invres_forward.1} parent=11 // pred_region
        _
      $region24: #{invres_forward.1} parent=11 // pred_fallthru
        _
      // Predicated region
      $region25: #{invres_forward.1} parent=11 // pred_check
        %p207 = pneg %p134
      $region26: #{invres_forward.1} parent=11 // pred_check_branch
        %209 = sbr.rel (%p207) target = $region28
      $region27: #{invres_forward.1} parent=11 // pred_region
        _
      $region28: #{invres_forward.1} parent=11 // pred_fallthru
        _
      // Predicated region
      $region29: #{invres_forward.1} parent=11 // pred_check
        %p210 = pneg %p155
      $region30: #{invres_forward.1} parent=11 // pred_check_branch
        %212 = sbr.rel (%p210) target = $region32
      $region31: #{invres_forward.1} parent=11 // pred_region
        _
      $region32: #{invres_forward.1} parent=11 // pred_fallthru
        _
    $region12: #{invres_forward.1} parent=5 // pred_fallthru
      _
    %p213 = scmp.lt.s32.totalorder %s12, 2
    // Predicated region
    $region33: #{invres_forward.1} parent=5 // pred_check
      %p214 = pneg %p213
    $region34: #{invres_forward.1} parent=5 // pred_check_branch
      %216 = sbr.rel (%p214) target = $region36
    $region35: #{invres_forward.1} parent=5 // pred_region
      // Predicated region
      $region37: #{invres_forward.1} parent=35 // pred_check
        %p217 = pneg %p44
      $region38: #{invres_forward.1} parent=35 // pred_check_branch
        %219 = sbr.rel (%p217) target = $region40
      $region39: #{invres_forward.1} parent=35 // pred_region
        %p220 = scmp.lt.s32.totalorder %s19, 1
        %s221 = scalar_select %p220, %s19, 1
        %s222 = smul.addr %s221, 54
        %s223 = smul.addr %s222, 8
        %s224 = scalar_lea.vmem %s0, %s223
      $region40: #{invres_forward.1} parent=35 // pred_fallthru
        _
    $region36: #{invres_forward.1} parent=5 // pred_fallthru
      _
    %p225 = scmp.le.s32.totalorder 1, %s12
    %p226 = scmp.lt.s32.totalorder %s12, 3
    %p227 = pnand %p225, %p226
    %p228 = pneg %p227
    // Predicated region
    $region41: #{invres_forward.1} parent=5 // pred_check
      _
    $region42: #{invres_forward.1} parent=5 // pred_check_branch
      %230 = sbr.rel (%p227) target = $region44
    $region43: #{invres_forward.1} parent=5 // pred_region
      %s231 = ssub.s32 %s12, 1
      %p232 = scmp.lt.s32.totalorder %s21, 1
      %s233 = scalar_select %p232, %s21, 1
      %s234 = smul.addr %s233, 54
      %s235 = smul.addr %s234, 8
      %s236 = scalar_lea.vmem %s0, %s235
      %p237 = pneg %p50
      %p238 = pneg %p47
      %p239 = pneg %p71
      %p240 = pneg %p68
      %p241 = pneg %p92
      %p242 = pneg %p89
      %p243 = pneg %p113
      %p244 = pneg %p110
      %p245 = pneg %p134
      %p246 = pneg %p131
      %p247 = pneg %p155
      %p248 = pneg %p152
      %p249 = pneg %p183
      %p250 = pneg %p180
      %s251 = smul.u32 16, %s22
      %p252 = scmp.lt.s32.totalorder %s21, 1
      %s253 = scalar_select %p252, %s21, 1
      %p254 = scmp.lt.s32.totalorder %s251, 15
      %s255 = scalar_select %p254, %s251, 15
      %s256 = smul.addr %s255, 2
      %s257 = smul.addr %s253, 32
      %s258 = sadd.s32 %s256, %s257
      %s259 = smul.addr %s258, 8
      %s260 = scalar_lea.vmem %s6, %s259
      %p261 = scmp.lt.s32.totalorder %s21, 1
      %s262 = scalar_select %p261, %s21, 1
      %s263 = smul.addr %s262, 54
      %s264 = smul.addr %s263, 8
      %s265 = scalar_lea.vmem %s0, %s264
      %s266 = smul.u32 16, %s22
      %p267 = scmp.lt.s32.totalorder %s21, 1
      %s268 = scalar_select %p267, %s21, 1
      %p269 = scmp.lt.s32.totalorder %s266, 15
      %s270 = scalar_select %p269, %s266, 15
      %s271 = smul.addr %s270, 2
      %s272 = smul.addr %s268, 32
      %s273 = sadd.s32 %s271, %s272
      %s274 = smul.addr %s273, 8
      %s275 = scalar_lea.vmem %s6, %s274
      %s276 = smul.u32 16, %s22
      %s277 = smul.u32 %s22, 16
      %s278 = smul.u32 %s277, 24
      %s279 = scalar_lea.vmem %s265, %s278
      %v280 = vld [vmem:[%s279] sm:$0xff]
      %v281 = vld [vmem:[%s279 + $0x8] sm:$0xff]
      %v282 = vld [vmem:[%s279 + $0x10] sm:$0x3]
      %v283 = vld [vmem:[%s279 + $0x18] sm:$0xff]
      %v284 = vld [vmem:[%s279 + $0x20] sm:$0xff]
      %v285 = vld [vmem:[%s279 + $0x28] sm:$0x3]
      %v286 = vld [vmem:[%s279 + $0x30] sm:$0xff]
      %v287 = vld [vmem:[%s279 + $0x38] sm:$0xff]
      %v288 = vld [vmem:[%s279 + $0x40] sm:$0x3]
      %v289 = vld [vmem:[%s279 + $0x48] sm:$0xff]
      %v290 = vld [vmem:[%s279 + $0x50] sm:$0xff]
      %v291 = vld [vmem:[%s279 + $0x58] sm:$0x3]
      %v292 = vld [vmem:[%s279 + $0x60] sm:$0xff]
      %v293 = vld [vmem:[%s279 + $0x68] sm:$0xff]
      %v294 = vld [vmem:[%s279 + $0x70] sm:$0x3]
      %v295 = vld [vmem:[%s279 + $0x78] sm:$0xff]
      %v296 = vld [vmem:[%s279 + $0x80] sm:$0xff]
      %v297 = vld [vmem:[%s279 + $0x88] sm:$0x3]
      %v298 = vld [vmem:[%s279 + $0x90] sm:$0xff]
      %v299 = vld [vmem:[%s279 + $0x98] sm:$0xff]
      %v300 = vld [vmem:[%s279 + $0xa0] sm:$0x3]
      %v301 = vld [vmem:[%s279 + $0xa8] sm:$0xff]
      %v302 = vld [vmem:[%s279 + $0xb0] sm:$0xff]
      %v303 = vld [vmem:[%s279 + $0xb8] sm:$0x3]
      %v304 = vld [vmem:[%s279 + $0xc0] sm:$0xff]
      %v305 = vld [vmem:[%s279 + $0xc8] sm:$0xff]
      %v306 = vld [vmem:[%s279 + $0xd0] sm:$0x3]
      %v307 = vld [vmem:[%s279 + $0xd8] sm:$0xff]
      %v308 = vld [vmem:[%s279 + $0xe0] sm:$0xff]
      %v309 = vld [vmem:[%s279 + $0xe8] sm:$0x3]
      %v310 = vld [vmem:[%s279 + $0xf0] sm:$0xff]
      %v311 = vld [vmem:[%s279 + $0xf8] sm:$0xff]
      %v312 = vld [vmem:[%s279 + $0x100] sm:$0x3]
      %v313 = vld [vmem:[%s279 + $0x108] sm:$0xff]
      %v314 = vld [vmem:[%s279 + $0x110] sm:$0xff]
      %v315 = vld [vmem:[%s279 + $0x118] sm:$0x3]
      %v316 = vld [vmem:[%s279 + $0x120] sm:$0xff]
      %v317 = vld [vmem:[%s279 + $0x128] sm:$0xff]
      %v318 = vld [vmem:[%s279 + $0x130] sm:$0x3]
      %v319 = vld [vmem:[%s279 + $0x138] sm:$0xff]
      %v320 = vld [vmem:[%s279 + $0x140] sm:$0xff]
      %v321 = vld [vmem:[%s279 + $0x148] sm:$0x3]
      %v322 = vld [vmem:[%s279 + $0x150] sm:$0xff]
      %v323 = vld [vmem:[%s279 + $0x158] sm:$0xff]
      %v324 = vld [vmem:[%s279 + $0x160] sm:$0x3]
      %v325 = vld [vmem:[%s279 + $0x168] sm:$0xff]
      %v326 = vld [vmem:[%s279 + $0x170] sm:$0xff]
      %v327 = vld [vmem:[%s279 + $0x178] sm:$0x3]
      %v328 = vld [vmem:[%s279 + $0x180] sm:$0xff]
      %v329 = vld [vmem:[%s279 + $0x188] sm:$0xff]
      %v330 = vld [vmem:[%s279 + $0x190] sm:$0x3]
      %v331 = vld [vmem:[%s279 + $0x198] sm:$0xff]
      %v332 = vld [vmem:[%s279 + $0x1a0] sm:$0xff]
      %v333 = vld [vmem:[%s279 + $0x1a8] sm:$0x3]
      %v334 = vld [vmem:[%s1] sm:$0xf]
      %336 = vset.pattern.permute.xlu0 0
      %337 = vperm.xlu0 %336, %v280
      %v338 = vpop.permute.xlu0 %337
      %341 = vset.pattern.permute.xlu0 0
      %342 = vperm.xlu0 %341, %v281
      %v343 = vpop.permute.xlu0 %342
      %346 = vset.pattern.permute.xlu0 0
      %347 = vperm.xlu0 %346, %v282
      %v348 = vpop.permute.xlu0 %347
      %351 = vset.pattern.permute.xlu0 0
      %352 = vperm.xlu0 %351, %v283
      %v353 = vpop.permute.xlu0 %352
      %356 = vset.pattern.permute.xlu0 0
      %357 = vperm.xlu0 %356, %v284
      %v358 = vpop.permute.xlu0 %357
      %361 = vset.pattern.permute.xlu0 0
      %362 = vperm.xlu0 %361, %v285
      %v363 = vpop.permute.xlu0 %362
      %366 = vset.pattern.permute.xlu0 0
      %367 = vperm.xlu0 %366, %v286
      %v368 = vpop.permute.xlu0 %367
      %371 = vset.pattern.permute.xlu0 0
      %372 = vperm.xlu0 %371, %v287
      %v373 = vpop.permute.xlu0 %372
      %376 = vset.pattern.permute.xlu0 0
      %377 = vperm.xlu0 %376, %v288
      %v378 = vpop.permute.xlu0 %377
      %381 = vset.pattern.permute.xlu0 0
      %382 = vperm.xlu0 %381, %v289
      %v383 = vpop.permute.xlu0 %382
      %386 = vset.pattern.permute.xlu0 0
      %387 = vperm.xlu0 %386, %v290
      %v388 = vpop.permute.xlu0 %387
      %391 = vset.pattern.permute.xlu0 0
      %392 = vperm.xlu0 %391, %v291
      %v393 = vpop.permute.xlu0 %392
      %396 = vset.pattern.permute.xlu0 0
      %397 = vperm.xlu0 %396, %v292
      %v398 = vpop.permute.xlu0 %397
      %401 = vset.pattern.permute.xlu0 0
      %402 = vperm.xlu0 %401, %v293
      %v403 = vpop.permute.xlu0 %402
      %406 = vset.pattern.permute.xlu0 0
      %407 = vperm.xlu0 %406, %v294
      %v408 = vpop.permute.xlu0 %407
      %411 = vset.pattern.permute.xlu0 0
      %412 = vperm.xlu0 %411, %v295
      %v413 = vpop.permute.xlu0 %412
      %416 = vset.pattern.permute.xlu0 0
      %417 = vperm.xlu0 %416, %v296
      %v418 = vpop.permute.xlu0 %417
      %421 = vset.pattern.permute.xlu0 0
      %422 = vperm.xlu0 %421, %v297
      %v423 = vpop.permute.xlu0 %422
      %426 = vset.pattern.permute.xlu0 0
      %427 = vperm.xlu0 %426, %v298
      %v428 = vpop.permute.xlu0 %427
      %431 = vset.pattern.permute.xlu0 0
      %432 = vperm.xlu0 %431, %v299
      %v433 = vpop.permute.xlu0 %432
      %436 = vset.pattern.permute.xlu0 0
      %437 = vperm.xlu0 %436, %v300
      %v438 = vpop.permute.xlu0 %437
      %441 = vset.pattern.permute.xlu0 0
      %442 = vperm.xlu0 %441, %v301
      %v443 = vpop.permute.xlu0 %442
      %446 = vset.pattern.permute.xlu0 0
      %447 = vperm.xlu0 %446, %v302
      %v448 = vpop.permute.xlu0 %447
      %451 = vset.pattern.permute.xlu0 0
      %452 = vperm.xlu0 %451, %v303
      %v453 = vpop.permute.xlu0 %452
      %456 = vset.pattern.permute.xlu0 0
      %457 = vperm.xlu0 %456, %v304
      %v458 = vpop.permute.xlu0 %457
      %461 = vset.pattern.permute.xlu0 0
      %462 = vperm.xlu0 %461, %v305
      %v463 = vpop.permute.xlu0 %462
      %466 = vset.pattern.permute.xlu0 0
      %467 = vperm.xlu0 %466, %v306
      %v468 = vpop.permute.xlu0 %467
      %471 = vset.pattern.permute.xlu0 0
      %472 = vperm.xlu0 %471, %v307
      %v473 = vpop.permute.xlu0 %472
      %476 = vset.pattern.permute.xlu0 0
      %477 = vperm.xlu0 %476, %v308
      %v478 = vpop.permute.xlu0 %477
      %481 = vset.pattern.permute.xlu0 0
      %482 = vperm.xlu0 %481, %v309
      %v483 = vpop.permute.xlu0 %482
      %486 = vset.pattern.permute.xlu0 0
      %487 = vperm.xlu0 %486, %v310
      %v488 = vpop.permute.xlu0 %487
      %491 = vset.pattern.permute.xlu0 0
      %492 = vperm.xlu0 %491, %v311
      %v493 = vpop.permute.xlu0 %492
      %496 = vset.pattern.permute.xlu0 0
      %497 = vperm.xlu0 %496, %v312
      %v498 = vpop.permute.xlu0 %497
      %501 = vset.pattern.permute.xlu0 0
      %502 = vperm.xlu0 %501, %v313
      %v503 = vpop.permute.xlu0 %502
      %506 = vset.pattern.permute.xlu0 0
      %507 = vperm.xlu0 %506, %v314
      %v508 = vpop.permute.xlu0 %507
      %511 = vset.pattern.permute.xlu0 0
      %512 = vperm.xlu0 %511, %v315
      %v513 = vpop.permute.xlu0 %512
      %516 = vset.pattern.permute.xlu0 0
      %517 = vperm.xlu0 %516, %v316
      %v518 = vpop.permute.xlu0 %517
      %521 = vset.pattern.permute.xlu0 0
      %522 = vperm.xlu0 %521, %v317
      %v523 = vpop.permute.xlu0 %522
      %526 = vset.pattern.permute.xlu0 0
      %527 = vperm.xlu0 %526, %v318
      %v528 = vpop.permute.xlu0 %527
      %531 = vset.pattern.permute.xlu0 0
      %532 = vperm.xlu0 %531, %v319
      %v533 = vpop.permute.xlu0 %532
      %536 = vset.pattern.permute.xlu0 0
      %537 = vperm.xlu0 %536, %v320
      %v538 = vpop.permute.xlu0 %537
      %541 = vset.pattern.permute.xlu0 0
      %542 = vperm.xlu0 %541, %v321
      %v543 = vpop.permute.xlu0 %542
      %546 = vset.pattern.permute.xlu0 0
      %547 = vperm.xlu0 %546, %v322
      %v548 = vpop.permute.xlu0 %547
      %551 = vset.pattern.permute.xlu0 0
      %552 = vperm.xlu0 %551, %v323
      %v553 = vpop.permute.xlu0 %552
      %556 = vset.pattern.permute.xlu0 0
      %557 = vperm.xlu0 %556, %v324
      %v558 = vpop.permute.xlu0 %557
      %561 = vset.pattern.permute.xlu0 0
      %562 = vperm.xlu0 %561, %v325
      %v563 = vpop.permute.xlu0 %562
      %566 = vset.pattern.permute.xlu0 0
      %567 = vperm.xlu0 %566, %v326
      %v568 = vpop.permute.xlu0 %567
      %571 = vset.pattern.permute.xlu0 0
      %572 = vperm.xlu0 %571, %v327
      %v573 = vpop.permute.xlu0 %572
      %576 = vset.pattern.permute.xlu0 0
      %577 = vperm.xlu0 %576, %v328
      %v578 = vpop.permute.xlu0 %577
      %581 = vset.pattern.permute.xlu0 0
      %582 = vperm.xlu0 %581, %v329
      %v583 = vpop.permute.xlu0 %582
      %586 = vset.pattern.permute.xlu0 0
      %587 = vperm.xlu0 %586, %v330
      %v588 = vpop.permute.xlu0 %587
      %591 = vset.pattern.permute.xlu0 0
      %592 = vperm.xlu0 %591, %v331
      %v593 = vpop.permute.xlu0 %592
      %596 = vset.pattern.permute.xlu0 0
      %597 = vperm.xlu0 %596, %v332
      %v598 = vpop.permute.xlu0 %597
      %601 = vset.pattern.permute.xlu0 0
      %602 = vperm.xlu0 %601, %v333
      %v603 = vpop.permute.xlu0 %602
      %v605 = vperm.slane %v334, 0
      %v606 = vmul.f32 %v338, %v605
      %v607 = vmul.f32 %v343, %v605
      %v608 = vmul.f32 %v348, %v605
      %v609 = vmul.f32 %v353, %v605
      %v610 = vmul.f32 %v358, %v605
      %v611 = vmul.f32 %v363, %v605
      %v612 = vmul.f32 %v368, %v605
      %v613 = vmul.f32 %v373, %v605
      %v614 = vmul.f32 %v378, %v605
      %v615 = vmul.f32 %v383, %v605
      %v616 = vmul.f32 %v388, %v605
      %v617 = vmul.f32 %v393, %v605
      %v618 = vmul.f32 %v398, %v605
      %v619 = vmul.f32 %v403, %v605
      %v620 = vmul.f32 %v408, %v605
      %v621 = vmul.f32 %v413, %v605
      %v622 = vmul.f32 %v418, %v605
      %v623 = vmul.f32 %v423, %v605
      %v624 = vmul.f32 %v428, %v605
      %v625 = vmul.f32 %v433, %v605
      %v626 = vmul.f32 %v438, %v605
      %v627 = vmul.f32 %v443, %v605
      %v628 = vmul.f32 %v448, %v605
      %v629 = vmul.f32 %v453, %v605
      %v630 = vmul.f32 %v458, %v605
      %v631 = vmul.f32 %v463, %v605
      %v632 = vmul.f32 %v468, %v605
      %v633 = vmul.f32 %v473, %v605
      %v634 = vmul.f32 %v478, %v605
      %v635 = vmul.f32 %v483, %v605
      %v636 = vmul.f32 %v488, %v605
      %v637 = vmul.f32 %v493, %v605
      %v638 = vmul.f32 %v498, %v605
      %v639 = vmul.f32 %v503, %v605
      %v640 = vmul.f32 %v508, %v605
      %v641 = vmul.f32 %v513, %v605
      %v642 = vmul.f32 %v518, %v605
      %v643 = vmul.f32 %v523, %v605
      %v644 = vmul.f32 %v528, %v605
      %v645 = vmul.f32 %v533, %v605
      %v646 = vmul.f32 %v538, %v605
      %v647 = vmul.f32 %v543, %v605
      %v648 = vmul.f32 %v548, %v605
      %v649 = vmul.f32 %v553, %v605
      %v650 = vmul.f32 %v558, %v605
      %v651 = vmul.f32 %v563, %v605
      %v652 = vmul.f32 %v568, %v605
      %v653 = vmul.f32 %v573, %v605
      %v654 = vmul.f32 %v578, %v605
      %v655 = vmul.f32 %v583, %v605
      %v656 = vmul.f32 %v588, %v605
      %v657 = vmul.f32 %v593, %v605
      %v658 = vmul.f32 %v598, %v605
      %v659 = vmul.f32 %v603, %v605
      %660 = vset.pattern.permute.xlu0 1
      %661 = vperm.xlu0 %660, %v280
      %v662 = vpop.permute.xlu0 %661
      %664 = vset.pattern.permute.xlu0 1
      %665 = vperm.xlu0 %664, %v281
      %v666 = vpop.permute.xlu0 %665
      %668 = vset.pattern.permute.xlu0 1
      %669 = vperm.xlu0 %668, %v282
      %v670 = vpop.permute.xlu0 %669
      %672 = vset.pattern.permute.xlu0 1
      %673 = vperm.xlu0 %672, %v283
      %v674 = vpop.permute.xlu0 %673
      %676 = vset.pattern.permute.xlu0 1
      %677 = vperm.xlu0 %676, %v284
      %v678 = vpop.permute.xlu0 %677
      %680 = vset.pattern.permute.xlu0 1
      %681 = vperm.xlu0 %680, %v285
      %v682 = vpop.permute.xlu0 %681
      %684 = vset.pattern.permute.xlu0 1
      %685 = vperm.xlu0 %684, %v286
      %v686 = vpop.permute.xlu0 %685
      %688 = vset.pattern.permute.xlu0 1
      %689 = vperm.xlu0 %688, %v287
      %v690 = vpop.permute.xlu0 %689
      %692 = vset.pattern.permute.xlu0 1
      %693 = vperm.xlu0 %692, %v288
      %v694 = vpop.permute.xlu0 %693
      %696 = vset.pattern.permute.xlu0 1
      %697 = vperm.xlu0 %696, %v289
      %v698 = vpop.permute.xlu0 %697
      %700 = vset.pattern.permute.xlu0 1
      %701 = vperm.xlu0 %700, %v290
      %v702 = vpop.permute.xlu0 %701
      %704 = vset.pattern.permute.xlu0 1
      %705 = vperm.xlu0 %704, %v291
      %v706 = vpop.permute.xlu0 %705
      %708 = vset.pattern.permute.xlu0 1
      %709 = vperm.xlu0 %708, %v292
      %v710 = vpop.permute.xlu0 %709
      %712 = vset.pattern.permute.xlu0 1
      %713 = vperm.xlu0 %712, %v293
      %v714 = vpop.permute.xlu0 %713
      %716 = vset.pattern.permute.xlu0 1
      %717 = vperm.xlu0 %716, %v294
      %v718 = vpop.permute.xlu0 %717
      %720 = vset.pattern.permute.xlu0 1
      %721 = vperm.xlu0 %720, %v295
      %v722 = vpop.permute.xlu0 %721
      %724 = vset.pattern.permute.xlu0 1
      %725 = vperm.xlu0 %724, %v296
      %v726 = vpop.permute.xlu0 %725
      %728 = vset.pattern.permute.xlu0 1
      %729 = vperm.xlu0 %728, %v297
      %v730 = vpop.permute.xlu0 %729
      %732 = vset.pattern.permute.xlu0 1
      %733 = vperm.xlu0 %732, %v298
      %v734 = vpop.permute.xlu0 %733
      %736 = vset.pattern.permute.xlu0 1
      %737 = vperm.xlu0 %736, %v299
      %v738 = vpop.permute.xlu0 %737
      %740 = vset.pattern.permute.xlu0 1
      %741 = vperm.xlu0 %740, %v300
      %v742 = vpop.permute.xlu0 %741
      %744 = vset.pattern.permute.xlu0 1
      %745 = vperm.xlu0 %744, %v301
      %v746 = vpop.permute.xlu0 %745
      %748 = vset.pattern.permute.xlu0 1
      %749 = vperm.xlu0 %748, %v302
      %v750 = vpop.permute.xlu0 %749
      %752 = vset.pattern.permute.xlu0 1
      %753 = vperm.xlu0 %752, %v303
      %v754 = vpop.permute.xlu0 %753
      %756 = vset.pattern.permute.xlu0 1
      %757 = vperm.xlu0 %756, %v304
      %v758 = vpop.permute.xlu0 %757
      %760 = vset.pattern.permute.xlu0 1
      %761 = vperm.xlu0 %760, %v305
      %v762 = vpop.permute.xlu0 %761
      %764 = vset.pattern.permute.xlu0 1
      %765 = vperm.xlu0 %764, %v306
      %v766 = vpop.permute.xlu0 %765
      %768 = vset.pattern.permute.xlu0 1
      %769 = vperm.xlu0 %768, %v307
      %v770 = vpop.permute.xlu0 %769
      %772 = vset.pattern.permute.xlu0 1
      %773 = vperm.xlu0 %772, %v308
      %v774 = vpop.permute.xlu0 %773
      %776 = vset.pattern.permute.xlu0 1
      %777 = vperm.xlu0 %776, %v309
      %v778 = vpop.permute.xlu0 %777
      %780 = vset.pattern.permute.xlu0 1
      %781 = vperm.xlu0 %780, %v310
      %v782 = vpop.permute.xlu0 %781
      %784 = vset.pattern.permute.xlu0 1
      %785 = vperm.xlu0 %784, %v311
      %v786 = vpop.permute.xlu0 %785
      %788 = vset.pattern.permute.xlu0 1
      %789 = vperm.xlu0 %788, %v312
      %v790 = vpop.permute.xlu0 %789
      %792 = vset.pattern.permute.xlu0 1
      %793 = vperm.xlu0 %792, %v313
      %v794 = vpop.permute.xlu0 %793
      %796 = vset.pattern.permute.xlu0 1
      %797 = vperm.xlu0 %796, %v314
      %v798 = vpop.permute.xlu0 %797
      %800 = vset.pattern.permute.xlu0 1
      %801 = vperm.xlu0 %800, %v315
      %v802 = vpop.permute.xlu0 %801
      %804 = vset.pattern.permute.xlu0 1
      %805 = vperm.xlu0 %804, %v316
      %v806 = vpop.permute.xlu0 %805
      %808 = vset.pattern.permute.xlu0 1
      %809 = vperm.xlu0 %808, %v317
      %v810 = vpop.permute.xlu0 %809
      %812 = vset.pattern.permute.xlu0 1
      %813 = vperm.xlu0 %812, %v318
      %v814 = vpop.permute.xlu0 %813
      %816 = vset.pattern.permute.xlu0 1
      %817 = vperm.xlu0 %816, %v319
      %v818 = vpop.permute.xlu0 %817
      %820 = vset.pattern.permute.xlu0 1
      %821 = vperm.xlu0 %820, %v320
      %v822 = vpop.permute.xlu0 %821
      %824 = vset.pattern.permute.xlu0 1
      %825 = vperm.xlu0 %824, %v321
      %v826 = vpop.permute.xlu0 %825
      %828 = vset.pattern.permute.xlu0 1
      %829 = vperm.xlu0 %828, %v322
      %v830 = vpop.permute.xlu0 %829
      %832 = vset.pattern.permute.xlu0 1
      %833 = vperm.xlu0 %832, %v323
      %v834 = vpop.permute.xlu0 %833
      %836 = vset.pattern.permute.xlu0 1
      %837 = vperm.xlu0 %836, %v324
      %v838 = vpop.permute.xlu0 %837
      %840 = vset.pattern.permute.xlu0 1
      %841 = vperm.xlu0 %840, %v325
      %v842 = vpop.permute.xlu0 %841
      %844 = vset.pattern.permute.xlu0 1
      %845 = vperm.xlu0 %844, %v326
      %v846 = vpop.permute.xlu0 %845
      %848 = vset.pattern.permute.xlu0 1
      %849 = vperm.xlu0 %848, %v327
      %v850 = vpop.permute.xlu0 %849
      %852 = vset.pattern.permute.xlu0 1
      %853 = vperm.xlu0 %852, %v328
      %v854 = vpop.permute.xlu0 %853
      %856 = vset.pattern.permute.xlu0 1
      %857 = vperm.xlu0 %856, %v329
      %v858 = vpop.permute.xlu0 %857
      %860 = vset.pattern.permute.xlu0 1
      %861 = vperm.xlu0 %860, %v330
      %v862 = vpop.permute.xlu0 %861
      %864 = vset.pattern.permute.xlu0 1
      %865 = vperm.xlu0 %864, %v331
      %v866 = vpop.permute.xlu0 %865
      %868 = vset.pattern.permute.xlu0 1
      %869 = vperm.xlu0 %868, %v332
      %v870 = vpop.permute.xlu0 %869
      %872 = vset.pattern.permute.xlu0 1
      %873 = vperm.xlu0 %872, %v333
      %v874 = vpop.permute.xlu0 %873
      %v876 = vperm.slane %v334, 1
      %v877 = vmul.f32 %v662, %v876
      %v878 = vmul.f32 %v666, %v876
      %v879 = vmul.f32 %v670, %v876
      %v880 = vmul.f32 %v674, %v876
      %v881 = vmul.f32 %v678, %v876
      %v882 = vmul.f32 %v682, %v876
      %v883 = vmul.f32 %v686, %v876
      %v884 = vmul.f32 %v690, %v876
      %v885 = vmul.f32 %v694, %v876
      %v886 = vmul.f32 %v698, %v876
      %v887 = vmul.f32 %v702, %v876
      %v888 = vmul.f32 %v706, %v876
      %v889 = vmul.f32 %v710, %v876
      %v890 = vmul.f32 %v714, %v876
      %v891 = vmul.f32 %v718, %v876
      %v892 = vmul.f32 %v722, %v876
      %v893 = vmul.f32 %v726, %v876
      %v894 = vmul.f32 %v730, %v876
      %v895 = vmul.f32 %v734, %v876
      %v896 = vmul.f32 %v738, %v876
      %v897 = vmul.f32 %v742, %v876
      %v898 = vmul.f32 %v746, %v876
      %v899 = vmul.f32 %v750, %v876
      %v900 = vmul.f32 %v754, %v876
      %v901 = vmul.f32 %v758, %v876
      %v902 = vmul.f32 %v762, %v876
      %v903 = vmul.f32 %v766, %v876
      %v904 = vmul.f32 %v770, %v876
      %v905 = vmul.f32 %v774, %v876
      %v906 = vmul.f32 %v778, %v876
      %v907 = vmul.f32 %v782, %v876
      %v908 = vmul.f32 %v786, %v876
      %v909 = vmul.f32 %v790, %v876
      %v910 = vmul.f32 %v794, %v876
      %v911 = vmul.f32 %v798, %v876
      %v912 = vmul.f32 %v802, %v876
      %v913 = vmul.f32 %v806, %v876
      %v914 = vmul.f32 %v810, %v876
      %v915 = vmul.f32 %v814, %v876
      %v916 = vmul.f32 %v818, %v876
      %v917 = vmul.f32 %v822, %v876
      %v918 = vmul.f32 %v826, %v876
      %v919 = vmul.f32 %v830, %v876
      %v920 = vmul.f32 %v834, %v876
      %v921 = vmul.f32 %v838, %v876
      %v922 = vmul.f32 %v842, %v876
      %v923 = vmul.f32 %v846, %v876
      %v924 = vmul.f32 %v850, %v876
      %v925 = vmul.f32 %v854, %v876
      %v926 = vmul.f32 %v858, %v876
      %v927 = vmul.f32 %v862, %v876
      %v928 = vmul.f32 %v866, %v876
      %v929 = vmul.f32 %v870, %v876
      %v930 = vmul.f32 %v874, %v876
      %v931 = vadd.f32 %v606, %v877
      %v932 = vadd.f32 %v607, %v878
      %v933 = vadd.f32 %v608, %v879
      %v934 = vadd.f32 %v609, %v880
      %v935 = vadd.f32 %v610, %v881
      %v936 = vadd.f32 %v611, %v882
      %v937 = vadd.f32 %v612, %v883
      %v938 = vadd.f32 %v613, %v884
      %v939 = vadd.f32 %v614, %v885
      %v940 = vadd.f32 %v615, %v886
      %v941 = vadd.f32 %v616, %v887
      %v942 = vadd.f32 %v617, %v888
      %v943 = vadd.f32 %v618, %v889
      %v944 = vadd.f32 %v619, %v890
      %v945 = vadd.f32 %v620, %v891
      %v946 = vadd.f32 %v621, %v892
      %v947 = vadd.f32 %v622, %v893
      %v948 = vadd.f32 %v623, %v894
      %v949 = vadd.f32 %v624, %v895
      %v950 = vadd.f32 %v625, %v896
      %v951 = vadd.f32 %v626, %v897
      %v952 = vadd.f32 %v627, %v898
      %v953 = vadd.f32 %v628, %v899
      %v954 = vadd.f32 %v629, %v900
      %v955 = vadd.f32 %v630, %v901
      %v956 = vadd.f32 %v631, %v902
      %v957 = vadd.f32 %v632, %v903
      %v958 = vadd.f32 %v633, %v904
      %v959 = vadd.f32 %v634, %v905
      %v960 = vadd.f32 %v635, %v906
      %v961 = vadd.f32 %v636, %v907
      %v962 = vadd.f32 %v637, %v908
      %v963 = vadd.f32 %v638, %v909
      %v964 = vadd.f32 %v639, %v910
      %v965 = vadd.f32 %v640, %v911
      %v966 = vadd.f32 %v641, %v912
      %v967 = vadd.f32 %v642, %v913
      %v968 = vadd.f32 %v643, %v914
      %v969 = vadd.f32 %v644, %v915
      %v970 = vadd.f32 %v645, %v916
      %v971 = vadd.f32 %v646, %v917
      %v972 = vadd.f32 %v647, %v918
      %v973 = vadd.f32 %v648, %v919
      %v974 = vadd.f32 %v649, %v920
      %v975 = vadd.f32 %v650, %v921
      %v976 = vadd.f32 %v651, %v922
      %v977 = vadd.f32 %v652, %v923
      %v978 = vadd.f32 %v653, %v924
      %v979 = vadd.f32 %v654, %v925
      %v980 = vadd.f32 %v655, %v926
      %v981 = vadd.f32 %v656, %v927
      %v982 = vadd.f32 %v657, %v928
      %v983 = vadd.f32 %v658, %v929
      %v984 = vadd.f32 %v659, %v930
      %985 = vset.pattern.permute.xlu0 2
      %986 = vperm.xlu0 %985, %v280
      %v987 = vpop.permute.xlu0 %986
      %989 = vset.pattern.permute.xlu0 2
      %990 = vperm.xlu0 %989, %v281
      %v991 = vpop.permute.xlu0 %990
      %993 = vset.pattern.permute.xlu0 2
      %994 = vperm.xlu0 %993, %v282
      %v995 = vpop.permute.xlu0 %994
      %997 = vset.pattern.permute.xlu0 2
      %998 = vperm.xlu0 %997, %v283
      %v999 = vpop.permute.xlu0 %998
      %1001 = vset.pattern.permute.xlu0 2
      %1002 = vperm.xlu0 %1001, %v284
      %v1003 = vpop.permute.xlu0 %1002
      %1005 = vset.pattern.permute.xlu0 2
      %1006 = vperm.xlu0 %1005, %v285
      %v1007 = vpop.permute.xlu0 %1006
      %1009 = vset.pattern.permute.xlu0 2
      %1010 = vperm.xlu0 %1009, %v286
      %v1011 = vpop.permute.xlu0 %1010
      %1013 = vset.pattern.permute.xlu0 2
      %1014 = vperm.xlu0 %1013, %v287
      %v1015 = vpop.permute.xlu0 %1014
      %1017 = vset.pattern.permute.xlu0 2
      %1018 = vperm.xlu0 %1017, %v288
      %v1019 = vpop.permute.xlu0 %1018
      %1021 = vset.pattern.permute.xlu0 2
      %1022 = vperm.xlu0 %1021, %v289
      %v1023 = vpop.permute.xlu0 %1022
      %1025 = vset.pattern.permute.xlu0 2
      %1026 = vperm.xlu0 %1025, %v290
      %v1027 = vpop.permute.xlu0 %1026
      %1029 = vset.pattern.permute.xlu0 2
      %1030 = vperm.xlu0 %1029, %v291
      %v1031 = vpop.permute.xlu0 %1030
      %1033 = vset.pattern.permute.xlu0 2
      %1034 = vperm.xlu0 %1033, %v292
      %v1035 = vpop.permute.xlu0 %1034
      %1037 = vset.pattern.permute.xlu0 2
      %1038 = vperm.xlu0 %1037, %v293
      %v1039 = vpop.permute.xlu0 %1038
      %1041 = vset.pattern.permute.xlu0 2
      %1042 = vperm.xlu0 %1041, %v294
      %v1043 = vpop.permute.xlu0 %1042
      %1045 = vset.pattern.permute.xlu0 2
      %1046 = vperm.xlu0 %1045, %v295
      %v1047 = vpop.permute.xlu0 %1046
      %1049 = vset.pattern.permute.xlu0 2
      %1050 = vperm.xlu0 %1049, %v296
      %v1051 = vpop.permute.xlu0 %1050
      %1053 = vset.pattern.permute.xlu0 2
      %1054 = vperm.xlu0 %1053, %v297
      %v1055 = vpop.permute.xlu0 %1054
      %1057 = vset.pattern.permute.xlu0 2
      %1058 = vperm.xlu0 %1057, %v298
      %v1059 = vpop.permute.xlu0 %1058
      %1061 = vset.pattern.permute.xlu0 2
      %1062 = vperm.xlu0 %1061, %v299
      %v1063 = vpop.permute.xlu0 %1062
      %1065 = vset.pattern.permute.xlu0 2
      %1066 = vperm.xlu0 %1065, %v300
      %v1067 = vpop.permute.xlu0 %1066
      %1069 = vset.pattern.permute.xlu0 2
      %1070 = vperm.xlu0 %1069, %v301
      %v1071 = vpop.permute.xlu0 %1070
      %1073 = vset.pattern.permute.xlu0 2
      %1074 = vperm.xlu0 %1073, %v302
      %v1075 = vpop.permute.xlu0 %1074
      %1077 = vset.pattern.permute.xlu0 2
      %1078 = vperm.xlu0 %1077, %v303
      %v1079 = vpop.permute.xlu0 %1078
      %1081 = vset.pattern.permute.xlu0 2
      %1082 = vperm.xlu0 %1081, %v304
      %v1083 = vpop.permute.xlu0 %1082
      %1085 = vset.pattern.permute.xlu0 2
      %1086 = vperm.xlu0 %1085, %v305
      %v1087 = vpop.permute.xlu0 %1086
      %1089 = vset.pattern.permute.xlu0 2
      %1090 = vperm.xlu0 %1089, %v306
      %v1091 = vpop.permute.xlu0 %1090
      %1093 = vset.pattern.permute.xlu0 2
      %1094 = vperm.xlu0 %1093, %v307
      %v1095 = vpop.permute.xlu0 %1094
      %1097 = vset.pattern.permute.xlu0 2
      %1098 = vperm.xlu0 %1097, %v308
      %v1099 = vpop.permute.xlu0 %1098
      %1101 = vset.pattern.permute.xlu0 2
      %1102 = vperm.xlu0 %1101, %v309
      %v1103 = vpop.permute.xlu0 %1102
      %1105 = vset.pattern.permute.xlu0 2
      %1106 = vperm.xlu0 %1105, %v310
      %v1107 = vpop.permute.xlu0 %1106
      %1109 = vset.pattern.permute.xlu0 2
      %1110 = vperm.xlu0 %1109, %v311
      %v1111 = vpop.permute.xlu0 %1110
      %1113 = vset.pattern.permute.xlu0 2
      %1114 = vperm.xlu0 %1113, %v312
      %v1115 = vpop.permute.xlu0 %1114
      %1117 = vset.pattern.permute.xlu0 2
      %1118 = vperm.xlu0 %1117, %v313
      %v1119 = vpop.permute.xlu0 %1118
      %1121 = vset.pattern.permute.xlu0 2
      %1122 = vperm.xlu0 %1121, %v314
      %v1123 = vpop.permute.xlu0 %1122
      %1125 = vset.pattern.permute.xlu0 2
      %1126 = vperm.xlu0 %1125, %v315
      %v1127 = vpop.permute.xlu0 %1126
      %1129 = vset.pattern.permute.xlu0 2
      %1130 = vperm.xlu0 %1129, %v316
      %v1131 = vpop.permute.xlu0 %1130
      %1133 = vset.pattern.permute.xlu0 2
      %1134 = vperm.xlu0 %1133, %v317
      %v1135 = vpop.permute.xlu0 %1134
      %1137 = vset.pattern.permute.xlu0 2
      %1138 = vperm.xlu0 %1137, %v318
      %v1139 = vpop.permute.xlu0 %1138
      %1141 = vset.pattern.permute.xlu0 2
      %1142 = vperm.xlu0 %1141, %v319
      %v1143 = vpop.permute.xlu0 %1142
      %1145 = vset.pattern.permute.xlu0 2
      %1146 = vperm.xlu0 %1145, %v320
      %v1147 = vpop.permute.xlu0 %1146
      %1149 = vset.pattern.permute.xlu0 2
      %1150 = vperm.xlu0 %1149, %v321
      %v1151 = vpop.permute.xlu0 %1150
      %1153 = vset.pattern.permute.xlu0 2
      %1154 = vperm.xlu0 %1153, %v322
      %v1155 = vpop.permute.xlu0 %1154
      %1157 = vset.pattern.permute.xlu0 2
      %1158 = vperm.xlu0 %1157, %v323
      %v1159 = vpop.permute.xlu0 %1158
      %1161 = vset.pattern.permute.xlu0 2
      %1162 = vperm.xlu0 %1161, %v324
      %v1163 = vpop.permute.xlu0 %1162
      %1165 = vset.pattern.permute.xlu0 2
      %1166 = vperm.xlu0 %1165, %v325
      %v1167 = vpop.permute.xlu0 %1166
      %1169 = vset.pattern.permute.xlu0 2
      %1170 = vperm.xlu0 %1169, %v326
      %v1171 = vpop.permute.xlu0 %1170
      %1173 = vset.pattern.permute.xlu0 2
      %1174 = vperm.xlu0 %1173, %v327
      %v1175 = vpop.permute.xlu0 %1174
      %1177 = vset.pattern.permute.xlu0 2
      %1178 = vperm.xlu0 %1177, %v328
      %v1179 = vpop.permute.xlu0 %1178
      %1181 = vset.pattern.permute.xlu0 2
      %1182 = vperm.xlu0 %1181, %v329
      %v1183 = vpop.permute.xlu0 %1182
      %1185 = vset.pattern.permute.xlu0 2
      %1186 = vperm.xlu0 %1185, %v330
      %v1187 = vpop.permute.xlu0 %1186
      %1189 = vset.pattern.permute.xlu0 2
      %1190 = vperm.xlu0 %1189, %v331
      %v1191 = vpop.permute.xlu0 %1190
      %1193 = vset.pattern.permute.xlu0 2
      %1194 = vperm.xlu0 %1193, %v332
      %v1195 = vpop.permute.xlu0 %1194
      %1197 = vset.pattern.permute.xlu0 2
      %1198 = vperm.xlu0 %1197, %v333
      %v1199 = vpop.permute.xlu0 %1198
      %v1201 = vperm.slane %v334, 2
      %v1202 = vmul.f32 %v987, %v1201
      %v1203 = vmul.f32 %v991, %v1201
      %v1204 = vmul.f32 %v995, %v1201
      %v1205 = vmul.f32 %v999, %v1201
      %v1206 = vmul.f32 %v1003, %v1201
      %v1207 = vmul.f32 %v1007, %v1201
      %v1208 = vmul.f32 %v1011, %v1201
      %v1209 = vmul.f32 %v1015, %v1201
      %v1210 = vmul.f32 %v1019, %v1201
      %v1211 = vmul.f32 %v1023, %v1201
      %v1212 = vmul.f32 %v1027, %v1201
      %v1213 = vmul.f32 %v1031, %v1201
      %v1214 = vmul.f32 %v1035, %v1201
      %v1215 = vmul.f32 %v1039, %v1201
      %v1216 = vmul.f32 %v1043, %v1201
      %v1217 = vmul.f32 %v1047, %v1201
      %v1218 = vmul.f32 %v1051, %v1201
      %v1219 = vmul.f32 %v1055, %v1201
      %v1220 = vmul.f32 %v1059, %v1201
      %v1221 = vmul.f32 %v1063, %v1201
      %v1222 = vmul.f32 %v1067, %v1201
      %v1223 = vmul.f32 %v1071, %v1201
      %v1224 = vmul.f32 %v1075, %v1201
      %v1225 = vmul.f32 %v1079, %v1201
      %v1226 = vmul.f32 %v1083, %v1201
      %v1227 = vmul.f32 %v1087, %v1201
      %v1228 = vmul.f32 %v1091, %v1201
      %v1229 = vmul.f32 %v1095, %v1201
      %v1230 = vmul.f32 %v1099, %v1201
      %v1231 = vmul.f32 %v1103, %v1201
      %v1232 = vmul.f32 %v1107, %v1201
      %v1233 = vmul.f32 %v1111, %v1201
      %v1234 = vmul.f32 %v1115, %v1201
      %v1235 = vmul.f32 %v1119, %v1201
      %v1236 = vmul.f32 %v1123, %v1201
      %v1237 = vmul.f32 %v1127, %v1201
      %v1238 = vmul.f32 %v1131, %v1201
      %v1239 = vmul.f32 %v1135, %v1201
      %v1240 = vmul.f32 %v1139, %v1201
      %v1241 = vmul.f32 %v1143, %v1201
      %v1242 = vmul.f32 %v1147, %v1201
      %v1243 = vmul.f32 %v1151, %v1201
      %v1244 = vmul.f32 %v1155, %v1201
      %v1245 = vmul.f32 %v1159, %v1201
      %v1246 = vmul.f32 %v1163, %v1201
      %v1247 = vmul.f32 %v1167, %v1201
      %v1248 = vmul.f32 %v1171, %v1201
      %v1249 = vmul.f32 %v1175, %v1201
      %v1250 = vmul.f32 %v1179, %v1201
      %v1251 = vmul.f32 %v1183, %v1201
      %v1252 = vmul.f32 %v1187, %v1201
      %v1253 = vmul.f32 %v1191, %v1201
      %v1254 = vmul.f32 %v1195, %v1201
      %v1255 = vmul.f32 %v1199, %v1201
      %v1256 = vadd.f32 %v931, %v1202
      %v1257 = vadd.f32 %v932, %v1203
      %v1258 = vadd.f32 %v933, %v1204
      %v1259 = vadd.f32 %v934, %v1205
      %v1260 = vadd.f32 %v935, %v1206
      %v1261 = vadd.f32 %v936, %v1207
      %v1262 = vadd.f32 %v937, %v1208
      %v1263 = vadd.f32 %v938, %v1209
      %v1264 = vadd.f32 %v939, %v1210
      %v1265 = vadd.f32 %v940, %v1211
      %v1266 = vadd.f32 %v941, %v1212
      %v1267 = vadd.f32 %v942, %v1213
      %v1268 = vadd.f32 %v943, %v1214
      %v1269 = vadd.f32 %v944, %v1215
      %v1270 = vadd.f32 %v945, %v1216
      %v1271 = vadd.f32 %v946, %v1217
      %v1272 = vadd.f32 %v947, %v1218
      %v1273 = vadd.f32 %v948, %v1219
      %v1274 = vadd.f32 %v949, %v1220
      %v1275 = vadd.f32 %v950, %v1221
      %v1276 = vadd.f32 %v951, %v1222
      %v1277 = vadd.f32 %v952, %v1223
      %v1278 = vadd.f32 %v953, %v1224
      %v1279 = vadd.f32 %v954, %v1225
      %v1280 = vadd.f32 %v955, %v1226
      %v1281 = vadd.f32 %v956, %v1227
      %v1282 = vadd.f32 %v957, %v1228
      %v1283 = vadd.f32 %v958, %v1229
      %v1284 = vadd.f32 %v959, %v1230
      %v1285 = vadd.f32 %v960, %v1231
      %v1286 = vadd.f32 %v961, %v1232
      %v1287 = vadd.f32 %v962, %v1233
      %v1288 = vadd.f32 %v963, %v1234
      %v1289 = vadd.f32 %v964, %v1235
      %v1290 = vadd.f32 %v965, %v1236
      %v1291 = vadd.f32 %v966, %v1237
      %v1292 = vadd.f32 %v967, %v1238
      %v1293 = vadd.f32 %v968, %v1239
      %v1294 = vadd.f32 %v969, %v1240
      %v1295 = vadd.f32 %v970, %v1241
      %v1296 = vadd.f32 %v971, %v1242
      %v1297 = vadd.f32 %v972, %v1243
      %v1298 = vadd.f32 %v973, %v1244
      %v1299 = vadd.f32 %v974, %v1245
      %v1300 = vadd.f32 %v975, %v1246
      %v1301 = vadd.f32 %v976, %v1247
      %v1302 = vadd.f32 %v977, %v1248
      %v1303 = vadd.f32 %v978, %v1249
      %v1304 = vadd.f32 %v979, %v1250
      %v1305 = vadd.f32 %v980, %v1251
      %v1306 = vadd.f32 %v981, %v1252
      %v1307 = vadd.f32 %v982, %v1253
      %v1308 = vadd.f32 %v983, %v1254
      %v1309 = vadd.f32 %v984, %v1255
      %1310 = vset.pattern.permute.xlu0 3
      %1311 = vperm.xlu0 %1310, %v280
      %v1312 = vpop.permute.xlu0 %1311
      %1314 = vset.pattern.permute.xlu0 3
      %1315 = vperm.xlu0 %1314, %v281
      %v1316 = vpop.permute.xlu0 %1315
      %1318 = vset.pattern.permute.xlu0 3
      %1319 = vperm.xlu0 %1318, %v282
      %v1320 = vpop.permute.xlu0 %1319
      %1322 = vset.pattern.permute.xlu0 3
      %1323 = vperm.xlu0 %1322, %v283
      %v1324 = vpop.permute.xlu0 %1323
      %1326 = vset.pattern.permute.xlu0 3
      %1327 = vperm.xlu0 %1326, %v284
      %v1328 = vpop.permute.xlu0 %1327
      %1330 = vset.pattern.permute.xlu0 3
      %1331 = vperm.xlu0 %1330, %v285
      %v1332 = vpop.permute.xlu0 %1331
      %1334 = vset.pattern.permute.xlu0 3
      %1335 = vperm.xlu0 %1334, %v286
      %v1336 = vpop.permute.xlu0 %1335
      %1338 = vset.pattern.permute.xlu0 3
      %1339 = vperm.xlu0 %1338, %v287
      %v1340 = vpop.permute.xlu0 %1339
      %1342 = vset.pattern.permute.xlu0 3
      %1343 = vperm.xlu0 %1342, %v288
      %v1344 = vpop.permute.xlu0 %1343
      %1346 = vset.pattern.permute.xlu0 3
      %1347 = vperm.xlu0 %1346, %v289
      %v1348 = vpop.permute.xlu0 %1347
      %1350 = vset.pattern.permute.xlu0 3
      %1351 = vperm.xlu0 %1350, %v290
      %v1352 = vpop.permute.xlu0 %1351
      %1354 = vset.pattern.permute.xlu0 3
      %1355 = vperm.xlu0 %1354, %v291
      %v1356 = vpop.permute.xlu0 %1355
      %1358 = vset.pattern.permute.xlu0 3
      %1359 = vperm.xlu0 %1358, %v292
      %v1360 = vpop.permute.xlu0 %1359
      %1362 = vset.pattern.permute.xlu0 3
      %1363 = vperm.xlu0 %1362, %v293
      %v1364 = vpop.permute.xlu0 %1363
      %1366 = vset.pattern.permute.xlu0 3
      %1367 = vperm.xlu0 %1366, %v294
      %v1368 = vpop.permute.xlu0 %1367
      %1370 = vset.pattern.permute.xlu0 3
      %1371 = vperm.xlu0 %1370, %v295
      %v1372 = vpop.permute.xlu0 %1371
      %1374 = vset.pattern.permute.xlu0 3
      %1375 = vperm.xlu0 %1374, %v296
      %v1376 = vpop.permute.xlu0 %1375
      %1378 = vset.pattern.permute.xlu0 3
      %1379 = vperm.xlu0 %1378, %v297
      %v1380 = vpop.permute.xlu0 %1379
      %1382 = vset.pattern.permute.xlu0 3
      %1383 = vperm.xlu0 %1382, %v298
      %v1384 = vpop.permute.xlu0 %1383
      %1386 = vset.pattern.permute.xlu0 3
      %1387 = vperm.xlu0 %1386, %v299
      %v1388 = vpop.permute.xlu0 %1387
      %1390 = vset.pattern.permute.xlu0 3
      %1391 = vperm.xlu0 %1390, %v300
      %v1392 = vpop.permute.xlu0 %1391
      %1394 = vset.pattern.permute.xlu0 3
      %1395 = vperm.xlu0 %1394, %v301
      %v1396 = vpop.permute.xlu0 %1395
      %1398 = vset.pattern.permute.xlu0 3
      %1399 = vperm.xlu0 %1398, %v302
      %v1400 = vpop.permute.xlu0 %1399
      %1402 = vset.pattern.permute.xlu0 3
      %1403 = vperm.xlu0 %1402, %v303
      %v1404 = vpop.permute.xlu0 %1403
      %1406 = vset.pattern.permute.xlu0 3
      %1407 = vperm.xlu0 %1406, %v304
      %v1408 = vpop.permute.xlu0 %1407
      %1410 = vset.pattern.permute.xlu0 3
      %1411 = vperm.xlu0 %1410, %v305
      %v1412 = vpop.permute.xlu0 %1411
      %1414 = vset.pattern.permute.xlu0 3
      %1415 = vperm.xlu0 %1414, %v306
      %v1416 = vpop.permute.xlu0 %1415
      %1418 = vset.pattern.permute.xlu0 3
      %1419 = vperm.xlu0 %1418, %v307
      %v1420 = vpop.permute.xlu0 %1419
      %1422 = vset.pattern.permute.xlu0 3
      %1423 = vperm.xlu0 %1422, %v308
      %v1424 = vpop.permute.xlu0 %1423
      %1426 = vset.pattern.permute.xlu0 3
      %1427 = vperm.xlu0 %1426, %v309
      %v1428 = vpop.permute.xlu0 %1427
      %1430 = vset.pattern.permute.xlu0 3
      %1431 = vperm.xlu0 %1430, %v310
      %v1432 = vpop.permute.xlu0 %1431
      %1434 = vset.pattern.permute.xlu0 3
      %1435 = vperm.xlu0 %1434, %v311
      %v1436 = vpop.permute.xlu0 %1435
      %1438 = vset.pattern.permute.xlu0 3
      %1439 = vperm.xlu0 %1438, %v312
      %v1440 = vpop.permute.xlu0 %1439
      %1442 = vset.pattern.permute.xlu0 3
      %1443 = vperm.xlu0 %1442, %v313
      %v1444 = vpop.permute.xlu0 %1443
      %1446 = vset.pattern.permute.xlu0 3
      %1447 = vperm.xlu0 %1446, %v314
      %v1448 = vpop.permute.xlu0 %1447
      %1450 = vset.pattern.permute.xlu0 3
      %1451 = vperm.xlu0 %1450, %v315
      %v1452 = vpop.permute.xlu0 %1451
      %1454 = vset.pattern.permute.xlu0 3
      %1455 = vperm.xlu0 %1454, %v316
      %v1456 = vpop.permute.xlu0 %1455
      %1458 = vset.pattern.permute.xlu0 3
      %1459 = vperm.xlu0 %1458, %v317
      %v1460 = vpop.permute.xlu0 %1459
      %1462 = vset.pattern.permute.xlu0 3
      %1463 = vperm.xlu0 %1462, %v318
      %v1464 = vpop.permute.xlu0 %1463
      %1466 = vset.pattern.permute.xlu0 3
      %1467 = vperm.xlu0 %1466, %v319
      %v1468 = vpop.permute.xlu0 %1467
      %1470 = vset.pattern.permute.xlu0 3
      %1471 = vperm.xlu0 %1470, %v320
      %v1472 = vpop.permute.xlu0 %1471
      %1474 = vset.pattern.permute.xlu0 3
      %1475 = vperm.xlu0 %1474, %v321
      %v1476 = vpop.permute.xlu0 %1475
      %1478 = vset.pattern.permute.xlu0 3
      %1479 = vperm.xlu0 %1478, %v322
      %v1480 = vpop.permute.xlu0 %1479
      %1482 = vset.pattern.permute.xlu0 3
      %1483 = vperm.xlu0 %1482, %v323
      %v1484 = vpop.permute.xlu0 %1483
      %1486 = vset.pattern.permute.xlu0 3
      %1487 = vperm.xlu0 %1486, %v324
      %v1488 = vpop.permute.xlu0 %1487
      %1490 = vset.pattern.permute.xlu0 3
      %1491 = vperm.xlu0 %1490, %v325
      %v1492 = vpop.permute.xlu0 %1491
      %1494 = vset.pattern.permute.xlu0 3
      %1495 = vperm.xlu0 %1494, %v326
      %v1496 = vpop.permute.xlu0 %1495
      %1498 = vset.pattern.permute.xlu0 3
      %1499 = vperm.xlu0 %1498, %v327
      %v1500 = vpop.permute.xlu0 %1499
      %1502 = vset.pattern.permute.xlu0 3
      %1503 = vperm.xlu0 %1502, %v328
      %v1504 = vpop.permute.xlu0 %1503
      %1506 = vset.pattern.permute.xlu0 3
      %1507 = vperm.xlu0 %1506, %v329
      %v1508 = vpop.permute.xlu0 %1507
      %1510 = vset.pattern.permute.xlu0 3
      %1511 = vperm.xlu0 %1510, %v330
      %v1512 = vpop.permute.xlu0 %1511
      %1514 = vset.pattern.permute.xlu0 3
      %1515 = vperm.xlu0 %1514, %v331
      %v1516 = vpop.permute.xlu0 %1515
      %1518 = vset.pattern.permute.xlu0 3
      %1519 = vperm.xlu0 %1518, %v332
      %v1520 = vpop.permute.xlu0 %1519
      %1522 = vset.pattern.permute.xlu0 3
      %1523 = vperm.xlu0 %1522, %v333
      %v1524 = vpop.permute.xlu0 %1523
      %v1526 = vperm.slane %v334, 3
      %v1527 = vmul.f32 %v1312, %v1526
      %v1528 = vmul.f32 %v1316, %v1526
      %v1529 = vmul.f32 %v1320, %v1526
      %v1530 = vmul.f32 %v1324, %v1526
      %v1531 = vmul.f32 %v1328, %v1526
      %v1532 = vmul.f32 %v1332, %v1526
      %v1533 = vmul.f32 %v1336, %v1526
      %v1534 = vmul.f32 %v1340, %v1526
      %v1535 = vmul.f32 %v1344, %v1526
      %v1536 = vmul.f32 %v1348, %v1526
      %v1537 = vmul.f32 %v1352, %v1526
      %v1538 = vmul.f32 %v1356, %v1526
      %v1539 = vmul.f32 %v1360, %v1526
      %v1540 = vmul.f32 %v1364, %v1526
      %v1541 = vmul.f32 %v1368, %v1526
      %v1542 = vmul.f32 %v1372, %v1526
      %v1543 = vmul.f32 %v1376, %v1526
      %v1544 = vmul.f32 %v1380, %v1526
      %v1545 = vmul.f32 %v1384, %v1526
      %v1546 = vmul.f32 %v1388, %v1526
      %v1547 = vmul.f32 %v1392, %v1526
      %v1548 = vmul.f32 %v1396, %v1526
      %v1549 = vmul.f32 %v1400, %v1526
      %v1550 = vmul.f32 %v1404, %v1526
      %v1551 = vmul.f32 %v1408, %v1526
      %v1552 = vmul.f32 %v1412, %v1526
      %v1553 = vmul.f32 %v1416, %v1526
      %v1554 = vmul.f32 %v1420, %v1526
      %v1555 = vmul.f32 %v1424, %v1526
      %v1556 = vmul.f32 %v1428, %v1526
      %v1557 = vmul.f32 %v1432, %v1526
      %v1558 = vmul.f32 %v1436, %v1526
      %v1559 = vmul.f32 %v1440, %v1526
      %v1560 = vmul.f32 %v1444, %v1526
      %v1561 = vmul.f32 %v1448, %v1526
      %v1562 = vmul.f32 %v1452, %v1526
      %v1563 = vmul.f32 %v1456, %v1526
      %v1564 = vmul.f32 %v1460, %v1526
      %v1565 = vmul.f32 %v1464, %v1526
      %v1566 = vmul.f32 %v1468, %v1526
      %v1567 = vmul.f32 %v1472, %v1526
      %v1568 = vmul.f32 %v1476, %v1526
      %v1569 = vmul.f32 %v1480, %v1526
      %v1570 = vmul.f32 %v1484, %v1526
      %v1571 = vmul.f32 %v1488, %v1526
      %v1572 = vmul.f32 %v1492, %v1526
      %v1573 = vmul.f32 %v1496, %v1526
      %v1574 = vmul.f32 %v1500, %v1526
      %v1575 = vmul.f32 %v1504, %v1526
      %v1576 = vmul.f32 %v1508, %v1526
      %v1577 = vmul.f32 %v1512, %v1526
      %v1578 = vmul.f32 %v1516, %v1526
      %v1579 = vmul.f32 %v1520, %v1526
      %v1580 = vmul.f32 %v1524, %v1526
      %v1581 = vadd.f32 %v1256, %v1527
      %v1582 = vadd.f32 %v1257, %v1528
      %v1583 = vadd.f32 %v1258, %v1529
      %v1584 = vadd.f32 %v1259, %v1530
      %v1585 = vadd.f32 %v1260, %v1531
      %v1586 = vadd.f32 %v1261, %v1532
      %v1587 = vadd.f32 %v1262, %v1533
      %v1588 = vadd.f32 %v1263, %v1534
      %v1589 = vadd.f32 %v1264, %v1535
      %v1590 = vadd.f32 %v1265, %v1536
      %v1591 = vadd.f32 %v1266, %v1537
      %v1592 = vadd.f32 %v1267, %v1538
      %v1593 = vadd.f32 %v1268, %v1539
      %v1594 = vadd.f32 %v1269, %v1540
      %v1595 = vadd.f32 %v1270, %v1541
      %v1596 = vadd.f32 %v1271, %v1542
      %v1597 = vadd.f32 %v1272, %v1543
      %v1598 = vadd.f32 %v1273, %v1544
      %v1599 = vadd.f32 %v1274, %v1545
      %v1600 = vadd.f32 %v1275, %v1546
      %v1601 = vadd.f32 %v1276, %v1547
      %v1602 = vadd.f32 %v1277, %v1548
      %v1603 = vadd.f32 %v1278, %v1549
      %v1604 = vadd.f32 %v1279, %v1550
      %v1605 = vadd.f32 %v1280, %v1551
      %v1606 = vadd.f32 %v1281, %v1552
      %v1607 = vadd.f32 %v1282, %v1553
      %v1608 = vadd.f32 %v1283, %v1554
      %v1609 = vadd.f32 %v1284, %v1555
      %v1610 = vadd.f32 %v1285, %v1556
      %v1611 = vadd.f32 %v1286, %v1557
      %v1612 = vadd.f32 %v1287, %v1558
      %v1613 = vadd.f32 %v1288, %v1559
      %v1614 = vadd.f32 %v1289, %v1560
      %v1615 = vadd.f32 %v1290, %v1561
      %v1616 = vadd.f32 %v1291, %v1562
      %v1617 = vadd.f32 %v1292, %v1563
      %v1618 = vadd.f32 %v1293, %v1564
      %v1619 = vadd.f32 %v1294, %v1565
      %v1620 = vadd.f32 %v1295, %v1566
      %v1621 = vadd.f32 %v1296, %v1567
      %v1622 = vadd.f32 %v1297, %v1568
      %v1623 = vadd.f32 %v1298, %v1569
      %v1624 = vadd.f32 %v1299, %v1570
      %v1625 = vadd.f32 %v1300, %v1571
      %v1626 = vadd.f32 %v1301, %v1572
      %v1627 = vadd.f32 %v1302, %v1573
      %v1628 = vadd.f32 %v1303, %v1574
      %v1629 = vadd.f32 %v1304, %v1575
      %v1630 = vadd.f32 %v1305, %v1576
      %v1631 = vadd.f32 %v1306, %v1577
      %v1632 = vadd.f32 %v1307, %v1578
      %v1633 = vadd.f32 %v1308, %v1579
      %v1634 = vadd.f32 %v1309, %v1580
      %v1635 = vld [vmem:[%s4] sm:$0x1]
      %v1636 = vperm.slane %v1635, 0
      %v1637 = vadd.f32 %v1581, %v1636
      %v1638 = vadd.f32 %v1582, %v1636
      %v1639 = vadd.f32 %v1583, %v1636
      %v1640 = vadd.f32 %v1584, %v1636
      %v1641 = vadd.f32 %v1585, %v1636
      %v1642 = vadd.f32 %v1586, %v1636
      %v1643 = vadd.f32 %v1587, %v1636
      %v1644 = vadd.f32 %v1588, %v1636
      %v1645 = vadd.f32 %v1589, %v1636
      %v1646 = vadd.f32 %v1590, %v1636
      %v1647 = vadd.f32 %v1591, %v1636
      %v1648 = vadd.f32 %v1592, %v1636
      %v1649 = vadd.f32 %v1593, %v1636
      %v1650 = vadd.f32 %v1594, %v1636
      %v1651 = vadd.f32 %v1595, %v1636
      %v1652 = vadd.f32 %v1596, %v1636
      %v1653 = vadd.f32 %v1597, %v1636
      %v1654 = vadd.f32 %v1598, %v1636
      %v1655 = vadd.f32 %v1599, %v1636
      %v1656 = vadd.f32 %v1600, %v1636
      %v1657 = vadd.f32 %v1601, %v1636
      %v1658 = vadd.f32 %v1602, %v1636
      %v1659 = vadd.f32 %v1603, %v1636
      %v1660 = vadd.f32 %v1604, %v1636
      %v1661 = vadd.f32 %v1605, %v1636
      %v1662 = vadd.f32 %v1606, %v1636
      %v1663 = vadd.f32 %v1607, %v1636
      %v1664 = vadd.f32 %v1608, %v1636
      %v1665 = vadd.f32 %v1609, %v1636
      %v1666 = vadd.f32 %v1610, %v1636
      %v1667 = vadd.f32 %v1611, %v1636
      %v1668 = vadd.f32 %v1612, %v1636
      %v1669 = vadd.f32 %v1613, %v1636
      %v1670 = vadd.f32 %v1614, %v1636
      %v1671 = vadd.f32 %v1615, %v1636
      %v1672 = vadd.f32 %v1616, %v1636
      %v1673 = vadd.f32 %v1617, %v1636
      %v1674 = vadd.f32 %v1618, %v1636
      %v1675 = vadd.f32 %v1619, %v1636
      %v1676 = vadd.f32 %v1620, %v1636
      %v1677 = vadd.f32 %v1621, %v1636
      %v1678 = vadd.f32 %v1622, %v1636
      %v1679 = vadd.f32 %v1623, %v1636
      %v1680 = vadd.f32 %v1624, %v1636
      %v1681 = vadd.f32 %v1625, %v1636
      %v1682 = vadd.f32 %v1626, %v1636
      %v1683 = vadd.f32 %v1627, %v1636
      %v1684 = vadd.f32 %v1628, %v1636
      %v1685 = vadd.f32 %v1629, %v1636
      %v1686 = vadd.f32 %v1630, %v1636
      %v1687 = vadd.f32 %v1631, %v1636
      %v1688 = vadd.f32 %v1632, %v1636
      %v1689 = vadd.f32 %v1633, %v1636
      %v1690 = vadd.f32 %v1634, %v1636
      %vm1691 = vcmp.ge.f32.partialorder %v1637, 0.0
      %vm1692 = vcmp.ge.f32.partialorder %v1638, 0.0
      %vm1693 = vcmp.ge.f32.partialorder %v1639, 0.0
      %vm1694 = vcmp.ge.f32.partialorder %v1640, 0.0
      %vm1695 = vcmp.ge.f32.partialorder %v1641, 0.0
      %vm1696 = vcmp.ge.f32.partialorder %v1642, 0.0
      %vm1697 = vcmp.ge.f32.partialorder %v1643, 0.0
      %vm1698 = vcmp.ge.f32.partialorder %v1644, 0.0
      %vm1699 = vcmp.ge.f32.partialorder %v1645, 0.0
      %vm1700 = vcmp.ge.f32.partialorder %v1646, 0.0
      %vm1701 = vcmp.ge.f32.partialorder %v1647, 0.0
      %vm1702 = vcmp.ge.f32.partialorder %v1648, 0.0
      %vm1703 = vcmp.ge.f32.partialorder %v1649, 0.0
      %vm1704 = vcmp.ge.f32.partialorder %v1650, 0.0
      %vm1705 = vcmp.ge.f32.partialorder %v1651, 0.0
      %vm1706 = vcmp.ge.f32.partialorder %v1652, 0.0
      %vm1707 = vcmp.ge.f32.partialorder %v1653, 0.0
      %vm1708 = vcmp.ge.f32.partialorder %v1654, 0.0
      %vm1709 = vcmp.ge.f32.partialorder %v1655, 0.0
      %vm1710 = vcmp.ge.f32.partialorder %v1656, 0.0
      %vm1711 = vcmp.ge.f32.partialorder %v1657, 0.0
      %vm1712 = vcmp.ge.f32.partialorder %v1658, 0.0
      %vm1713 = vcmp.ge.f32.partialorder %v1659, 0.0
      %vm1714 = vcmp.ge.f32.partialorder %v1660, 0.0
      %vm1715 = vcmp.ge.f32.partialorder %v1661, 0.0
      %vm1716 = vcmp.ge.f32.partialorder %v1662, 0.0
      %vm1717 = vcmp.ge.f32.partialorder %v1663, 0.0
      %vm1718 = vcmp.ge.f32.partialorder %v1664, 0.0
      %vm1719 = vcmp.ge.f32.partialorder %v1665, 0.0
      %vm1720 = vcmp.ge.f32.partialorder %v1666, 0.0
      %vm1721 = vcmp.ge.f32.partialorder %v1667, 0.0
      %vm1722 = vcmp.ge.f32.partialorder %v1668, 0.0
      %vm1723 = vcmp.ge.f32.partialorder %v1669, 0.0
      %vm1724 = vcmp.ge.f32.partialorder %v1670, 0.0
      %vm1725 = vcmp.ge.f32.partialorder %v1671, 0.0
      %vm1726 = vcmp.ge.f32.partialorder %v1672, 0.0
      %vm1727 = vcmp.ge.f32.partialorder %v1673, 0.0
      %vm1728 = vcmp.ge.f32.partialorder %v1674, 0.0
      %vm1729 = vcmp.ge.f32.partialorder %v1675, 0.0
      %vm1730 = vcmp.ge.f32.partialorder %v1676, 0.0
      %vm1731 = vcmp.ge.f32.partialorder %v1677, 0.0
      %vm1732 = vcmp.ge.f32.partialorder %v1678, 0.0
      %vm1733 = vcmp.ge.f32.partialorder %v1679, 0.0
      %vm1734 = vcmp.ge.f32.partialorder %v1680, 0.0
      %vm1735 = vcmp.ge.f32.partialorder %v1681, 0.0
      %vm1736 = vcmp.ge.f32.partialorder %v1682, 0.0
      %vm1737 = vcmp.ge.f32.partialorder %v1683, 0.0
      %vm1738 = vcmp.ge.f32.partialorder %v1684, 0.0
      %vm1739 = vcmp.ge.f32.partialorder %v1685, 0.0
      %vm1740 = vcmp.ge.f32.partialorder %v1686, 0.0
      %vm1741 = vcmp.ge.f32.partialorder %v1687, 0.0
      %vm1742 = vcmp.ge.f32.partialorder %v1688, 0.0
      %vm1743 = vcmp.ge.f32.partialorder %v1689, 0.0
      %vm1744 = vcmp.ge.f32.partialorder %v1690, 0.0
      %v1745 = vld [vmem:[%s4 + $0x1] sm:$0x1]
      %v1746 = vperm.slane %v1745, 0
      %v1747 = vmul.f32 %v1746, %v1637
      %v1748 = vmul.f32 %v1746, %v1638
      %v1749 = vmul.f32 %v1746, %v1639
      %v1750 = vmul.f32 %v1746, %v1640
      %v1751 = vmul.f32 %v1746, %v1641
      %v1752 = vmul.f32 %v1746, %v1642
      %v1753 = vmul.f32 %v1746, %v1643
      %v1754 = vmul.f32 %v1746, %v1644
      %v1755 = vmul.f32 %v1746, %v1645
      %v1756 = vmul.f32 %v1746, %v1646
      %v1757 = vmul.f32 %v1746, %v1647
      %v1758 = vmul.f32 %v1746, %v1648
      %v1759 = vmul.f32 %v1746, %v1649
      %v1760 = vmul.f32 %v1746, %v1650
      %v1761 = vmul.f32 %v1746, %v1651
      %v1762 = vmul.f32 %v1746, %v1652
      %v1763 = vmul.f32 %v1746, %v1653
      %v1764 = vmul.f32 %v1746, %v1654
      %v1765 = vmul.f32 %v1746, %v1655
      %v1766 = vmul.f32 %v1746, %v1656
      %v1767 = vmul.f32 %v1746, %v1657
      %v1768 = vmul.f32 %v1746, %v1658
      %v1769 = vmul.f32 %v1746, %v1659
      %v1770 = vmul.f32 %v1746, %v1660
      %v1771 = vmul.f32 %v1746, %v1661
      %v1772 = vmul.f32 %v1746, %v1662
      %v1773 = vmul.f32 %v1746, %v1663
      %v1774 = vmul.f32 %v1746, %v1664
      %v1775 = vmul.f32 %v1746, %v1665
      %v1776 = vmul.f32 %v1746, %v1666
      %v1777 = vmul.f32 %v1746, %v1667
      %v1778 = vmul.f32 %v1746, %v1668
      %v1779 = vmul.f32 %v1746, %v1669
      %v1780 = vmul.f32 %v1746, %v1670
      %v1781 = vmul.f32 %v1746, %v1671
      %v1782 = vmul.f32 %v1746, %v1672
      %v1783 = vmul.f32 %v1746, %v1673
      %v1784 = vmul.f32 %v1746, %v1674
      %v1785 = vmul.f32 %v1746, %v1675
      %v1786 = vmul.f32 %v1746, %v1676
      %v1787 = vmul.f32 %v1746, %v1677
      %v1788 = vmul.f32 %v1746, %v1678
      %v1789 = vmul.f32 %v1746, %v1679
      %v1790 = vmul.f32 %v1746, %v1680
      %v1791 = vmul.f32 %v1746, %v1681
      %v1792 = vmul.f32 %v1746, %v1682
      %v1793 = vmul.f32 %v1746, %v1683
      %v1794 = vmul.f32 %v1746, %v1684
      %v1795 = vmul.f32 %v1746, %v1685
      %v1796 = vmul.f32 %v1746, %v1686
      %v1797 = vmul.f32 %v1746, %v1687
      %v1798 = vmul.f32 %v1746, %v1688
      %v1799 = vmul.f32 %v1746, %v1689
      %v1800 = vmul.f32 %v1746, %v1690
      %v1801 = vsel %vm1691, %v1637, %v1747
      %v1802 = vsel %vm1692, %v1638, %v1748
      %v1803 = vsel %vm1693, %v1639, %v1749
      %v1804 = vsel %vm1694, %v1640, %v1750
      %v1805 = vsel %vm1695, %v1641, %v1751
      %v1806 = vsel %vm1696, %v1642, %v1752
      %v1807 = vsel %vm1697, %v1643, %v1753
      %v1808 = vsel %vm1698, %v1644, %v1754
      %v1809 = vsel %vm1699, %v1645, %v1755
      %v1810 = vsel %vm1700, %v1646, %v1756
      %v1811 = vsel %vm1701, %v1647, %v1757
      %v1812 = vsel %vm1702, %v1648, %v1758
      %v1813 = vsel %vm1703, %v1649, %v1759
      %v1814 = vsel %vm1704, %v1650, %v1760
      %v1815 = vsel %vm1705, %v1651, %v1761
      %v1816 = vsel %vm1706, %v1652, %v1762
      %v1817 = vsel %vm1707, %v1653, %v1763
      %v1818 = vsel %vm1708, %v1654, %v1764
      %v1819 = vsel %vm1709, %v1655, %v1765
      %v1820 = vsel %vm1710, %v1656, %v1766
      %v1821 = vsel %vm1711, %v1657, %v1767
      %v1822 = vsel %vm1712, %v1658, %v1768
      %v1823 = vsel %vm1713, %v1659, %v1769
      %v1824 = vsel %vm1714, %v1660, %v1770
      %v1825 = vsel %vm1715, %v1661, %v1771
      %v1826 = vsel %vm1716, %v1662, %v1772
      %v1827 = vsel %vm1717, %v1663, %v1773
      %v1828 = vsel %vm1718, %v1664, %v1774
      %v1829 = vsel %vm1719, %v1665, %v1775
      %v1830 = vsel %vm1720, %v1666, %v1776
      %v1831 = vsel %vm1721, %v1667, %v1777
      %v1832 = vsel %vm1722, %v1668, %v1778
      %v1833 = vsel %vm1723, %v1669, %v1779
      %v1834 = vsel %vm1724, %v1670, %v1780
      %v1835 = vsel %vm1725, %v1671, %v1781
      %v1836 = vsel %vm1726, %v1672, %v1782
      %v1837 = vsel %vm1727, %v1673, %v1783
      %v1838 = vsel %vm1728, %v1674, %v1784
      %v1839 = vsel %vm1729, %v1675, %v1785
      %v1840 = vsel %vm1730, %v1676, %v1786
      %v1841 = vsel %vm1731, %v1677, %v1787
      %v1842 = vsel %vm1732, %v1678, %v1788
      %v1843 = vsel %vm1733, %v1679, %v1789
      %v1844 = vsel %vm1734, %v1680, %v1790
      %v1845 = vsel %vm1735, %v1681, %v1791
      %v1846 = vsel %vm1736, %v1682, %v1792
      %v1847 = vsel %vm1737, %v1683, %v1793
      %v1848 = vsel %vm1738, %v1684, %v1794
      %v1849 = vsel %vm1739, %v1685, %v1795
      %v1850 = vsel %vm1740, %v1686, %v1796
      %v1851 = vsel %vm1741, %v1687, %v1797
      %v1852 = vsel %vm1742, %v1688, %v1798
      %v1853 = vsel %vm1743, %v1689, %v1799
      %v1854 = vsel %vm1744, %v1690, %v1800
      %vm1855 = vcmask 195584
      %1856 = vst.msk [vmem:[#allocation2] sm:$0xff] %vm1855, %v1801
      %1857 = vst.msk [vmem:[#allocation2 + $0x8] sm:$0xff] %vm1855, %v1802
      %vm1858 = vcmask 189440
      %1859 = vst.msk [vmem:[#allocation2 + $0x10] sm:$0x3] %vm1858, %v1803
      %1860 = vst.msk [vmem:[#allocation2 + $0x18] sm:$0xff] %vm1855, %v1804
      %1861 = vst.msk [vmem:[#allocation2 + $0x20] sm:$0xff] %vm1855, %v1805
      %1862 = vst.msk [vmem:[#allocation2 + $0x28] sm:$0x3] %vm1858, %v1806
      %1863 = vst.msk [vmem:[#allocation2 + $0x30] sm:$0xff] %vm1855, %v1807
      %1864 = vst.msk [vmem:[#allocation2 + $0x38] sm:$0xff] %vm1855, %v1808
      %1865 = vst.msk [vmem:[#allocation2 + $0x40] sm:$0x3] %vm1858, %v1809
      %1866 = vst.msk [vmem:[#allocation2 + $0x48] sm:$0xff] %vm1855, %v1810
      %1867 = vst.msk [vmem:[#allocation2 + $0x50] sm:$0xff] %vm1855, %v1811
      %1868 = vst.msk [vmem:[#allocation2 + $0x58] sm:$0x3] %vm1858, %v1812
      %1869 = vst.msk [vmem:[#allocation2 + $0x60] sm:$0xff] %vm1855, %v1813
      %1870 = vst.msk [vmem:[#allocation2 + $0x68] sm:$0xff] %vm1855, %v1814
      %1871 = vst.msk [vmem:[#allocation2 + $0x70] sm:$0x3] %vm1858, %v1815
      %1872 = vst.msk [vmem:[#allocation2 + $0x78] sm:$0xff] %vm1855, %v1816
      %1873 = vst.msk [vmem:[#allocation2 + $0x80] sm:$0xff] %vm1855, %v1817
      %1874 = vst.msk [vmem:[#allocation2 + $0x88] sm:$0x3] %vm1858, %v1818
      %1875 = vst.msk [vmem:[#allocation2 + $0x90] sm:$0xff] %vm1855, %v1819
      %1876 = vst.msk [vmem:[#allocation2 + $0x98] sm:$0xff] %vm1855, %v1820
      %1877 = vst.msk [vmem:[#allocation2 + $0xa0] sm:$0x3] %vm1858, %v1821
      %1878 = vst.msk [vmem:[#allocation2 + $0xa8] sm:$0xff] %vm1855, %v1822
      %1879 = vst.msk [vmem:[#allocation2 + $0xb0] sm:$0xff] %vm1855, %v1823
      %1880 = vst.msk [vmem:[#allocation2 + $0xb8] sm:$0x3] %vm1858, %v1824
      %1881 = vst.msk [vmem:[#allocation2 + $0xc0] sm:$0xff] %vm1855, %v1825
      %1882 = vst.msk [vmem:[#allocation2 + $0xc8] sm:$0xff] %vm1855, %v1826
      %1883 = vst.msk [vmem:[#allocation2 + $0xd0] sm:$0x3] %vm1858, %v1827
      %1884 = vst.msk [vmem:[#allocation2 + $0xd8] sm:$0xff] %vm1855, %v1828
      %1885 = vst.msk [vmem:[#allocation2 + $0xe0] sm:$0xff] %vm1855, %v1829
      %1886 = vst.msk [vmem:[#allocation2 + $0xe8] sm:$0x3] %vm1858, %v1830
      %1887 = vst.msk [vmem:[#allocation2 + $0xf0] sm:$0xff] %vm1855, %v1831
      %1888 = vst.msk [vmem:[#allocation2 + $0xf8] sm:$0xff] %vm1855, %v1832
      %1889 = vst.msk [vmem:[#allocation2 + $0x100] sm:$0x3] %vm1858, %v1833
      %1890 = vst.msk [vmem:[#allocation2 + $0x108] sm:$0xff] %vm1855, %v1834
      %1891 = vst.msk [vmem:[#allocation2 + $0x110] sm:$0xff] %vm1855, %v1835
      %1892 = vst.msk [vmem:[#allocation2 + $0x118] sm:$0x3] %vm1858, %v1836
      %1893 = vst.msk [vmem:[#allocation2 + $0x120] sm:$0xff] %vm1855, %v1837
      %1894 = vst.msk [vmem:[#allocation2 + $0x128] sm:$0xff] %vm1855, %v1838
      %1895 = vst.msk [vmem:[#allocation2 + $0x130] sm:$0x3] %vm1858, %v1839
      %1896 = vst.msk [vmem:[#allocation2 + $0x138] sm:$0xff] %vm1855, %v1840
      %1897 = vst.msk [vmem:[#allocation2 + $0x140] sm:$0xff] %vm1855, %v1841
      %1898 = vst.msk [vmem:[#allocation2 + $0x148] sm:$0x3] %vm1858, %v1842
      %1899 = vst.msk [vmem:[#allocation2 + $0x150] sm:$0xff] %vm1855, %v1843
      %1900 = vst.msk [vmem:[#allocation2 + $0x158] sm:$0xff] %vm1855, %v1844
      %1901 = vst.msk [vmem:[#allocation2 + $0x160] sm:$0x3] %vm1858, %v1845
      %1902 = vst.msk [vmem:[#allocation2 + $0x168] sm:$0xff] %vm1855, %v1846
      %1903 = vst.msk [vmem:[#allocation2 + $0x170] sm:$0xff] %vm1855, %v1847
      %1904 = vst.msk [vmem:[#allocation2 + $0x178] sm:$0x3] %vm1858, %v1848
      %1905 = vst.msk [vmem:[#allocation2 + $0x180] sm:$0xff] %vm1855, %v1849
      %1906 = vst.msk [vmem:[#allocation2 + $0x188] sm:$0xff] %vm1855, %v1850
      %1907 = vst.msk [vmem:[#allocation2 + $0x190] sm:$0x3] %vm1858, %v1851
      %1908 = vst.msk [vmem:[#allocation2 + $0x198] sm:$0xff] %vm1855, %v1852
      %1909 = vst.msk [vmem:[#allocation2 + $0x1a0] sm:$0xff] %vm1855, %v1853
      %1910 = vst.msk [vmem:[#allocation2 + $0x1a8] sm:$0x3] %vm1858, %v1854
      %vm1911 = vcmask 188416
      %1912 = vst.msk [vmem:[#allocation2] sm:$0x1] %vm1911, 0.0
      %1913 = vst.msk [vmem:[#allocation2 + $0x18] sm:$0x1] %vm1911, 0.0
      %1914 = vst.msk [vmem:[#allocation2 + $0x30] sm:$0x1] %vm1911, 0.0
      %1915 = vst.msk [vmem:[#allocation2 + $0x48] sm:$0x1] %vm1911, 0.0
      %1916 = vst.msk [vmem:[#allocation2 + $0x60] sm:$0x1] %vm1911, 0.0
      %1917 = vst.msk [vmem:[#allocation2 + $0x78] sm:$0x1] %vm1911, 0.0
      %1918 = vst.msk [vmem:[#allocation2 + $0x90] sm:$0x1] %vm1911, 0.0
      %1919 = vst.msk [vmem:[#allocation2 + $0xa8] sm:$0x1] %vm1911, 0.0
      %1920 = vst.msk [vmem:[#allocation2 + $0xc0] sm:$0x1] %vm1911, 0.0
      %1921 = vst.msk [vmem:[#allocation2 + $0xd8] sm:$0x1] %vm1911, 0.0
      %1922 = vst.msk [vmem:[#allocation2 + $0xf0] sm:$0x1] %vm1911, 0.0
      %1923 = vst.msk [vmem:[#allocation2 + $0x108] sm:$0x1] %vm1911, 0.0
      %1924 = vst.msk [vmem:[#allocation2 + $0x120] sm:$0x1] %vm1911, 0.0
      %1925 = vst.msk [vmem:[#allocation2 + $0x138] sm:$0x1] %vm1911, 0.0
      %1926 = vst.msk [vmem:[#allocation2 + $0x150] sm:$0x1] %vm1911, 0.0
      %1927 = vst.msk [vmem:[#allocation2 + $0x168] sm:$0x1] %vm1911, 0.0
      %1928 = vst.msk [vmem:[#allocation2 + $0x180] sm:$0x1] %vm1911, 0.0
      %1929 = vst.msk [vmem:[#allocation2 + $0x198] sm:$0x1] %vm1911, 0.0
      %1930 = vst.msk [vmem:[#allocation2 + $0x11] sm:$0x1] %vm1911, 0.0
      %1931 = vst.msk [vmem:[#allocation2 + $0x29] sm:$0x1] %vm1911, 0.0
      %1932 = vst.msk [vmem:[#allocation2 + $0x41] sm:$0x1] %vm1911, 0.0
      %1933 = vst.msk [vmem:[#allocation2 + $0x59] sm:$0x1] %vm1911, 0.0
      %1934 = vst.msk [vmem:[#allocation2 + $0x71] sm:$0x1] %vm1911, 0.0
      %1935 = vst.msk [vmem:[#allocation2 + $0x89] sm:$0x1] %vm1911, 0.0
      %1936 = vst.msk [vmem:[#allocation2 + $0xa1] sm:$0x1] %vm1911, 0.0
      %1937 = vst.msk [vmem:[#allocation2 + $0xb9] sm:$0x1] %vm1911, 0.0
      %1938 = vst.msk [vmem:[#allocation2 + $0xd1] sm:$0x1] %vm1911, 0.0
      %1939 = vst.msk [vmem:[#allocation2 + $0xe9] sm:$0x1] %vm1911, 0.0
      %1940 = vst.msk [vmem:[#allocation2 + $0x101] sm:$0x1] %vm1911, 0.0
      %1941 = vst.msk [vmem:[#allocation2 + $0x119] sm:$0x1] %vm1911, 0.0
      %1942 = vst.msk [vmem:[#allocation2 + $0x131] sm:$0x1] %vm1911, 0.0
      %1943 = vst.msk [vmem:[#allocation2 + $0x149] sm:$0x1] %vm1911, 0.0
      %1944 = vst.msk [vmem:[#allocation2 + $0x161] sm:$0x1] %vm1911, 0.0
      %1945 = vst.msk [vmem:[#allocation2 + $0x179] sm:$0x1] %vm1911, 0.0
      %1946 = vst.msk [vmem:[#allocation2 + $0x191] sm:$0x1] %vm1911, 0.0
      %1947 = vst.msk [vmem:[#allocation2 + $0x1a9] sm:$0x1] %vm1911, 0.0
      %p1948 = scmp.eq.s32.totalorder %s22, 0
      // Predicated region
      $region45: #{invres_forward.1} parent=43 // pred_check
        %p1949 = pneg %p1948
      $region46: #{invres_forward.1} parent=43 // pred_check_branch
        %1951 = sbr.rel (%p1949) target = $region48
      $region47: #{invres_forward.1} parent=43 // pred_region
        %1952 = vst.msk [vmem:[#allocation2] sm:$0xff] %vm1855, 0.0
        %1953 = vst.msk [vmem:[#allocation2 + $0x8] sm:$0xff] %vm1855, 0.0
        %1954 = vst.msk [vmem:[#allocation2 + $0x10] sm:$0x3] %vm1858, 0.0
        %s1955 = scalar_lea.vmem [#allocation2], 408
        %1956 = vst.msk [vmem:[%s1955] sm:$0xff] %vm1855, 0.0
        %1957 = vst.msk [vmem:[%s1955 + $0x8] sm:$0xff] %vm1855, 0.0
        %1958 = vst.msk [vmem:[%s1955 + $0x10] sm:$0x3] %vm1858, 0.0
      $region48: #{invres_forward.1} parent=43 // pred_fallthru
        _
      %v1959 = vld [vmem:[%s2] sm:$0xff]
      %v1960 = vld [vmem:[%s2 + $0x8] sm:$0x1]
      %v1961 = vld [vmem:[#allocation2] sm:$0xff]
      %v1962 = vld [vmem:[#allocation2 + $0x8] sm:$0xff]
      %v1963 = vld [vmem:[#allocation2 + $0x10] sm:$0x3]
      %v1964 = vld [vmem:[#allocation2 + $0x18] sm:$0xff]
      %v1965 = vld [vmem:[#allocation2 + $0x20] sm:$0xff]
      %v1966 = vld [vmem:[#allocation2 + $0x28] sm:$0x3]
      %v1967 = vld [vmem:[#allocation2 + $0x30] sm:$0xff]
      %v1968 = vld [vmem:[#allocation2 + $0x38] sm:$0xff]
      %v1969 = vld [vmem:[#allocation2 + $0x40] sm:$0x3]
      %v1970 = vld [vmem:[#allocation2 + $0x48] sm:$0xff]
      %v1971 = vld [vmem:[#allocation2 + $0x50] sm:$0xff]
      %v1972 = vld [vmem:[#allocation2 + $0x58] sm:$0x3]
      %v1973 = vld [vmem:[#allocation2 + $0x60] sm:$0xff]
      %v1974 = vld [vmem:[#allocation2 + $0x68] sm:$0xff]
      %v1975 = vld [vmem:[#allocation2 + $0x70] sm:$0x3]
      %v1976 = vld [vmem:[#allocation2 + $0x78] sm:$0xff]
      %v1977 = vld [vmem:[#allocation2 + $0x80] sm:$0xff]
      %v1978 = vld [vmem:[#allocation2 + $0x88] sm:$0x3]
      %v1979 = vld [vmem:[#allocation2 + $0x90] sm:$0xff]
      %v1980 = vld [vmem:[#allocation2 + $0x98] sm:$0xff]
      %v1981 = vld [vmem:[#allocation2 + $0xa0] sm:$0x3]
      %v1982 = vld [vmem:[#allocation2 + $0xa8] sm:$0xff]
      %v1983 = vld [vmem:[#allocation2 + $0xb0] sm:$0xff]
      %v1984 = vld [vmem:[#allocation2 + $0xb8] sm:$0x3]
      %v1985 = vld [vmem:[#allocation2 + $0xc0] sm:$0xff]
      %v1986 = vld [vmem:[#allocation2 + $0xc8] sm:$0xff]
      %v1987 = vld [vmem:[#allocation2 + $0xd0] sm:$0x3]
      %v1988 = vld [vmem:[#allocation2 + $0xd8] sm:$0xff]
      %v1989 = vld [vmem:[#allocation2 + $0xe0] sm:$0xff]
      %v1990 = vld [vmem:[#allocation2 + $0xe8] sm:$0x3]
      %v1991 = vld [vmem:[#allocation2 + $0xf0] sm:$0xff]
      %v1992 = vld [vmem:[#allocation2 + $0xf8] sm:$0xff]
      %v1993 = vld [vmem:[#allocation2 + $0x100] sm:$0x3]
      %v1994 = vld [vmem:[#allocation2 + $0x108] sm:$0xff]
      %v1995 = vld [vmem:[#allocation2 + $0x110] sm:$0xff]
      %v1996 = vld [vmem:[#allocation2 + $0x118] sm:$0x3]
      %v1997 = vld [vmem:[#allocation2 + $0x120] sm:$0xff]
      %v1998 = vld [vmem:[#allocation2 + $0x128] sm:$0xff]
      %v1999 = vld [vmem:[#allocation2 + $0x130] sm:$0x3]
      %v2000 = vld [vmem:[#allocation2 + $0x138] sm:$0xff]
      %v2001 = vld [vmem:[#allocation2 + $0x140] sm:$0xff]
      %v2002 = vld [vmem:[#allocation2 + $0x148] sm:$0x3]
      %v2003 = vld [vmem:[#allocation2 + $0x150] sm:$0xff]
      %v2004 = vld [vmem:[#allocation2 + $0x158] sm:$0xff]
      %v2005 = vld [vmem:[#allocation2 + $0x160] sm:$0x3]
      %v2006 = vld [vmem:[#allocation2 + $0x168] sm:$0xff]
      %v2007 = vld [vmem:[#allocation2 + $0x170] sm:$0xff]
      %v2008 = vld [vmem:[#allocation2 + $0x178] sm:$0x3]
      %v2009 = vperm.slane %v1959, 0
      %v2010 = vmul.f32 %v1961, %v2009
      %v2011 = vmul.f32 %v1962, %v2009
      %v2012 = vmul.f32 %v1964, %v2009
      %v2013 = vmul.f32 %v1965, %v2009
      %v2014 = vmul.f32 %v1967, %v2009
      %v2015 = vmul.f32 %v1968, %v2009
      %v2016 = vmul.f32 %v1970, %v2009
      %v2017 = vmul.f32 %v1971, %v2009
      %v2018 = vmul.f32 %v1973, %v2009
      %v2019 = vmul.f32 %v1974, %v2009
      %v2020 = vmul.f32 %v1976, %v2009
      %v2021 = vmul.f32 %v1977, %v2009
      %v2022 = vmul.f32 %v1979, %v2009
      %v2023 = vmul.f32 %v1980, %v2009
      %v2024 = vmul.f32 %v1982, %v2009
      %v2025 = vmul.f32 %v1983, %v2009
      %v2026 = vmul.f32 %v1985, %v2009
      %v2027 = vmul.f32 %v1986, %v2009
      %v2028 = vmul.f32 %v1988, %v2009
      %v2029 = vmul.f32 %v1989, %v2009
      %v2030 = vmul.f32 %v1991, %v2009
      %v2031 = vmul.f32 %v1992, %v2009
      %v2032 = vmul.f32 %v1994, %v2009
      %v2033 = vmul.f32 %v1995, %v2009
      %v2034 = vmul.f32 %v1997, %v2009
      %v2035 = vmul.f32 %v1998, %v2009
      %v2036 = vmul.f32 %v2000, %v2009
      %v2037 = vmul.f32 %v2001, %v2009
      %v2038 = vmul.f32 %v2003, %v2009
      %v2039 = vmul.f32 %v2004, %v2009
      %v2040 = vmul.f32 %v2006, %v2009
      %v2041 = vmul.f32 %v2007, %v2009
      %v2042 = vperm.slane %v1959, 1
      %v2043 = vmul.f32 %v1961, %v2042
      %v2044 = vmul.f32 %v1962, %v2042
      %v2045 = vmul.f32 %v1963, %v2042
      %v2046 = vmul.f32 %v1964, %v2042
      %v2047 = vmul.f32 %v1965, %v2042
      %v2048 = vmul.f32 %v1966, %v2042
      %v2049 = vmul.f32 %v1967, %v2042
      %v2050 = vmul.f32 %v1968, %v2042
      %v2051 = vmul.f32 %v1969, %v2042
      %v2052 = vmul.f32 %v1970, %v2042
      %v2053 = vmul.f32 %v1971, %v2042
      %v2054 = vmul.f32 %v1972, %v2042
      %v2055 = vmul.f32 %v1973, %v2042
      %v2056 = vmul.f32 %v1974, %v2042
      %v2057 = vmul.f32 %v1975, %v2042
      %v2058 = vmul.f32 %v1976, %v2042
      %v2059 = vmul.f32 %v1977, %v2042
      %v2060 = vmul.f32 %v1978, %v2042
      %v2061 = vmul.f32 %v1979, %v2042
      %v2062 = vmul.f32 %v1980, %v2042
      %v2063 = vmul.f32 %v1981, %v2042
      %v2064 = vmul.f32 %v1982, %v2042
      %v2065 = vmul.f32 %v1983, %v2042
      %v2066 = vmul.f32 %v1984, %v2042
      %v2067 = vmul.f32 %v1985, %v2042
      %v2068 = vmul.f32 %v1986, %v2042
      %v2069 = vmul.f32 %v1987, %v2042
      %v2070 = vmul.f32 %v1988, %v2042
      %v2071 = vmul.f32 %v1989, %v2042
      %v2072 = vmul.f32 %v1990, %v2042
      %v2073 = vmul.f32 %v1991, %v2042
      %v2074 = vmul.f32 %v1992, %v2042
      %v2075 = vmul.f32 %v1993, %v2042
      %v2076 = vmul.f32 %v1994, %v2042
      %v2077 = vmul.f32 %v1995, %v2042
      %v2078 = vmul.f32 %v1996, %v2042
      %v2079 = vmul.f32 %v1997, %v2042
      %v2080 = vmul.f32 %v1998, %v2042
      %v2081 = vmul.f32 %v1999, %v2042
      %v2082 = vmul.f32 %v2000, %v2042
      %v2083 = vmul.f32 %v2001, %v2042
      %v2084 = vmul.f32 %v2002, %v2042
      %v2085 = vmul.f32 %v2003, %v2042
      %v2086 = vmul.f32 %v2004, %v2042
      %v2087 = vmul.f32 %v2005, %v2042
      %v2088 = vmul.f32 %v2006, %v2042
      %v2089 = vmul.f32 %v2007, %v2042
      %v2090 = vmul.f32 %v2008, %v2042
      %vm2139 = vcmask 1046528
      %v2140 = vrot.slane %v2043, 1
      %v2141 = vrot.slane %v2044, 1
      %v2142 = vsel %vm2139, %v2140, %v2141
      %v2143 = vrot.slane %v2045, 1
      %v2144 = vsel %vm2139, %v2141, %v2143
      %v2145 = vrot.slane %v2046, 1
      %v2146 = vrot.slane %v2047, 1
      %v2147 = vsel %vm2139, %v2145, %v2146
      %v2148 = vrot.slane %v2048, 1
      %v2149 = vsel %vm2139, %v2146, %v2148
      %v2150 = vrot.slane %v2049, 1
      %v2151 = vrot.slane %v2050, 1
      %v2152 = vsel %vm2139, %v2150, %v2151
      %v2153 = vrot.slane %v2051, 1
      %v2154 = vsel %vm2139, %v2151, %v2153
      %v2155 = vrot.slane %v2052, 1
      %v2156 = vrot.slane %v2053, 1
      %v2157 = vsel %vm2139, %v2155, %v2156
      %v2158 = vrot.slane %v2054, 1
      %v2159 = vsel %vm2139, %v2156, %v2158
      %v2160 = vrot.slane %v2055, 1
      %v2161 = vrot.slane %v2056, 1
      %v2162 = vsel %vm2139, %v2160, %v2161
      %v2163 = vrot.slane %v2057, 1
      %v2164 = vsel %vm2139, %v2161, %v2163
      %v2165 = vrot.slane %v2058, 1
      %v2166 = vrot.slane %v2059, 1
      %v2167 = vsel %vm2139, %v2165, %v2166
      %v2168 = vrot.slane %v2060, 1
      %v2169 = vsel %vm2139, %v2166, %v2168
      %v2170 = vrot.slane %v2061, 1
      %v2171 = vrot.slane %v2062, 1
      %v2172 = vsel %vm2139, %v2170, %v2171
      %v2173 = vrot.slane %v2063, 1
      %v2174 = vsel %vm2139, %v2171, %v2173
      %v2175 = vrot.slane %v2064, 1
      %v2176 = vrot.slane %v2065, 1
      %v2177 = vsel %vm2139, %v2175, %v2176
      %v2178 = vrot.slane %v2066, 1
      %v2179 = vsel %vm2139, %v2176, %v2178
      %v2180 = vrot.slane %v2067, 1
      %v2181 = vrot.slane %v2068, 1
      %v2182 = vsel %vm2139, %v2180, %v2181
      %v2183 = vrot.slane %v2069, 1
      %v2184 = vsel %vm2139, %v2181, %v2183
      %v2185 = vrot.slane %v2070, 1
      %v2186 = vrot.slane %v2071, 1
      %v2187 = vsel %vm2139, %v2185, %v2186
      %v2188 = vrot.slane %v2072, 1
      %v2189 = vsel %vm2139, %v2186, %v2188
      %v2190 = vrot.slane %v2073, 1
      %v2191 = vrot.slane %v2074, 1
      %v2192 = vsel %vm2139, %v2190, %v2191
      %v2193 = vrot.slane %v2075, 1
      %v2194 = vsel %vm2139, %v2191, %v2193
      %v2195 = vrot.slane %v2076, 1
      %v2196 = vrot.slane %v2077, 1
      %v2197 = vsel %vm2139, %v2195, %v2196
      %v2198 = vrot.slane %v2078, 1
      %v2199 = vsel %vm2139, %v2196, %v2198
      %v2200 = vrot.slane %v2079, 1
      %v2201 = vrot.slane %v2080, 1
      %v2202 = vsel %vm2139, %v2200, %v2201
      %v2203 = vrot.slane %v2081, 1
      %v2204 = vsel %vm2139, %v2201, %v2203
      %v2205 = vrot.slane %v2082, 1
      %v2206 = vrot.slane %v2083, 1
      %v2207 = vsel %vm2139, %v2205, %v2206
      %v2208 = vrot.slane %v2084, 1
      %v2209 = vsel %vm2139, %v2206, %v2208
      %v2210 = vrot.slane %v2085, 1
      %v2211 = vrot.slane %v2086, 1
      %v2212 = vsel %vm2139, %v2210, %v2211
      %v2213 = vrot.slane %v2087, 1
      %v2214 = vsel %vm2139, %v2211, %v2213
      %v2215 = vrot.slane %v2088, 1
      %v2216 = vrot.slane %v2089, 1
      %v2217 = vsel %vm2139, %v2215, %v2216
      %v2218 = vrot.slane %v2090, 1
      %v2219 = vsel %vm2139, %v2216, %v2218
      %v2252 = vadd.f32 %v2010, %v2142
      %v2253 = vadd.f32 %v2011, %v2144
      %v2254 = vadd.f32 %v2012, %v2147
      %v2255 = vadd.f32 %v2013, %v2149
      %v2256 = vadd.f32 %v2014, %v2152
      %v2257 = vadd.f32 %v2015, %v2154
      %v2258 = vadd.f32 %v2016, %v2157
      %v2259 = vadd.f32 %v2017, %v2159
      %v2260 = vadd.f32 %v2018, %v2162
      %v2261 = vadd.f32 %v2019, %v2164
      %v2262 = vadd.f32 %v2020, %v2167
      %v2263 = vadd.f32 %v2021, %v2169
      %v2264 = vadd.f32 %v2022, %v2172
      %v2265 = vadd.f32 %v2023, %v2174
      %v2266 = vadd.f32 %v2024, %v2177
      %v2267 = vadd.f32 %v2025, %v2179
      %v2268 = vadd.f32 %v2026, %v2182
      %v2269 = vadd.f32 %v2027, %v2184
      %v2270 = vadd.f32 %v2028, %v2187
      %v2271 = vadd.f32 %v2029, %v2189
      %v2272 = vadd.f32 %v2030, %v2192
      %v2273 = vadd.f32 %v2031, %v2194
      %v2274 = vadd.f32 %v2032, %v2197
      %v2275 = vadd.f32 %v2033, %v2199
      %v2276 = vadd.f32 %v2034, %v2202
      %v2277 = vadd.f32 %v2035, %v2204
      %v2278 = vadd.f32 %v2036, %v2207
      %v2279 = vadd.f32 %v2037, %v2209
      %v2280 = vadd.f32 %v2038, %v2212
      %v2281 = vadd.f32 %v2039, %v2214
      %v2282 = vadd.f32 %v2040, %v2217
      %v2283 = vadd.f32 %v2041, %v2219
      %v2284 = vperm.slane %v1959, 2
      %v2285 = vmul.f32 %v1961, %v2284
      %v2286 = vmul.f32 %v1962, %v2284
      %v2287 = vmul.f32 %v1963, %v2284
      %v2288 = vmul.f32 %v1964, %v2284
      %v2289 = vmul.f32 %v1965, %v2284
      %v2290 = vmul.f32 %v1966, %v2284
      %v2291 = vmul.f32 %v1967, %v2284
      %v2292 = vmul.f32 %v1968, %v2284
      %v2293 = vmul.f32 %v1969, %v2284
      %v2294 = vmul.f32 %v1970, %v2284
      %v2295 = vmul.f32 %v1971, %v2284
      %v2296 = vmul.f32 %v1972, %v2284
      %v2297 = vmul.f32 %v1973, %v2284
      %v2298 = vmul.f32 %v1974, %v2284
      %v2299 = vmul.f32 %v1975, %v2284
      %v2300 = vmul.f32 %v1976, %v2284
      %v2301 = vmul.f32 %v1977, %v2284
      %v2302 = vmul.f32 %v1978, %v2284
      %v2303 = vmul.f32 %v1979, %v2284
      %v2304 = vmul.f32 %v1980, %v2284
      %v2305 = vmul.f32 %v1981, %v2284
      %v2306 = vmul.f32 %v1982, %v2284
      %v2307 = vmul.f32 %v1983, %v2284
      %v2308 = vmul.f32 %v1984, %v2284
      %v2309 = vmul.f32 %v1985, %v2284
      %v2310 = vmul.f32 %v1986, %v2284
      %v2311 = vmul.f32 %v1987, %v2284
      %v2312 = vmul.f32 %v1988, %v2284
      %v2313 = vmul.f32 %v1989, %v2284
      %v2314 = vmul.f32 %v1990, %v2284
      %v2315 = vmul.f32 %v1991, %v2284
      %v2316 = vmul.f32 %v1992, %v2284
      %v2317 = vmul.f32 %v1993, %v2284
      %v2318 = vmul.f32 %v1994, %v2284
      %v2319 = vmul.f32 %v1995, %v2284
      %v2320 = vmul.f32 %v1996, %v2284
      %v2321 = vmul.f32 %v1997, %v2284
      %v2322 = vmul.f32 %v1998, %v2284
      %v2323 = vmul.f32 %v1999, %v2284
      %v2324 = vmul.f32 %v2000, %v2284
      %v2325 = vmul.f32 %v2001, %v2284
      %v2326 = vmul.f32 %v2002, %v2284
      %v2327 = vmul.f32 %v2003, %v2284
      %v2328 = vmul.f32 %v2004, %v2284
      %v2329 = vmul.f32 %v2005, %v2284
      %v2330 = vmul.f32 %v2006, %v2284
      %v2331 = vmul.f32 %v2007, %v2284
      %v2332 = vmul.f32 %v2008, %v2284
      %vm2381 = vcmask 1045504
      %v2382 = vrot.slane %v2285, 2
      %v2383 = vrot.slane %v2286, 2
      %v2384 = vsel %vm2381, %v2382, %v2383
      %v2385 = vrot.slane %v2287, 2
      %v2386 = vsel %vm2381, %v2383, %v2385
      %v2387 = vrot.slane %v2288, 2
      %v2388 = vrot.slane %v2289, 2
      %v2389 = vsel %vm2381, %v2387, %v2388
      %v2390 = vrot.slane %v2290, 2
      %v2391 = vsel %vm2381, %v2388, %v2390
      %v2392 = vrot.slane %v2291, 2
      %v2393 = vrot.slane %v2292, 2
      %v2394 = vsel %vm2381, %v2392, %v2393
      %v2395 = vrot.slane %v2293, 2
      %v2396 = vsel %vm2381, %v2393, %v2395
      %v2397 = vrot.slane %v2294, 2
      %v2398 = vrot.slane %v2295, 2
      %v2399 = vsel %vm2381, %v2397, %v2398
      %v2400 = vrot.slane %v2296, 2
      %v2401 = vsel %vm2381, %v2398, %v2400
      %v2402 = vrot.slane %v2297, 2
      %v2403 = vrot.slane %v2298, 2
      %v2404 = vsel %vm2381, %v2402, %v2403
      %v2405 = vrot.slane %v2299, 2
      %v2406 = vsel %vm2381, %v2403, %v2405
      %v2407 = vrot.slane %v2300, 2
      %v2408 = vrot.slane %v2301, 2
      %v2409 = vsel %vm2381, %v2407, %v2408
      %v2410 = vrot.slane %v2302, 2
      %v2411 = vsel %vm2381, %v2408, %v2410
      %v2412 = vrot.slane %v2303, 2
      %v2413 = vrot.slane %v2304, 2
      %v2414 = vsel %vm2381, %v2412, %v2413
      %v2415 = vrot.slane %v2305, 2
      %v2416 = vsel %vm2381, %v2413, %v2415
      %v2417 = vrot.slane %v2306, 2
      %v2418 = vrot.slane %v2307, 2
      %v2419 = vsel %vm2381, %v2417, %v2418
      %v2420 = vrot.slane %v2308, 2
      %v2421 = vsel %vm2381, %v2418, %v2420
      %v2422 = vrot.slane %v2309, 2
      %v2423 = vrot.slane %v2310, 2
      %v2424 = vsel %vm2381, %v2422, %v2423
      %v2425 = vrot.slane %v2311, 2
      %v2426 = vsel %vm2381, %v2423, %v2425
      %v2427 = vrot.slane %v2312, 2
      %v2428 = vrot.slane %v2313, 2
      %v2429 = vsel %vm2381, %v2427, %v2428
      %v2430 = vrot.slane %v2314, 2
      %v2431 = vsel %vm2381, %v2428, %v2430
      %v2432 = vrot.slane %v2315, 2
      %v2433 = vrot.slane %v2316, 2
      %v2434 = vsel %vm2381, %v2432, %v2433
      %v2435 = vrot.slane %v2317, 2
      %v2436 = vsel %vm2381, %v2433, %v2435
      %v2437 = vrot.slane %v2318, 2
      %v2438 = vrot.slane %v2319, 2
      %v2439 = vsel %vm2381, %v2437, %v2438
      %v2440 = vrot.slane %v2320, 2
      %v2441 = vsel %vm2381, %v2438, %v2440
      %v2442 = vrot.slane %v2321, 2
      %v2443 = vrot.slane %v2322, 2
      %v2444 = vsel %vm2381, %v2442, %v2443
      %v2445 = vrot.slane %v2323, 2
      %v2446 = vsel %vm2381, %v2443, %v2445
      %v2447 = vrot.slane %v2324, 2
      %v2448 = vrot.slane %v2325, 2
      %v2449 = vsel %vm2381, %v2447, %v2448
      %v2450 = vrot.slane %v2326, 2
      %v2451 = vsel %vm2381, %v2448, %v2450
      %v2452 = vrot.slane %v2327, 2
      %v2453 = vrot.slane %v2328, 2
      %v2454 = vsel %vm2381, %v2452, %v2453
      %v2455 = vrot.slane %v2329, 2
      %v2456 = vsel %vm2381, %v2453, %v2455
      %v2457 = vrot.slane %v2330, 2
      %v2458 = vrot.slane %v2331, 2
      %v2459 = vsel %vm2381, %v2457, %v2458
      %v2460 = vrot.slane %v2332, 2
      %v2461 = vsel %vm2381, %v2458, %v2460
      %v2494 = vadd.f32 %v2252, %v2384
      %v2495 = vadd.f32 %v2253, %v2386
      %v2496 = vadd.f32 %v2254, %v2389
      %v2497 = vadd.f32 %v2255, %v2391
      %v2498 = vadd.f32 %v2256, %v2394
      %v2499 = vadd.f32 %v2257, %v2396
      %v2500 = vadd.f32 %v2258, %v2399
      %v2501 = vadd.f32 %v2259, %v2401
      %v2502 = vadd.f32 %v2260, %v2404
      %v2503 = vadd.f32 %v2261, %v2406
      %v2504 = vadd.f32 %v2262, %v2409
      %v2505 = vadd.f32 %v2263, %v2411
      %v2506 = vadd.f32 %v2264, %v2414
      %v2507 = vadd.f32 %v2265, %v2416
      %v2508 = vadd.f32 %v2266, %v2419
      %v2509 = vadd.f32 %v2267, %v2421
      %v2510 = vadd.f32 %v2268, %v2424
      %v2511 = vadd.f32 %v2269, %v2426
      %v2512 = vadd.f32 %v2270, %v2429
      %v2513 = vadd.f32 %v2271, %v2431
      %v2514 = vadd.f32 %v2272, %v2434
      %v2515 = vadd.f32 %v2273, %v2436
      %v2516 = vadd.f32 %v2274, %v2439
      %v2517 = vadd.f32 %v2275, %v2441
      %v2518 = vadd.f32 %v2276, %v2444
      %v2519 = vadd.f32 %v2277, %v2446
      %v2520 = vadd.f32 %v2278, %v2449
      %v2521 = vadd.f32 %v2279, %v2451
      %v2522 = vadd.f32 %v2280, %v2454
      %v2523 = vadd.f32 %v2281, %v2456
      %v2524 = vadd.f32 %v2282, %v2459
      %v2525 = vadd.f32 %v2283, %v2461
      %s2526 = scalar_lea.vmem [#allocation2], 24
      %v2527 = vld [vmem:[%s2526] sm:$0xff]
      %v2528 = vld [vmem:[%s2526 + $0x8] sm:$0xff]
      %v2529 = vld [vmem:[%s2526 + $0x10] sm:$0x3]
      %v2530 = vld [vmem:[%s2526 + $0x18] sm:$0xff]
      %v2531 = vld [vmem:[%s2526 + $0x20] sm:$0xff]
      %v2532 = vld [vmem:[%s2526 + $0x28] sm:$0x3]
      %v2533 = vld [vmem:[%s2526 + $0x30] sm:$0xff]
      %v2534 = vld [vmem:[%s2526 + $0x38] sm:$0xff]
      %v2535 = vld [vmem:[%s2526 + $0x40] sm:$0x3]
      %v2536 = vld [vmem:[%s2526 + $0x48] sm:$0xff]
      %v2537 = vld [vmem:[%s2526 + $0x50] sm:$0xff]
      %v2538 = vld [vmem:[%s2526 + $0x58] sm:$0x3]
      %v2539 = vld [vmem:[%s2526 + $0x60] sm:$0xff]
      %v2540 = vld [vmem:[%s2526 + $0x68] sm:$0xff]
      %v2541 = vld [vmem:[%s2526 + $0x70] sm:$0x3]
      %v2542 = vld [vmem:[%s2526 + $0x78] sm:$0xff]
      %v2543 = vld [vmem:[%s2526 + $0x80] sm:$0xff]
      %v2544 = vld [vmem:[%s2526 + $0x88] sm:$0x3]
      %v2545 = vld [vmem:[%s2526 + $0x90] sm:$0xff]
      %v2546 = vld [vmem:[%s2526 + $0x98] sm:$0xff]
      %v2547 = vld [vmem:[%s2526 + $0xa0] sm:$0x3]
      %v2548 = vld [vmem:[%s2526 + $0xa8] sm:$0xff]
      %v2549 = vld [vmem:[%s2526 + $0xb0] sm:$0xff]
      %v2550 = vld [vmem:[%s2526 + $0xb8] sm:$0x3]
      %v2551 = vld [vmem:[%s2526 + $0xc0] sm:$0xff]
      %v2552 = vld [vmem:[%s2526 + $0xc8] sm:$0xff]
      %v2553 = vld [vmem:[%s2526 + $0xd0] sm:$0x3]
      %v2554 = vld [vmem:[%s2526 + $0xd8] sm:$0xff]
      %v2555 = vld [vmem:[%s2526 + $0xe0] sm:$0xff]
      %v2556 = vld [vmem:[%s2526 + $0xe8] sm:$0x3]
      %v2557 = vld [vmem:[%s2526 + $0xf0] sm:$0xff]
      %v2558 = vld [vmem:[%s2526 + $0xf8] sm:$0xff]
      %v2559 = vld [vmem:[%s2526 + $0x100] sm:$0x3]
      %v2560 = vld [vmem:[%s2526 + $0x108] sm:$0xff]
      %v2561 = vld [vmem:[%s2526 + $0x110] sm:$0xff]
      %v2562 = vld [vmem:[%s2526 + $0x118] sm:$0x3]
      %v2563 = vld [vmem:[%s2526 + $0x120] sm:$0xff]
      %v2564 = vld [vmem:[%s2526 + $0x128] sm:$0xff]
      %v2565 = vld [vmem:[%s2526 + $0x130] sm:$0x3]
      %v2566 = vld [vmem:[%s2526 + $0x138] sm:$0xff]
      %v2567 = vld [vmem:[%s2526 + $0x140] sm:$0xff]
      %v2568 = vld [vmem:[%s2526 + $0x148] sm:$0x3]
      %v2569 = vld [vmem:[%s2526 + $0x150] sm:$0xff]
      %v2570 = vld [vmem:[%s2526 + $0x158] sm:$0xff]
      %v2571 = vld [vmem:[%s2526 + $0x160] sm:$0x3]
      %v2572 = vld [vmem:[%s2526 + $0x168] sm:$0xff]
      %v2573 = vld [vmem:[%s2526 + $0x170] sm:$0xff]
      %v2574 = vld [vmem:[%s2526 + $0x178] sm:$0x3]
      %v2575 = vperm.slane %v1959, 3
      %v2576 = vmul.f32 %v2527, %v2575
      %v2577 = vmul.f32 %v2528, %v2575
      %v2578 = vmul.f32 %v2530, %v2575
      %v2579 = vmul.f32 %v2531, %v2575
      %v2580 = vmul.f32 %v2533, %v2575
      %v2581 = vmul.f32 %v2534, %v2575
      %v2582 = vmul.f32 %v2536, %v2575
      %v2583 = vmul.f32 %v2537, %v2575
      %v2584 = vmul.f32 %v2539, %v2575
      %v2585 = vmul.f32 %v2540, %v2575
      %v2586 = vmul.f32 %v2542, %v2575
      %v2587 = vmul.f32 %v2543, %v2575
      %v2588 = vmul.f32 %v2545, %v2575
      %v2589 = vmul.f32 %v2546, %v2575
      %v2590 = vmul.f32 %v2548, %v2575
      %v2591 = vmul.f32 %v2549, %v2575
      %v2592 = vmul.f32 %v2551, %v2575
      %v2593 = vmul.f32 %v2552, %v2575
      %v2594 = vmul.f32 %v2554, %v2575
      %v2595 = vmul.f32 %v2555, %v2575
      %v2596 = vmul.f32 %v2557, %v2575
      %v2597 = vmul.f32 %v2558, %v2575
      %v2598 = vmul.f32 %v2560, %v2575
      %v2599 = vmul.f32 %v2561, %v2575
      %v2600 = vmul.f32 %v2563, %v2575
      %v2601 = vmul.f32 %v2564, %v2575
      %v2602 = vmul.f32 %v2566, %v2575
      %v2603 = vmul.f32 %v2567, %v2575
      %v2604 = vmul.f32 %v2569, %v2575
      %v2605 = vmul.f32 %v2570, %v2575
      %v2606 = vmul.f32 %v2572, %v2575
      %v2607 = vmul.f32 %v2573, %v2575
      %v2608 = vadd.f32 %v2494, %v2576
      %v2609 = vadd.f32 %v2495, %v2577
      %v2610 = vadd.f32 %v2496, %v2578
      %v2611 = vadd.f32 %v2497, %v2579
      %v2612 = vadd.f32 %v2498, %v2580
      %v2613 = vadd.f32 %v2499, %v2581
      %v2614 = vadd.f32 %v2500, %v2582
      %v2615 = vadd.f32 %v2501, %v2583
      %v2616 = vadd.f32 %v2502, %v2584
      %v2617 = vadd.f32 %v2503, %v2585
      %v2618 = vadd.f32 %v2504, %v2586
      %v2619 = vadd.f32 %v2505, %v2587
      %v2620 = vadd.f32 %v2506, %v2588
      %v2621 = vadd.f32 %v2507, %v2589
      %v2622 = vadd.f32 %v2508, %v2590
      %v2623 = vadd.f32 %v2509, %v2591
      %v2624 = vadd.f32 %v2510, %v2592
      %v2625 = vadd.f32 %v2511, %v2593
      %v2626 = vadd.f32 %v2512, %v2594
      %v2627 = vadd.f32 %v2513, %v2595
      %v2628 = vadd.f32 %v2514, %v2596
      %v2629 = vadd.f32 %v2515, %v2597
      %v2630 = vadd.f32 %v2516, %v2598
      %v2631 = vadd.f32 %v2517, %v2599
      %v2632 = vadd.f32 %v2518, %v2600
      %v2633 = vadd.f32 %v2519, %v2601
      %v2634 = vadd.f32 %v2520, %v2602
      %v2635 = vadd.f32 %v2521, %v2603
      %v2636 = vadd.f32 %v2522, %v2604
      %v2637 = vadd.f32 %v2523, %v2605
      %v2638 = vadd.f32 %v2524, %v2606
      %v2639 = vadd.f32 %v2525, %v2607
      %v2640 = vperm.slane %v1959, 4
      %v2641 = vmul.f32 %v2527, %v2640
      %v2642 = vmul.f32 %v2528, %v2640
      %v2643 = vmul.f32 %v2529, %v2640
      %v2644 = vmul.f32 %v2530, %v2640
      %v2645 = vmul.f32 %v2531, %v2640
      %v2646 = vmul.f32 %v2532, %v2640
      %v2647 = vmul.f32 %v2533, %v2640
      %v2648 = vmul.f32 %v2534, %v2640
      %v2649 = vmul.f32 %v2535, %v2640
      %v2650 = vmul.f32 %v2536, %v2640
      %v2651 = vmul.f32 %v2537, %v2640
      %v2652 = vmul.f32 %v2538, %v2640
      %v2653 = vmul.f32 %v2539, %v2640
      %v2654 = vmul.f32 %v2540, %v2640
      %v2655 = vmul.f32 %v2541, %v2640
      %v2656 = vmul.f32 %v2542, %v2640
      %v2657 = vmul.f32 %v2543, %v2640
      %v2658 = vmul.f32 %v2544, %v2640
      %v2659 = vmul.f32 %v2545, %v2640
      %v2660 = vmul.f32 %v2546, %v2640
      %v2661 = vmul.f32 %v2547, %v2640
      %v2662 = vmul.f32 %v2548, %v2640
      %v2663 = vmul.f32 %v2549, %v2640
      %v2664 = vmul.f32 %v2550, %v2640
      %v2665 = vmul.f32 %v2551, %v2640
      %v2666 = vmul.f32 %v2552, %v2640
      %v2667 = vmul.f32 %v2553, %v2640
      %v2668 = vmul.f32 %v2554, %v2640
      %v2669 = vmul.f32 %v2555, %v2640
      %v2670 = vmul.f32 %v2556, %v2640
      %v2671 = vmul.f32 %v2557, %v2640
      %v2672 = vmul.f32 %v2558, %v2640
      %v2673 = vmul.f32 %v2559, %v2640
      %v2674 = vmul.f32 %v2560, %v2640
      %v2675 = vmul.f32 %v2561, %v2640
      %v2676 = vmul.f32 %v2562, %v2640
      %v2677 = vmul.f32 %v2563, %v2640
      %v2678 = vmul.f32 %v2564, %v2640
      %v2679 = vmul.f32 %v2565, %v2640
      %v2680 = vmul.f32 %v2566, %v2640
      %v2681 = vmul.f32 %v2567, %v2640
      %v2682 = vmul.f32 %v2568, %v2640
      %v2683 = vmul.f32 %v2569, %v2640
      %v2684 = vmul.f32 %v2570, %v2640
      %v2685 = vmul.f32 %v2571, %v2640
      %v2686 = vmul.f32 %v2572, %v2640
      %v2687 = vmul.f32 %v2573, %v2640
      %v2688 = vmul.f32 %v2574, %v2640
      %v2737 = vrot.slane %v2641, 1
      %v2738 = vrot.slane %v2642, 1
      %v2739 = vsel %vm2139, %v2737, %v2738
      %v2740 = vrot.slane %v2643, 1
      %v2741 = vsel %vm2139, %v2738, %v2740
      %v2742 = vrot.slane %v2644, 1
      %v2743 = vrot.slane %v2645, 1
      %v2744 = vsel %vm2139, %v2742, %v2743
      %v2745 = vrot.slane %v2646, 1
      %v2746 = vsel %vm2139, %v2743, %v2745
      %v2747 = vrot.slane %v2647, 1
      %v2748 = vrot.slane %v2648, 1
      %v2749 = vsel %vm2139, %v2747, %v2748
      %v2750 = vrot.slane %v2649, 1
      %v2751 = vsel %vm2139, %v2748, %v2750
      %v2752 = vrot.slane %v2650, 1
      %v2753 = vrot.slane %v2651, 1
      %v2754 = vsel %vm2139, %v2752, %v2753
      %v2755 = vrot.slane %v2652, 1
      %v2756 = vsel %vm2139, %v2753, %v2755
      %v2757 = vrot.slane %v2653, 1
      %v2758 = vrot.slane %v2654, 1
      %v2759 = vsel %vm2139, %v2757, %v2758
      %v2760 = vrot.slane %v2655, 1
      %v2761 = vsel %vm2139, %v2758, %v2760
      %v2762 = vrot.slane %v2656, 1
      %v2763 = vrot.slane %v2657, 1
      %v2764 = vsel %vm2139, %v2762, %v2763
      %v2765 = vrot.slane %v2658, 1
      %v2766 = vsel %vm2139, %v2763, %v2765
      %v2767 = vrot.slane %v2659, 1
      %v2768 = vrot.slane %v2660, 1
      %v2769 = vsel %vm2139, %v2767, %v2768
      %v2770 = vrot.slane %v2661, 1
      %v2771 = vsel %vm2139, %v2768, %v2770
      %v2772 = vrot.slane %v2662, 1
      %v2773 = vrot.slane %v2663, 1
      %v2774 = vsel %vm2139, %v2772, %v2773
      %v2775 = vrot.slane %v2664, 1
      %v2776 = vsel %vm2139, %v2773, %v2775
      %v2777 = vrot.slane %v2665, 1
      %v2778 = vrot.slane %v2666, 1
      %v2779 = vsel %vm2139, %v2777, %v2778
      %v2780 = vrot.slane %v2667, 1
      %v2781 = vsel %vm2139, %v2778, %v2780
      %v2782 = vrot.slane %v2668, 1
      %v2783 = vrot.slane %v2669, 1
      %v2784 = vsel %vm2139, %v2782, %v2783
      %v2785 = vrot.slane %v2670, 1
      %v2786 = vsel %vm2139, %v2783, %v2785
      %v2787 = vrot.slane %v2671, 1
      %v2788 = vrot.slane %v2672, 1
      %v2789 = vsel %vm2139, %v2787, %v2788
      %v2790 = vrot.slane %v2673, 1
      %v2791 = vsel %vm2139, %v2788, %v2790
      %v2792 = vrot.slane %v2674, 1
      %v2793 = vrot.slane %v2675, 1
      %v2794 = vsel %vm2139, %v2792, %v2793
      %v2795 = vrot.slane %v2676, 1
      %v2796 = vsel %vm2139, %v2793, %v2795
      %v2797 = vrot.slane %v2677, 1
      %v2798 = vrot.slane %v2678, 1
      %v2799 = vsel %vm2139, %v2797, %v2798
      %v2800 = vrot.slane %v2679, 1
      %v2801 = vsel %vm2139, %v2798, %v2800
      %v2802 = vrot.slane %v2680, 1
      %v2803 = vrot.slane %v2681, 1
      %v2804 = vsel %vm2139, %v2802, %v2803
      %v2805 = vrot.slane %v2682, 1
      %v2806 = vsel %vm2139, %v2803, %v2805
      %v2807 = vrot.slane %v2683, 1
      %v2808 = vrot.slane %v2684, 1
      %v2809 = vsel %vm2139, %v2807, %v2808
      %v2810 = vrot.slane %v2685, 1
      %v2811 = vsel %vm2139, %v2808, %v2810
      %v2812 = vrot.slane %v2686, 1
      %v2813 = vrot.slane %v2687, 1
      %v2814 = vsel %vm2139, %v2812, %v2813
      %v2815 = vrot.slane %v2688, 1
      %v2816 = vsel %vm2139, %v2813, %v2815
      %v2849 = vadd.f32 %v2608, %v2739
      %v2850 = vadd.f32 %v2609, %v2741
      %v2851 = vadd.f32 %v2610, %v2744
      %v2852 = vadd.f32 %v2611, %v2746
      %v2853 = vadd.f32 %v2612, %v2749
      %v2854 = vadd.f32 %v2613, %v2751
      %v2855 = vadd.f32 %v2614, %v2754
      %v2856 = vadd.f32 %v2615, %v2756
      %v2857 = vadd.f32 %v2616, %v2759
      %v2858 = vadd.f32 %v2617, %v2761
      %v2859 = vadd.f32 %v2618, %v2764
      %v2860 = vadd.f32 %v2619, %v2766
      %v2861 = vadd.f32 %v2620, %v2769
      %v2862 = vadd.f32 %v2621, %v2771
      %v2863 = vadd.f32 %v2622, %v2774
      %v2864 = vadd.f32 %v2623, %v2776
      %v2865 = vadd.f32 %v2624, %v2779
      %v2866 = vadd.f32 %v2625, %v2781
      %v2867 = vadd.f32 %v2626, %v2784
      %v2868 = vadd.f32 %v2627, %v2786
      %v2869 = vadd.f32 %v2628, %v2789
      %v2870 = vadd.f32 %v2629, %v2791
      %v2871 = vadd.f32 %v2630, %v2794
      %v2872 = vadd.f32 %v2631, %v2796
      %v2873 = vadd.f32 %v2632, %v2799
      %v2874 = vadd.f32 %v2633, %v2801
      %v2875 = vadd.f32 %v2634, %v2804
      %v2876 = vadd.f32 %v2635, %v2806
      %v2877 = vadd.f32 %v2636, %v2809
      %v2878 = vadd.f32 %v2637, %v2811
      %v2879 = vadd.f32 %v2638, %v2814
      %v2880 = vadd.f32 %v2639, %v2816
      %v2881 = vperm.slane %v1959, 5
      %v2882 = vmul.f32 %v2527, %v2881
      %v2883 = vmul.f32 %v2528, %v2881
      %v2884 = vmul.f32 %v2529, %v2881
      %v2885 = vmul.f32 %v2530, %v2881
      %v2886 = vmul.f32 %v2531, %v2881
      %v2887 = vmul.f32 %v2532, %v2881
      %v2888 = vmul.f32 %v2533, %v2881
      %v2889 = vmul.f32 %v2534, %v2881
      %v2890 = vmul.f32 %v2535, %v2881
      %v2891 = vmul.f32 %v2536, %v2881
      %v2892 = vmul.f32 %v2537, %v2881
      %v2893 = vmul.f32 %v2538, %v2881
      %v2894 = vmul.f32 %v2539, %v2881
      %v2895 = vmul.f32 %v2540, %v2881
      %v2896 = vmul.f32 %v2541, %v2881
      %v2897 = vmul.f32 %v2542, %v2881
      %v2898 = vmul.f32 %v2543, %v2881
      %v2899 = vmul.f32 %v2544, %v2881
      %v2900 = vmul.f32 %v2545, %v2881
      %v2901 = vmul.f32 %v2546, %v2881
      %v2902 = vmul.f32 %v2547, %v2881
      %v2903 = vmul.f32 %v2548, %v2881
      %v2904 = vmul.f32 %v2549, %v2881
      %v2905 = vmul.f32 %v2550, %v2881
      %v2906 = vmul.f32 %v2551, %v2881
      %v2907 = vmul.f32 %v2552, %v2881
      %v2908 = vmul.f32 %v2553, %v2881
      %v2909 = vmul.f32 %v2554, %v2881
      %v2910 = vmul.f32 %v2555, %v2881
      %v2911 = vmul.f32 %v2556, %v2881
      %v2912 = vmul.f32 %v2557, %v2881
      %v2913 = vmul.f32 %v2558, %v2881
      %v2914 = vmul.f32 %v2559, %v2881
      %v2915 = vmul.f32 %v2560, %v2881
      %v2916 = vmul.f32 %v2561, %v2881
      %v2917 = vmul.f32 %v2562, %v2881
      %v2918 = vmul.f32 %v2563, %v2881
      %v2919 = vmul.f32 %v2564, %v2881
      %v2920 = vmul.f32 %v2565, %v2881
      %v2921 = vmul.f32 %v2566, %v2881
      %v2922 = vmul.f32 %v2567, %v2881
      %v2923 = vmul.f32 %v2568, %v2881
      %v2924 = vmul.f32 %v2569, %v2881
      %v2925 = vmul.f32 %v2570, %v2881
      %v2926 = vmul.f32 %v2571, %v2881
      %v2927 = vmul.f32 %v2572, %v2881
      %v2928 = vmul.f32 %v2573, %v2881
      %v2929 = vmul.f32 %v2574, %v2881
      %v2978 = vrot.slane %v2882, 2
      %v2979 = vrot.slane %v2883, 2
      %v2980 = vsel %vm2381, %v2978, %v2979
      %v2981 = vrot.slane %v2884, 2
      %v2982 = vsel %vm2381, %v2979, %v2981
      %v2983 = vrot.slane %v2885, 2
      %v2984 = vrot.slane %v2886, 2
      %v2985 = vsel %vm2381, %v2983, %v2984
      %v2986 = vrot.slane %v2887, 2
      %v2987 = vsel %vm2381, %v2984, %v2986
      %v2988 = vrot.slane %v2888, 2
      %v2989 = vrot.slane %v2889, 2
      %v2990 = vsel %vm2381, %v2988, %v2989
      %v2991 = vrot.slane %v2890, 2
      %v2992 = vsel %vm2381, %v2989, %v2991
      %v2993 = vrot.slane %v2891, 2
      %v2994 = vrot.slane %v2892, 2
      %v2995 = vsel %vm2381, %v2993, %v2994
      %v2996 = vrot.slane %v2893, 2
      %v2997 = vsel %vm2381, %v2994, %v2996
      %v2998 = vrot.slane %v2894, 2
      %v2999 = vrot.slane %v2895, 2
      %v3000 = vsel %vm2381, %v2998, %v2999
      %v3001 = vrot.slane %v2896, 2
      %v3002 = vsel %vm2381, %v2999, %v3001
      %v3003 = vrot.slane %v2897, 2
      %v3004 = vrot.slane %v2898, 2
      %v3005 = vsel %vm2381, %v3003, %v3004
      %v3006 = vrot.slane %v2899, 2
      %v3007 = vsel %vm2381, %v3004, %v3006
      %v3008 = vrot.slane %v2900, 2
      %v3009 = vrot.slane %v2901, 2
      %v3010 = vsel %vm2381, %v3008, %v3009
      %v3011 = vrot.slane %v2902, 2
      %v3012 = vsel %vm2381, %v3009, %v3011
      %v3013 = vrot.slane %v2903, 2
      %v3014 = vrot.slane %v2904, 2
      %v3015 = vsel %vm2381, %v3013, %v3014
      %v3016 = vrot.slane %v2905, 2
      %v3017 = vsel %vm2381, %v3014, %v3016
      %v3018 = vrot.slane %v2906, 2
      %v3019 = vrot.slane %v2907, 2
      %v3020 = vsel %vm2381, %v3018, %v3019
      %v3021 = vrot.slane %v2908, 2
      %v3022 = vsel %vm2381, %v3019, %v3021
      %v3023 = vrot.slane %v2909, 2
      %v3024 = vrot.slane %v2910, 2
      %v3025 = vsel %vm2381, %v3023, %v3024
      %v3026 = vrot.slane %v2911, 2
      %v3027 = vsel %vm2381, %v3024, %v3026
      %v3028 = vrot.slane %v2912, 2
      %v3029 = vrot.slane %v2913, 2
      %v3030 = vsel %vm2381, %v3028, %v3029
      %v3031 = vrot.slane %v2914, 2
      %v3032 = vsel %vm2381, %v3029, %v3031
      %v3033 = vrot.slane %v2915, 2
      %v3034 = vrot.slane %v2916, 2
      %v3035 = vsel %vm2381, %v3033, %v3034
      %v3036 = vrot.slane %v2917, 2
      %v3037 = vsel %vm2381, %v3034, %v3036
      %v3038 = vrot.slane %v2918, 2
      %v3039 = vrot.slane %v2919, 2
      %v3040 = vsel %vm2381, %v3038, %v3039
      %v3041 = vrot.slane %v2920, 2
      %v3042 = vsel %vm2381, %v3039, %v3041
      %v3043 = vrot.slane %v2921, 2
      %v3044 = vrot.slane %v2922, 2
      %v3045 = vsel %vm2381, %v3043, %v3044
      %v3046 = vrot.slane %v2923, 2
      %v3047 = vsel %vm2381, %v3044, %v3046
      %v3048 = vrot.slane %v2924, 2
      %v3049 = vrot.slane %v2925, 2
      %v3050 = vsel %vm2381, %v3048, %v3049
      %v3051 = vrot.slane %v2926, 2
      %v3052 = vsel %vm2381, %v3049, %v3051
      %v3053 = vrot.slane %v2927, 2
      %v3054 = vrot.slane %v2928, 2
      %v3055 = vsel %vm2381, %v3053, %v3054
      %v3056 = vrot.slane %v2929, 2
      %v3057 = vsel %vm2381, %v3054, %v3056
      %v3090 = vadd.f32 %v2849, %v2980
      %v3091 = vadd.f32 %v2850, %v2982
      %v3092 = vadd.f32 %v2851, %v2985
      %v3093 = vadd.f32 %v2852, %v2987
      %v3094 = vadd.f32 %v2853, %v2990
      %v3095 = vadd.f32 %v2854, %v2992
      %v3096 = vadd.f32 %v2855, %v2995
      %v3097 = vadd.f32 %v2856, %v2997
      %v3098 = vadd.f32 %v2857, %v3000
      %v3099 = vadd.f32 %v2858, %v3002
      %v3100 = vadd.f32 %v2859, %v3005
      %v3101 = vadd.f32 %v2860, %v3007
      %v3102 = vadd.f32 %v2861, %v3010
      %v3103 = vadd.f32 %v2862, %v3012
      %v3104 = vadd.f32 %v2863, %v3015
      %v3105 = vadd.f32 %v2864, %v3017
      %v3106 = vadd.f32 %v2865, %v3020
      %v3107 = vadd.f32 %v2866, %v3022
      %v3108 = vadd.f32 %v2867, %v3025
      %v3109 = vadd.f32 %v2868, %v3027
      %v3110 = vadd.f32 %v2869, %v3030
      %v3111 = vadd.f32 %v2870, %v3032
      %v3112 = vadd.f32 %v2871, %v3035
      %v3113 = vadd.f32 %v2872, %v3037
      %v3114 = vadd.f32 %v2873, %v3040
      %v3115 = vadd.f32 %v2874, %v3042
      %v3116 = vadd.f32 %v2875, %v3045
      %v3117 = vadd.f32 %v2876, %v3047
      %v3118 = vadd.f32 %v2877, %v3050
      %v3119 = vadd.f32 %v2878, %v3052
      %v3120 = vadd.f32 %v2879, %v3055
      %v3121 = vadd.f32 %v2880, %v3057
      %s3122 = scalar_lea.vmem [#allocation2], 48
      %v3123 = vld [vmem:[%s3122] sm:$0xff]
      %v3124 = vld [vmem:[%s3122 + $0x8] sm:$0xff]
      %v3125 = vld [vmem:[%s3122 + $0x10] sm:$0x3]
      %v3126 = vld [vmem:[%s3122 + $0x18] sm:$0xff]
      %v3127 = vld [vmem:[%s3122 + $0x20] sm:$0xff]
      %v3128 = vld [vmem:[%s3122 + $0x28] sm:$0x3]
      %v3129 = vld [vmem:[%s3122 + $0x30] sm:$0xff]
      %v3130 = vld [vmem:[%s3122 + $0x38] sm:$0xff]
      %v3131 = vld [vmem:[%s3122 + $0x40] sm:$0x3]
      %v3132 = vld [vmem:[%s3122 + $0x48] sm:$0xff]
      %v3133 = vld [vmem:[%s3122 + $0x50] sm:$0xff]
      %v3134 = vld [vmem:[%s3122 + $0x58] sm:$0x3]
      %v3135 = vld [vmem:[%s3122 + $0x60] sm:$0xff]
      %v3136 = vld [vmem:[%s3122 + $0x68] sm:$0xff]
      %v3137 = vld [vmem:[%s3122 + $0x70] sm:$0x3]
      %v3138 = vld [vmem:[%s3122 + $0x78] sm:$0xff]
      %v3139 = vld [vmem:[%s3122 + $0x80] sm:$0xff]
      %v3140 = vld [vmem:[%s3122 + $0x88] sm:$0x3]
      %v3141 = vld [vmem:[%s3122 + $0x90] sm:$0xff]
      %v3142 = vld [vmem:[%s3122 + $0x98] sm:$0xff]
      %v3143 = vld [vmem:[%s3122 + $0xa0] sm:$0x3]
      %v3144 = vld [vmem:[%s3122 + $0xa8] sm:$0xff]
      %v3145 = vld [vmem:[%s3122 + $0xb0] sm:$0xff]
      %v3146 = vld [vmem:[%s3122 + $0xb8] sm:$0x3]
      %v3147 = vld [vmem:[%s3122 + $0xc0] sm:$0xff]
      %v3148 = vld [vmem:[%s3122 + $0xc8] sm:$0xff]
      %v3149 = vld [vmem:[%s3122 + $0xd0] sm:$0x3]
      %v3150 = vld [vmem:[%s3122 + $0xd8] sm:$0xff]
      %v3151 = vld [vmem:[%s3122 + $0xe0] sm:$0xff]
      %v3152 = vld [vmem:[%s3122 + $0xe8] sm:$0x3]
      %v3153 = vld [vmem:[%s3122 + $0xf0] sm:$0xff]
      %v3154 = vld [vmem:[%s3122 + $0xf8] sm:$0xff]
      %v3155 = vld [vmem:[%s3122 + $0x100] sm:$0x3]
      %v3156 = vld [vmem:[%s3122 + $0x108] sm:$0xff]
      %v3157 = vld [vmem:[%s3122 + $0x110] sm:$0xff]
      %v3158 = vld [vmem:[%s3122 + $0x118] sm:$0x3]
      %v3159 = vld [vmem:[%s3122 + $0x120] sm:$0xff]
      %v3160 = vld [vmem:[%s3122 + $0x128] sm:$0xff]
      %v3161 = vld [vmem:[%s3122 + $0x130] sm:$0x3]
      %v3162 = vld [vmem:[%s3122 + $0x138] sm:$0xff]
      %v3163 = vld [vmem:[%s3122 + $0x140] sm:$0xff]
      %v3164 = vld [vmem:[%s3122 + $0x148] sm:$0x3]
      %v3165 = vld [vmem:[%s3122 + $0x150] sm:$0xff]
      %v3166 = vld [vmem:[%s3122 + $0x158] sm:$0xff]
      %v3167 = vld [vmem:[%s3122 + $0x160] sm:$0x3]
      %v3168 = vld [vmem:[%s3122 + $0x168] sm:$0xff]
      %v3169 = vld [vmem:[%s3122 + $0x170] sm:$0xff]
      %v3170 = vld [vmem:[%s3122 + $0x178] sm:$0x3]
      %v3171 = vperm.slane %v1959, 6
      %v3172 = vmul.f32 %v3123, %v3171
      %v3173 = vmul.f32 %v3124, %v3171
      %v3174 = vmul.f32 %v3126, %v3171
      %v3175 = vmul.f32 %v3127, %v3171
      %v3176 = vmul.f32 %v3129, %v3171
      %v3177 = vmul.f32 %v3130, %v3171
      %v3178 = vmul.f32 %v3132, %v3171
      %v3179 = vmul.f32 %v3133, %v3171
      %v3180 = vmul.f32 %v3135, %v3171
      %v3181 = vmul.f32 %v3136, %v3171
      %v3182 = vmul.f32 %v3138, %v3171
      %v3183 = vmul.f32 %v3139, %v3171
      %v3184 = vmul.f32 %v3141, %v3171
      %v3185 = vmul.f32 %v3142, %v3171
      %v3186 = vmul.f32 %v3144, %v3171
      %v3187 = vmul.f32 %v3145, %v3171
      %v3188 = vmul.f32 %v3147, %v3171
      %v3189 = vmul.f32 %v3148, %v3171
      %v3190 = vmul.f32 %v3150, %v3171
      %v3191 = vmul.f32 %v3151, %v3171
      %v3192 = vmul.f32 %v3153, %v3171
      %v3193 = vmul.f32 %v3154, %v3171
      %v3194 = vmul.f32 %v3156, %v3171
      %v3195 = vmul.f32 %v3157, %v3171
      %v3196 = vmul.f32 %v3159, %v3171
      %v3197 = vmul.f32 %v3160, %v3171
      %v3198 = vmul.f32 %v3162, %v3171
      %v3199 = vmul.f32 %v3163, %v3171
      %v3200 = vmul.f32 %v3165, %v3171
      %v3201 = vmul.f32 %v3166, %v3171
      %v3202 = vmul.f32 %v3168, %v3171
      %v3203 = vmul.f32 %v3169, %v3171
      %v3204 = vadd.f32 %v3090, %v3172
      %v3205 = vadd.f32 %v3091, %v3173
      %v3206 = vadd.f32 %v3092, %v3174
      %v3207 = vadd.f32 %v3093, %v3175
      %v3208 = vadd.f32 %v3094, %v3176
      %v3209 = vadd.f32 %v3095, %v3177
      %v3210 = vadd.f32 %v3096, %v3178
      %v3211 = vadd.f32 %v3097, %v3179
      %v3212 = vadd.f32 %v3098, %v3180
      %v3213 = vadd.f32 %v3099, %v3181
      %v3214 = vadd.f32 %v3100, %v3182
      %v3215 = vadd.f32 %v3101, %v3183
      %v3216 = vadd.f32 %v3102, %v3184
      %v3217 = vadd.f32 %v3103, %v3185
      %v3218 = vadd.f32 %v3104, %v3186
      %v3219 = vadd.f32 %v3105, %v3187
      %v3220 = vadd.f32 %v3106, %v3188
      %v3221 = vadd.f32 %v3107, %v3189
      %v3222 = vadd.f32 %v3108, %v3190
      %v3223 = vadd.f32 %v3109, %v3191
      %v3224 = vadd.f32 %v3110, %v3192
      %v3225 = vadd.f32 %v3111, %v3193
      %v3226 = vadd.f32 %v3112, %v3194
      %v3227 = vadd.f32 %v3113, %v3195
      %v3228 = vadd.f32 %v3114, %v3196
      %v3229 = vadd.f32 %v3115, %v3197
      %v3230 = vadd.f32 %v3116, %v3198
      %v3231 = vadd.f32 %v3117, %v3199
      %v3232 = vadd.f32 %v3118, %v3200
      %v3233 = vadd.f32 %v3119, %v3201
      %v3234 = vadd.f32 %v3120, %v3202
      %v3235 = vadd.f32 %v3121, %v3203
      %v3236 = vperm.slane %v1959, 7
      %v3237 = vmul.f32 %v3123, %v3236
      %v3238 = vmul.f32 %v3124, %v3236
      %v3239 = vmul.f32 %v3125, %v3236
      %v3240 = vmul.f32 %v3126, %v3236
      %v3241 = vmul.f32 %v3127, %v3236
      %v3242 = vmul.f32 %v3128, %v3236
      %v3243 = vmul.f32 %v3129, %v3236
      %v3244 = vmul.f32 %v3130, %v3236
      %v3245 = vmul.f32 %v3131, %v3236
      %v3246 = vmul.f32 %v3132, %v3236
      %v3247 = vmul.f32 %v3133, %v3236
      %v3248 = vmul.f32 %v3134, %v3236
      %v3249 = vmul.f32 %v3135, %v3236
      %v3250 = vmul.f32 %v3136, %v3236
      %v3251 = vmul.f32 %v3137, %v3236
      %v3252 = vmul.f32 %v3138, %v3236
      %v3253 = vmul.f32 %v3139, %v3236
      %v3254 = vmul.f32 %v3140, %v3236
      %v3255 = vmul.f32 %v3141, %v3236
      %v3256 = vmul.f32 %v3142, %v3236
      %v3257 = vmul.f32 %v3143, %v3236
      %v3258 = vmul.f32 %v3144, %v3236
      %v3259 = vmul.f32 %v3145, %v3236
      %v3260 = vmul.f32 %v3146, %v3236
      %v3261 = vmul.f32 %v3147, %v3236
      %v3262 = vmul.f32 %v3148, %v3236
      %v3263 = vmul.f32 %v3149, %v3236
      %v3264 = vmul.f32 %v3150, %v3236
      %v3265 = vmul.f32 %v3151, %v3236
      %v3266 = vmul.f32 %v3152, %v3236
      %v3267 = vmul.f32 %v3153, %v3236
      %v3268 = vmul.f32 %v3154, %v3236
      %v3269 = vmul.f32 %v3155, %v3236
      %v3270 = vmul.f32 %v3156, %v3236
      %v3271 = vmul.f32 %v3157, %v3236
      %v3272 = vmul.f32 %v3158, %v3236
      %v3273 = vmul.f32 %v3159, %v3236
      %v3274 = vmul.f32 %v3160, %v3236
      %v3275 = vmul.f32 %v3161, %v3236
      %v3276 = vmul.f32 %v3162, %v3236
      %v3277 = vmul.f32 %v3163, %v3236
      %v3278 = vmul.f32 %v3164, %v3236
      %v3279 = vmul.f32 %v3165, %v3236
      %v3280 = vmul.f32 %v3166, %v3236
      %v3281 = vmul.f32 %v3167, %v3236
      %v3282 = vmul.f32 %v3168, %v3236
      %v3283 = vmul.f32 %v3169, %v3236
      %v3284 = vmul.f32 %v3170, %v3236
      %v3333 = vrot.slane %v3237, 1
      %v3334 = vrot.slane %v3238, 1
      %v3335 = vsel %vm2139, %v3333, %v3334
      %v3336 = vrot.slane %v3239, 1
      %v3337 = vsel %vm2139, %v3334, %v3336
      %v3338 = vrot.slane %v3240, 1
      %v3339 = vrot.slane %v3241, 1
      %v3340 = vsel %vm2139, %v3338, %v3339
      %v3341 = vrot.slane %v3242, 1
      %v3342 = vsel %vm2139, %v3339, %v3341
      %v3343 = vrot.slane %v3243, 1
      %v3344 = vrot.slane %v3244, 1
      %v3345 = vsel %vm2139, %v3343, %v3344
      %v3346 = vrot.slane %v3245, 1
      %v3347 = vsel %vm2139, %v3344, %v3346
      %v3348 = vrot.slane %v3246, 1
      %v3349 = vrot.slane %v3247, 1
      %v3350 = vsel %vm2139, %v3348, %v3349
      %v3351 = vrot.slane %v3248, 1
      %v3352 = vsel %vm2139, %v3349, %v3351
      %v3353 = vrot.slane %v3249, 1
      %v3354 = vrot.slane %v3250, 1
      %v3355 = vsel %vm2139, %v3353, %v3354
      %v3356 = vrot.slane %v3251, 1
      %v3357 = vsel %vm2139, %v3354, %v3356
      %v3358 = vrot.slane %v3252, 1
      %v3359 = vrot.slane %v3253, 1
      %v3360 = vsel %vm2139, %v3358, %v3359
      %v3361 = vrot.slane %v3254, 1
      %v3362 = vsel %vm2139, %v3359, %v3361
      %v3363 = vrot.slane %v3255, 1
      %v3364 = vrot.slane %v3256, 1
      %v3365 = vsel %vm2139, %v3363, %v3364
      %v3366 = vrot.slane %v3257, 1
      %v3367 = vsel %vm2139, %v3364, %v3366
      %v3368 = vrot.slane %v3258, 1
      %v3369 = vrot.slane %v3259, 1
      %v3370 = vsel %vm2139, %v3368, %v3369
      %v3371 = vrot.slane %v3260, 1
      %v3372 = vsel %vm2139, %v3369, %v3371
      %v3373 = vrot.slane %v3261, 1
      %v3374 = vrot.slane %v3262, 1
      %v3375 = vsel %vm2139, %v3373, %v3374
      %v3376 = vrot.slane %v3263, 1
      %v3377 = vsel %vm2139, %v3374, %v3376
      %v3378 = vrot.slane %v3264, 1
      %v3379 = vrot.slane %v3265, 1
      %v3380 = vsel %vm2139, %v3378, %v3379
      %v3381 = vrot.slane %v3266, 1
      %v3382 = vsel %vm2139, %v3379, %v3381
      %v3383 = vrot.slane %v3267, 1
      %v3384 = vrot.slane %v3268, 1
      %v3385 = vsel %vm2139, %v3383, %v3384
      %v3386 = vrot.slane %v3269, 1
      %v3387 = vsel %vm2139, %v3384, %v3386
      %v3388 = vrot.slane %v3270, 1
      %v3389 = vrot.slane %v3271, 1
      %v3390 = vsel %vm2139, %v3388, %v3389
      %v3391 = vrot.slane %v3272, 1
      %v3392 = vsel %vm2139, %v3389, %v3391
      %v3393 = vrot.slane %v3273, 1
      %v3394 = vrot.slane %v3274, 1
      %v3395 = vsel %vm2139, %v3393, %v3394
      %v3396 = vrot.slane %v3275, 1
      %v3397 = vsel %vm2139, %v3394, %v3396
      %v3398 = vrot.slane %v3276, 1
      %v3399 = vrot.slane %v3277, 1
      %v3400 = vsel %vm2139, %v3398, %v3399
      %v3401 = vrot.slane %v3278, 1
      %v3402 = vsel %vm2139, %v3399, %v3401
      %v3403 = vrot.slane %v3279, 1
      %v3404 = vrot.slane %v3280, 1
      %v3405 = vsel %vm2139, %v3403, %v3404
      %v3406 = vrot.slane %v3281, 1
      %v3407 = vsel %vm2139, %v3404, %v3406
      %v3408 = vrot.slane %v3282, 1
      %v3409 = vrot.slane %v3283, 1
      %v3410 = vsel %vm2139, %v3408, %v3409
      %v3411 = vrot.slane %v3284, 1
      %v3412 = vsel %vm2139, %v3409, %v3411
      %v3445 = vadd.f32 %v3204, %v3335
      %v3446 = vadd.f32 %v3205, %v3337
      %v3447 = vadd.f32 %v3206, %v3340
      %v3448 = vadd.f32 %v3207, %v3342
      %v3449 = vadd.f32 %v3208, %v3345
      %v3450 = vadd.f32 %v3209, %v3347
      %v3451 = vadd.f32 %v3210, %v3350
      %v3452 = vadd.f32 %v3211, %v3352
      %v3453 = vadd.f32 %v3212, %v3355
      %v3454 = vadd.f32 %v3213, %v3357
      %v3455 = vadd.f32 %v3214, %v3360
      %v3456 = vadd.f32 %v3215, %v3362
      %v3457 = vadd.f32 %v3216, %v3365
      %v3458 = vadd.f32 %v3217, %v3367
      %v3459 = vadd.f32 %v3218, %v3370
      %v3460 = vadd.f32 %v3219, %v3372
      %v3461 = vadd.f32 %v3220, %v3375
      %v3462 = vadd.f32 %v3221, %v3377
      %v3463 = vadd.f32 %v3222, %v3380
      %v3464 = vadd.f32 %v3223, %v3382
      %v3465 = vadd.f32 %v3224, %v3385
      %v3466 = vadd.f32 %v3225, %v3387
      %v3467 = vadd.f32 %v3226, %v3390
      %v3468 = vadd.f32 %v3227, %v3392
      %v3469 = vadd.f32 %v3228, %v3395
      %v3470 = vadd.f32 %v3229, %v3397
      %v3471 = vadd.f32 %v3230, %v3400
      %v3472 = vadd.f32 %v3231, %v3402
      %v3473 = vadd.f32 %v3232, %v3405
      %v3474 = vadd.f32 %v3233, %v3407
      %v3475 = vadd.f32 %v3234, %v3410
      %v3476 = vadd.f32 %v3235, %v3412
      %v3477 = vperm.slane %v1960, 0
      %v3478 = vmul.f32 %v3123, %v3477
      %v3479 = vmul.f32 %v3124, %v3477
      %v3480 = vmul.f32 %v3125, %v3477
      %v3481 = vmul.f32 %v3126, %v3477
      %v3482 = vmul.f32 %v3127, %v3477
      %v3483 = vmul.f32 %v3128, %v3477
      %v3484 = vmul.f32 %v3129, %v3477
      %v3485 = vmul.f32 %v3130, %v3477
      %v3486 = vmul.f32 %v3131, %v3477
      %v3487 = vmul.f32 %v3132, %v3477
      %v3488 = vmul.f32 %v3133, %v3477
      %v3489 = vmul.f32 %v3134, %v3477
      %v3490 = vmul.f32 %v3135, %v3477
      %v3491 = vmul.f32 %v3136, %v3477
      %v3492 = vmul.f32 %v3137, %v3477
      %v3493 = vmul.f32 %v3138, %v3477
      %v3494 = vmul.f32 %v3139, %v3477
      %v3495 = vmul.f32 %v3140, %v3477
      %v3496 = vmul.f32 %v3141, %v3477
      %v3497 = vmul.f32 %v3142, %v3477
      %v3498 = vmul.f32 %v3143, %v3477
      %v3499 = vmul.f32 %v3144, %v3477
      %v3500 = vmul.f32 %v3145, %v3477
      %v3501 = vmul.f32 %v3146, %v3477
      %v3502 = vmul.f32 %v3147, %v3477
      %v3503 = vmul.f32 %v3148, %v3477
      %v3504 = vmul.f32 %v3149, %v3477
      %v3505 = vmul.f32 %v3150, %v3477
      %v3506 = vmul.f32 %v3151, %v3477
      %v3507 = vmul.f32 %v3152, %v3477
      %v3508 = vmul.f32 %v3153, %v3477
      %v3509 = vmul.f32 %v3154, %v3477
      %v3510 = vmul.f32 %v3155, %v3477
      %v3511 = vmul.f32 %v3156, %v3477
      %v3512 = vmul.f32 %v3157, %v3477
      %v3513 = vmul.f32 %v3158, %v3477
      %v3514 = vmul.f32 %v3159, %v3477
      %v3515 = vmul.f32 %v3160, %v3477
      %v3516 = vmul.f32 %v3161, %v3477
      %v3517 = vmul.f32 %v3162, %v3477
      %v3518 = vmul.f32 %v3163, %v3477
      %v3519 = vmul.f32 %v3164, %v3477
      %v3520 = vmul.f32 %v3165, %v3477
      %v3521 = vmul.f32 %v3166, %v3477
      %v3522 = vmul.f32 %v3167, %v3477
      %v3523 = vmul.f32 %v3168, %v3477
      %v3524 = vmul.f32 %v3169, %v3477
      %v3525 = vmul.f32 %v3170, %v3477
      %v3574 = vrot.slane %v3478, 2
      %v3575 = vrot.slane %v3479, 2
      %v3576 = vsel %vm2381, %v3574, %v3575
      %v3577 = vrot.slane %v3480, 2
      %v3578 = vsel %vm2381, %v3575, %v3577
      %v3579 = vrot.slane %v3481, 2
      %v3580 = vrot.slane %v3482, 2
      %v3581 = vsel %vm2381, %v3579, %v3580
      %v3582 = vrot.slane %v3483, 2
      %v3583 = vsel %vm2381, %v3580, %v3582
      %v3584 = vrot.slane %v3484, 2
      %v3585 = vrot.slane %v3485, 2
      %v3586 = vsel %vm2381, %v3584, %v3585
      %v3587 = vrot.slane %v3486, 2
      %v3588 = vsel %vm2381, %v3585, %v3587
      %v3589 = vrot.slane %v3487, 2
      %v3590 = vrot.slane %v3488, 2
      %v3591 = vsel %vm2381, %v3589, %v3590
      %v3592 = vrot.slane %v3489, 2
      %v3593 = vsel %vm2381, %v3590, %v3592
      %v3594 = vrot.slane %v3490, 2
      %v3595 = vrot.slane %v3491, 2
      %v3596 = vsel %vm2381, %v3594, %v3595
      %v3597 = vrot.slane %v3492, 2
      %v3598 = vsel %vm2381, %v3595, %v3597
      %v3599 = vrot.slane %v3493, 2
      %v3600 = vrot.slane %v3494, 2
      %v3601 = vsel %vm2381, %v3599, %v3600
      %v3602 = vrot.slane %v3495, 2
      %v3603 = vsel %vm2381, %v3600, %v3602
      %v3604 = vrot.slane %v3496, 2
      %v3605 = vrot.slane %v3497, 2
      %v3606 = vsel %vm2381, %v3604, %v3605
      %v3607 = vrot.slane %v3498, 2
      %v3608 = vsel %vm2381, %v3605, %v3607
      %v3609 = vrot.slane %v3499, 2
      %v3610 = vrot.slane %v3500, 2
      %v3611 = vsel %vm2381, %v3609, %v3610
      %v3612 = vrot.slane %v3501, 2
      %v3613 = vsel %vm2381, %v3610, %v3612
      %v3614 = vrot.slane %v3502, 2
      %v3615 = vrot.slane %v3503, 2
      %v3616 = vsel %vm2381, %v3614, %v3615
      %v3617 = vrot.slane %v3504, 2
      %v3618 = vsel %vm2381, %v3615, %v3617
      %v3619 = vrot.slane %v3505, 2
      %v3620 = vrot.slane %v3506, 2
      %v3621 = vsel %vm2381, %v3619, %v3620
      %v3622 = vrot.slane %v3507, 2
      %v3623 = vsel %vm2381, %v3620, %v3622
      %v3624 = vrot.slane %v3508, 2
      %v3625 = vrot.slane %v3509, 2
      %v3626 = vsel %vm2381, %v3624, %v3625
      %v3627 = vrot.slane %v3510, 2
      %v3628 = vsel %vm2381, %v3625, %v3627
      %v3629 = vrot.slane %v3511, 2
      %v3630 = vrot.slane %v3512, 2
      %v3631 = vsel %vm2381, %v3629, %v3630
      %v3632 = vrot.slane %v3513, 2
      %v3633 = vsel %vm2381, %v3630, %v3632
      %v3634 = vrot.slane %v3514, 2
      %v3635 = vrot.slane %v3515, 2
      %v3636 = vsel %vm2381, %v3634, %v3635
      %v3637 = vrot.slane %v3516, 2
      %v3638 = vsel %vm2381, %v3635, %v3637
      %v3639 = vrot.slane %v3517, 2
      %v3640 = vrot.slane %v3518, 2
      %v3641 = vsel %vm2381, %v3639, %v3640
      %v3642 = vrot.slane %v3519, 2
      %v3643 = vsel %vm2381, %v3640, %v3642
      %v3644 = vrot.slane %v3520, 2
      %v3645 = vrot.slane %v3521, 2
      %v3646 = vsel %vm2381, %v3644, %v3645
      %v3647 = vrot.slane %v3522, 2
      %v3648 = vsel %vm2381, %v3645, %v3647
      %v3649 = vrot.slane %v3523, 2
      %v3650 = vrot.slane %v3524, 2
      %v3651 = vsel %vm2381, %v3649, %v3650
      %v3652 = vrot.slane %v3525, 2
      %v3653 = vsel %vm2381, %v3650, %v3652
      %v3686 = vadd.f32 %v3445, %v3576
      %v3687 = vadd.f32 %v3446, %v3578
      %v3688 = vadd.f32 %v3447, %v3581
      %v3689 = vadd.f32 %v3448, %v3583
      %v3690 = vadd.f32 %v3449, %v3586
      %v3691 = vadd.f32 %v3450, %v3588
      %v3692 = vadd.f32 %v3451, %v3591
      %v3693 = vadd.f32 %v3452, %v3593
      %v3694 = vadd.f32 %v3453, %v3596
      %v3695 = vadd.f32 %v3454, %v3598
      %v3696 = vadd.f32 %v3455, %v3601
      %v3697 = vadd.f32 %v3456, %v3603
      %v3698 = vadd.f32 %v3457, %v3606
      %v3699 = vadd.f32 %v3458, %v3608
      %v3700 = vadd.f32 %v3459, %v3611
      %v3701 = vadd.f32 %v3460, %v3613
      %v3702 = vadd.f32 %v3461, %v3616
      %v3703 = vadd.f32 %v3462, %v3618
      %v3704 = vadd.f32 %v3463, %v3621
      %v3705 = vadd.f32 %v3464, %v3623
      %v3706 = vadd.f32 %v3465, %v3626
      %v3707 = vadd.f32 %v3466, %v3628
      %v3708 = vadd.f32 %v3467, %v3631
      %v3709 = vadd.f32 %v3468, %v3633
      %v3710 = vadd.f32 %v3469, %v3636
      %v3711 = vadd.f32 %v3470, %v3638
      %v3712 = vadd.f32 %v3471, %v3641
      %v3713 = vadd.f32 %v3472, %v3643
      %v3714 = vadd.f32 %v3473, %v3646
      %v3715 = vadd.f32 %v3474, %v3648
      %v3716 = vadd.f32 %v3475, %v3651
      %v3717 = vadd.f32 %v3476, %v3653
      %v3718 = vld [vmem:[%s4 + $0x2] sm:$0x1]
      %v3719 = vperm.slane %v3718, 0
      %v3720 = vadd.f32 %v3686, %v3719
      %v3721 = vadd.f32 %v3687, %v3719
      %v3722 = vadd.f32 %v3688, %v3719
      %v3723 = vadd.f32 %v3689, %v3719
      %v3724 = vadd.f32 %v3690, %v3719
      %v3725 = vadd.f32 %v3691, %v3719
      %v3726 = vadd.f32 %v3692, %v3719
      %v3727 = vadd.f32 %v3693, %v3719
      %v3728 = vadd.f32 %v3694, %v3719
      %v3729 = vadd.f32 %v3695, %v3719
      %v3730 = vadd.f32 %v3696, %v3719
      %v3731 = vadd.f32 %v3697, %v3719
      %v3732 = vadd.f32 %v3698, %v3719
      %v3733 = vadd.f32 %v3699, %v3719
      %v3734 = vadd.f32 %v3700, %v3719
      %v3735 = vadd.f32 %v3701, %v3719
      %v3736 = vadd.f32 %v3702, %v3719
      %v3737 = vadd.f32 %v3703, %v3719
      %v3738 = vadd.f32 %v3704, %v3719
      %v3739 = vadd.f32 %v3705, %v3719
      %v3740 = vadd.f32 %v3706, %v3719
      %v3741 = vadd.f32 %v3707, %v3719
      %v3742 = vadd.f32 %v3708, %v3719
      %v3743 = vadd.f32 %v3709, %v3719
      %v3744 = vadd.f32 %v3710, %v3719
      %v3745 = vadd.f32 %v3711, %v3719
      %v3746 = vadd.f32 %v3712, %v3719
      %v3747 = vadd.f32 %v3713, %v3719
      %v3748 = vadd.f32 %v3714, %v3719
      %v3749 = vadd.f32 %v3715, %v3719
      %v3750 = vadd.f32 %v3716, %v3719
      %v3751 = vadd.f32 %v3717, %v3719
      %vm3752 = vcmp.ge.f32.partialorder %v3720, 0.0
      %vm3753 = vcmp.ge.f32.partialorder %v3721, 0.0
      %vm3754 = vcmp.ge.f32.partialorder %v3722, 0.0
      %vm3755 = vcmp.ge.f32.partialorder %v3723, 0.0
      %vm3756 = vcmp.ge.f32.partialorder %v3724, 0.0
      %vm3757 = vcmp.ge.f32.partialorder %v3725, 0.0
      %vm3758 = vcmp.ge.f32.partialorder %v3726, 0.0
      %vm3759 = vcmp.ge.f32.partialorder %v3727, 0.0
      %vm3760 = vcmp.ge.f32.partialorder %v3728, 0.0
      %vm3761 = vcmp.ge.f32.partialorder %v3729, 0.0
      %vm3762 = vcmp.ge.f32.partialorder %v3730, 0.0
      %vm3763 = vcmp.ge.f32.partialorder %v3731, 0.0
      %vm3764 = vcmp.ge.f32.partialorder %v3732, 0.0
      %vm3765 = vcmp.ge.f32.partialorder %v3733, 0.0
      %vm3766 = vcmp.ge.f32.partialorder %v3734, 0.0
      %vm3767 = vcmp.ge.f32.partialorder %v3735, 0.0
      %vm3768 = vcmp.ge.f32.partialorder %v3736, 0.0
      %vm3769 = vcmp.ge.f32.partialorder %v3737, 0.0
      %vm3770 = vcmp.ge.f32.partialorder %v3738, 0.0
      %vm3771 = vcmp.ge.f32.partialorder %v3739, 0.0
      %vm3772 = vcmp.ge.f32.partialorder %v3740, 0.0
      %vm3773 = vcmp.ge.f32.partialorder %v3741, 0.0
      %vm3774 = vcmp.ge.f32.partialorder %v3742, 0.0
      %vm3775 = vcmp.ge.f32.partialorder %v3743, 0.0
      %vm3776 = vcmp.ge.f32.partialorder %v3744, 0.0
      %vm3777 = vcmp.ge.f32.partialorder %v3745, 0.0
      %vm3778 = vcmp.ge.f32.partialorder %v3746, 0.0
      %vm3779 = vcmp.ge.f32.partialorder %v3747, 0.0
      %vm3780 = vcmp.ge.f32.partialorder %v3748, 0.0
      %vm3781 = vcmp.ge.f32.partialorder %v3749, 0.0
      %vm3782 = vcmp.ge.f32.partialorder %v3750, 0.0
      %vm3783 = vcmp.ge.f32.partialorder %v3751, 0.0
      %v3784 = vld [vmem:[%s4 + $0x3] sm:$0x1]
      %v3785 = vperm.slane %v3784, 0
      %v3786 = vmul.f32 %v3785, %v3720
      %v3787 = vmul.f32 %v3785, %v3721
      %v3788 = vmul.f32 %v3785, %v3722
      %v3789 = vmul.f32 %v3785, %v3723
      %v3790 = vmul.f32 %v3785, %v3724
      %v3791 = vmul.f32 %v3785, %v3725
      %v3792 = vmul.f32 %v3785, %v3726
      %v3793 = vmul.f32 %v3785, %v3727
      %v3794 = vmul.f32 %v3785, %v3728
      %v3795 = vmul.f32 %v3785, %v3729
      %v3796 = vmul.f32 %v3785, %v3730
      %v3797 = vmul.f32 %v3785, %v3731
      %v3798 = vmul.f32 %v3785, %v3732
      %v3799 = vmul.f32 %v3785, %v3733
      %v3800 = vmul.f32 %v3785, %v3734
      %v3801 = vmul.f32 %v3785, %v3735
      %v3802 = vmul.f32 %v3785, %v3736
      %v3803 = vmul.f32 %v3785, %v3737
      %v3804 = vmul.f32 %v3785, %v3738
      %v3805 = vmul.f32 %v3785, %v3739
      %v3806 = vmul.f32 %v3785, %v3740
      %v3807 = vmul.f32 %v3785, %v3741
      %v3808 = vmul.f32 %v3785, %v3742
      %v3809 = vmul.f32 %v3785, %v3743
      %v3810 = vmul.f32 %v3785, %v3744
      %v3811 = vmul.f32 %v3785, %v3745
      %v3812 = vmul.f32 %v3785, %v3746
      %v3813 = vmul.f32 %v3785, %v3747
      %v3814 = vmul.f32 %v3785, %v3748
      %v3815 = vmul.f32 %v3785, %v3749
      %v3816 = vmul.f32 %v3785, %v3750
      %v3817 = vmul.f32 %v3785, %v3751
      %v3818 = vsel %vm3752, %v3720, %v3786
      %v3819 = vsel %vm3753, %v3721, %v3787
      %v3820 = vsel %vm3754, %v3722, %v3788
      %v3821 = vsel %vm3755, %v3723, %v3789
      %v3822 = vsel %vm3756, %v3724, %v3790
      %v3823 = vsel %vm3757, %v3725, %v3791
      %v3824 = vsel %vm3758, %v3726, %v3792
      %v3825 = vsel %vm3759, %v3727, %v3793
      %v3826 = vsel %vm3760, %v3728, %v3794
      %v3827 = vsel %vm3761, %v3729, %v3795
      %v3828 = vsel %vm3762, %v3730, %v3796
      %v3829 = vsel %vm3763, %v3731, %v3797
      %v3830 = vsel %vm3764, %v3732, %v3798
      %v3831 = vsel %vm3765, %v3733, %v3799
      %v3832 = vsel %vm3766, %v3734, %v3800
      %v3833 = vsel %vm3767, %v3735, %v3801
      %v3834 = vsel %vm3768, %v3736, %v3802
      %v3835 = vsel %vm3769, %v3737, %v3803
      %v3836 = vsel %vm3770, %v3738, %v3804
      %v3837 = vsel %vm3771, %v3739, %v3805
      %v3838 = vsel %vm3772, %v3740, %v3806
      %v3839 = vsel %vm3773, %v3741, %v3807
      %v3840 = vsel %vm3774, %v3742, %v3808
      %v3841 = vsel %vm3775, %v3743, %v3809
      %v3842 = vsel %vm3776, %v3744, %v3810
      %v3843 = vsel %vm3777, %v3745, %v3811
      %v3844 = vsel %vm3778, %v3746, %v3812
      %v3845 = vsel %vm3779, %v3747, %v3813
      %v3846 = vsel %vm3780, %v3748, %v3814
      %v3847 = vsel %vm3781, %v3749, %v3815
      %v3848 = vsel %vm3782, %v3750, %v3816
      %v3849 = vsel %vm3783, %v3751, %v3817
      %v3850 = vld [vmem:[%s3] sm:$0xff]
      %v3851 = vld [vmem:[%s3 + $0x8] sm:$0xff]
      %v3852 = vld [vmem:[%s3 + $0x10] sm:$0xff]
      %v3854 = vsel %vm1855, %v3818, 0
      %v3857 = vsel %vm1855, %v3819, 0
      %v3860 = vsel %vm1855, %v3820, 0
      %v3863 = vsel %vm1855, %v3821, 0
      %v3866 = vsel %vm1855, %v3822, 0
      %v3869 = vsel %vm1855, %v3823, 0
      %v3872 = vsel %vm1855, %v3824, 0
      %v3875 = vsel %vm1855, %v3825, 0
      %v3878 = vsel %vm1855, %v3826, 0
      %v3881 = vsel %vm1855, %v3827, 0
      %v3884 = vsel %vm1855, %v3828, 0
      %v3887 = vsel %vm1855, %v3829, 0
      %v3890 = vsel %vm1855, %v3830, 0
      %v3893 = vsel %vm1855, %v3831, 0
      %v3896 = vsel %vm1855, %v3832, 0
      %v3899 = vsel %vm1855, %v3833, 0
      %v3902 = vsel %vm1855, %v3834, 0
      %v3905 = vsel %vm1855, %v3835, 0
      %v3908 = vsel %vm1855, %v3836, 0
      %v3911 = vsel %vm1855, %v3837, 0
      %v3914 = vsel %vm1855, %v3838, 0
      %v3917 = vsel %vm1855, %v3839, 0
      %v3920 = vsel %vm1855, %v3840, 0
      %v3923 = vsel %vm1855, %v3841, 0
      %v3926 = vsel %vm1855, %v3842, 0
      %v3929 = vsel %vm1855, %v3843, 0
      %v3932 = vsel %vm1855, %v3844, 0
      %v3935 = vsel %vm1855, %v3845, 0
      %v3938 = vsel %vm1855, %v3846, 0
      %v3941 = vsel %vm1855, %v3847, 0
      %v3944 = vsel %vm1855, %v3848, 0
      %v3947 = vsel %vm1855, %v3849, 0
      %3949 = vmatpush.msra.mxu0 0.0
      %3950 = vmatpush.msra.mxu0 0.0
      %3951 = vmatpush.msra.mxu0 0.0
      %3952 = vmatpush.msra.mxu0 0.0
      %3953 = vmatpush.msra.mxu0 0.0
      %3954 = vmatpush.msra.mxu0 0.0
      %3955 = vmatpush.msra.mxu0 0.0
      %3956 = vmatpush.msra.mxu0 0.0
      %3957 = vmatpush.msra.mxu0 0.0
      %3958 = vmatpush.msra.mxu0 0.0
      %3959 = vmatpush.msra.mxu0 0.0
      %3960 = vmatpush.msra.mxu0 0.0
      %3961 = vmatpush.msra.mxu0 0.0
      %3962 = vmatpush.msra.mxu0 %v3852
      %3963 = vmatpush.msra.mxu0 %v3851
      %3964 = vmatpush.msra.mxu0 %v3850
      %3965 = vmatmul.f32.gmra.mxu0 %v3854
      %v3966 = vpop.f32.mrf.mxu0
      %v3967 = vadd.f32 0.0, %v3966
      %3968 = vmatmul.f32.gmra.mxu0 %v3857
      %v3969 = vpop.f32.mrf.mxu0
      %v3970 = vadd.f32 0.0, %v3969
      %3971 = vmatmul.f32.gmra.mxu0 %v3860
      %v3972 = vpop.f32.mrf.mxu0
      %v3973 = vadd.f32 0.0, %v3972
      %3974 = vmatmul.f32.gmra.mxu0 %v3863
      %v3975 = vpop.f32.mrf.mxu0
      %v3976 = vadd.f32 0.0, %v3975
      %3977 = vmatmul.f32.gmra.mxu0 %v3866
      %v3978 = vpop.f32.mrf.mxu0
      %v3979 = vadd.f32 0.0, %v3978
      %3980 = vmatmul.f32.gmra.mxu0 %v3869
      %v3981 = vpop.f32.mrf.mxu0
      %v3982 = vadd.f32 0.0, %v3981
      %3983 = vmatmul.f32.gmra.mxu0 %v3872
      %v3984 = vpop.f32.mrf.mxu0
      %v3985 = vadd.f32 0.0, %v3984
      %3986 = vmatmul.f32.gmra.mxu0 %v3875
      %v3987 = vpop.f32.mrf.mxu0
      %v3988 = vadd.f32 0.0, %v3987
      %3989 = vmatmul.f32.gmra.mxu0 %v3878
      %v3990 = vpop.f32.mrf.mxu0
      %v3991 = vadd.f32 0.0, %v3990
      %3992 = vmatmul.f32.gmra.mxu0 %v3881
      %v3993 = vpop.f32.mrf.mxu0
      %v3994 = vadd.f32 0.0, %v3993
      %3995 = vmatmul.f32.gmra.mxu0 %v3884
      %v3996 = vpop.f32.mrf.mxu0
      %v3997 = vadd.f32 0.0, %v3996
      %3998 = vmatmul.f32.gmra.mxu0 %v3887
      %v3999 = vpop.f32.mrf.mxu0
      %v4000 = vadd.f32 0.0, %v3999
      %4001 = vmatmul.f32.gmra.mxu0 %v3890
      %v4002 = vpop.f32.mrf.mxu0
      %v4003 = vadd.f32 0.0, %v4002
      %4004 = vmatmul.f32.gmra.mxu0 %v3893
      %v4005 = vpop.f32.mrf.mxu0
      %v4006 = vadd.f32 0.0, %v4005
      %4007 = vmatmul.f32.gmra.mxu0 %v3896
      %v4008 = vpop.f32.mrf.mxu0
      %v4009 = vadd.f32 0.0, %v4008
      %4010 = vmatmul.f32.gmra.mxu0 %v3899
      %v4011 = vpop.f32.mrf.mxu0
      %v4012 = vadd.f32 0.0, %v4011
      %4013 = vmatmul.f32.gmra.mxu0 %v3902
      %v4014 = vpop.f32.mrf.mxu0
      %v4015 = vadd.f32 0.0, %v4014
      %4016 = vmatmul.f32.gmra.mxu0 %v3905
      %v4017 = vpop.f32.mrf.mxu0
      %v4018 = vadd.f32 0.0, %v4017
      %4019 = vmatmul.f32.gmra.mxu0 %v3908
      %v4020 = vpop.f32.mrf.mxu0
      %v4021 = vadd.f32 0.0, %v4020
      %4022 = vmatmul.f32.gmra.mxu0 %v3911
      %v4023 = vpop.f32.mrf.mxu0
      %v4024 = vadd.f32 0.0, %v4023
      %4025 = vmatmul.f32.gmra.mxu0 %v3914
      %v4026 = vpop.f32.mrf.mxu0
      %v4027 = vadd.f32 0.0, %v4026
      %4028 = vmatmul.f32.gmra.mxu0 %v3917
      %v4029 = vpop.f32.mrf.mxu0
      %v4030 = vadd.f32 0.0, %v4029
      %4031 = vmatmul.f32.gmra.mxu0 %v3920
      %v4032 = vpop.f32.mrf.mxu0
      %v4033 = vadd.f32 0.0, %v4032
      %4034 = vmatmul.f32.gmra.mxu0 %v3923
      %v4035 = vpop.f32.mrf.mxu0
      %v4036 = vadd.f32 0.0, %v4035
      %4037 = vmatmul.f32.gmra.mxu0 %v3926
      %v4038 = vpop.f32.mrf.mxu0
      %v4039 = vadd.f32 0.0, %v4038
      %4040 = vmatmul.f32.gmra.mxu0 %v3929
      %v4041 = vpop.f32.mrf.mxu0
      %v4042 = vadd.f32 0.0, %v4041
      %4043 = vmatmul.f32.gmra.mxu0 %v3932
      %v4044 = vpop.f32.mrf.mxu0
      %v4045 = vadd.f32 0.0, %v4044
      %4046 = vmatmul.f32.gmra.mxu0 %v3935
      %v4047 = vpop.f32.mrf.mxu0
      %v4048 = vadd.f32 0.0, %v4047
      %4049 = vmatmul.f32.gmra.mxu0 %v3938
      %v4050 = vpop.f32.mrf.mxu0
      %v4051 = vadd.f32 0.0, %v4050
      %4052 = vmatmul.f32.gmra.mxu0 %v3941
      %v4053 = vpop.f32.mrf.mxu0
      %v4054 = vadd.f32 0.0, %v4053
      %4055 = vmatmul.f32.gmra.mxu0 %v3944
      %v4056 = vpop.f32.mrf.mxu0
      %v4057 = vadd.f32 0.0, %v4056
      %4058 = vmatmul.f32.gmra.mxu0 %v3947
      %v4059 = vpop.f32.mrf.mxu0
      %v4060 = vadd.f32 0.0, %v4059
      %4061 = vdwg.mxu0
      %v4062 = vld [vmem:[%s5] sm:$0x1]
      %v4064 = vperm.slane %v4062, 0
      %v4066 = vadd.f32 %v3967, %v4064
      %v4067 = vadd.f32 %v3970, %v4064
      %v4068 = vadd.f32 %v3973, %v4064
      %v4069 = vadd.f32 %v3976, %v4064
      %v4070 = vadd.f32 %v3979, %v4064
      %v4071 = vadd.f32 %v3982, %v4064
      %v4072 = vadd.f32 %v3985, %v4064
      %v4073 = vadd.f32 %v3988, %v4064
      %v4074 = vadd.f32 %v3991, %v4064
      %v4075 = vadd.f32 %v3994, %v4064
      %v4076 = vadd.f32 %v3997, %v4064
      %v4077 = vadd.f32 %v4000, %v4064
      %v4078 = vadd.f32 %v4003, %v4064
      %v4079 = vadd.f32 %v4006, %v4064
      %v4080 = vadd.f32 %v4009, %v4064
      %v4081 = vadd.f32 %v4012, %v4064
      %v4082 = vadd.f32 %v4015, %v4064
      %v4083 = vadd.f32 %v4018, %v4064
      %v4084 = vadd.f32 %v4021, %v4064
      %v4085 = vadd.f32 %v4024, %v4064
      %v4086 = vadd.f32 %v4027, %v4064
      %v4087 = vadd.f32 %v4030, %v4064
      %v4088 = vadd.f32 %v4033, %v4064
      %v4089 = vadd.f32 %v4036, %v4064
      %v4090 = vadd.f32 %v4039, %v4064
      %v4091 = vadd.f32 %v4042, %v4064
      %v4092 = vadd.f32 %v4045, %v4064
      %v4093 = vadd.f32 %v4048, %v4064
      %v4094 = vadd.f32 %v4051, %v4064
      %v4095 = vadd.f32 %v4054, %v4064
      %v4096 = vadd.f32 %v4057, %v4064
      %v4097 = vadd.f32 %v4060, %v4064
      %s4098 = sadd.s32 %s277, 1
      %s4099 = smul.u32 %s4098, 24
      %s4100 = scalar_lea.vmem %s265, %s4099
      %v4101 = vld [vmem:[%s4100 + $0x1] sm:$0xff]
      %v4102 = vld [vmem:[%s4100 + $0x9] sm:$0xff]
      %v4103 = vld [vmem:[%s4100 + $0x19] sm:$0xff]
      %v4104 = vld [vmem:[%s4100 + $0x21] sm:$0xff]
      %v4105 = vld [vmem:[%s4100 + $0x31] sm:$0xff]
      %v4106 = vld [vmem:[%s4100 + $0x39] sm:$0xff]
      %v4107 = vld [vmem:[%s4100 + $0x49] sm:$0xff]
      %v4108 = vld [vmem:[%s4100 + $0x51] sm:$0xff]
      %v4109 = vld [vmem:[%s4100 + $0x61] sm:$0xff]
      %v4110 = vld [vmem:[%s4100 + $0x69] sm:$0xff]
      %v4111 = vld [vmem:[%s4100 + $0x79] sm:$0xff]
      %v4112 = vld [vmem:[%s4100 + $0x81] sm:$0xff]
      %v4113 = vld [vmem:[%s4100 + $0x91] sm:$0xff]
      %v4114 = vld [vmem:[%s4100 + $0x99] sm:$0xff]
      %v4115 = vld [vmem:[%s4100 + $0xa9] sm:$0xff]
      %v4116 = vld [vmem:[%s4100 + $0xb1] sm:$0xff]
      %v4117 = vld [vmem:[%s4100 + $0xc1] sm:$0xff]
      %v4118 = vld [vmem:[%s4100 + $0xc9] sm:$0xff]
      %v4119 = vld [vmem:[%s4100 + $0xd9] sm:$0xff]
      %v4120 = vld [vmem:[%s4100 + $0xe1] sm:$0xff]
      %v4121 = vld [vmem:[%s4100 + $0xf1] sm:$0xff]
      %v4122 = vld [vmem:[%s4100 + $0xf9] sm:$0xff]
      %v4123 = vld [vmem:[%s4100 + $0x109] sm:$0xff]
      %v4124 = vld [vmem:[%s4100 + $0x111] sm:$0xff]
      %v4125 = vld [vmem:[%s4100 + $0x121] sm:$0xff]
      %v4126 = vld [vmem:[%s4100 + $0x129] sm:$0xff]
      %v4127 = vld [vmem:[%s4100 + $0x139] sm:$0xff]
      %v4128 = vld [vmem:[%s4100 + $0x141] sm:$0xff]
      %v4129 = vld [vmem:[%s4100 + $0x151] sm:$0xff]
      %v4130 = vld [vmem:[%s4100 + $0x159] sm:$0xff]
      %v4131 = vld [vmem:[%s4100 + $0x169] sm:$0xff]
      %v4132 = vld [vmem:[%s4100 + $0x171] sm:$0xff]
      %v4133 = vadd.f32 %v4066, %v4101
      %v4134 = vadd.f32 %v4067, %v4102
      %v4135 = vadd.f32 %v4068, %v4103
      %v4136 = vadd.f32 %v4069, %v4104
      %v4137 = vadd.f32 %v4070, %v4105
      %v4138 = vadd.f32 %v4071, %v4106
      %v4139 = vadd.f32 %v4072, %v4107
      %v4140 = vadd.f32 %v4073, %v4108
      %v4141 = vadd.f32 %v4074, %v4109
      %v4142 = vadd.f32 %v4075, %v4110
      %v4143 = vadd.f32 %v4076, %v4111
      %v4144 = vadd.f32 %v4077, %v4112
      %v4145 = vadd.f32 %v4078, %v4113
      %v4146 = vadd.f32 %v4079, %v4114
      %v4147 = vadd.f32 %v4080, %v4115
      %v4148 = vadd.f32 %v4081, %v4116
      %v4149 = vadd.f32 %v4082, %v4117
      %v4150 = vadd.f32 %v4083, %v4118
      %v4151 = vadd.f32 %v4084, %v4119
      %v4152 = vadd.f32 %v4085, %v4120
      %v4153 = vadd.f32 %v4086, %v4121
      %v4154 = vadd.f32 %v4087, %v4122
      %v4155 = vadd.f32 %v4088, %v4123
      %v4156 = vadd.f32 %v4089, %v4124
      %v4157 = vadd.f32 %v4090, %v4125
      %v4158 = vadd.f32 %v4091, %v4126
      %v4159 = vadd.f32 %v4092, %v4127
      %v4160 = vadd.f32 %v4093, %v4128
      %v4161 = vadd.f32 %v4094, %v4129
      %v4162 = vadd.f32 %v4095, %v4130
      %v4163 = vadd.f32 %v4096, %v4131
      %v4164 = vadd.f32 %v4097, %v4132
      %vm4165 = vcmask 31744
      %4166 = vst.msk [vmem:[%s275] sm:$0xff] %vm4165, %v4133
      %4167 = vst.msk [vmem:[%s275 + $0x8] sm:$0xff] %vm4165, %v4134
      %4168 = vst.msk [vmem:[%s275 + $0x10] sm:$0xff] %vm4165, %v4135
      %4169 = vst.msk [vmem:[%s275 + $0x18] sm:$0xff] %vm4165, %v4136
      %4170 = vst.msk [vmem:[%s275 + $0x20] sm:$0xff] %vm4165, %v4137
      %4171 = vst.msk [vmem:[%s275 + $0x28] sm:$0xff] %vm4165, %v4138
      %4172 = vst.msk [vmem:[%s275 + $0x30] sm:$0xff] %vm4165, %v4139
      %4173 = vst.msk [vmem:[%s275 + $0x38] sm:$0xff] %vm4165, %v4140
      %4174 = vst.msk [vmem:[%s275 + $0x40] sm:$0xff] %vm4165, %v4141
      %4175 = vst.msk [vmem:[%s275 + $0x48] sm:$0xff] %vm4165, %v4142
      %4176 = vst.msk [vmem:[%s275 + $0x50] sm:$0xff] %vm4165, %v4143
      %4177 = vst.msk [vmem:[%s275 + $0x58] sm:$0xff] %vm4165, %v4144
      %4178 = vst.msk [vmem:[%s275 + $0x60] sm:$0xff] %vm4165, %v4145
      %4179 = vst.msk [vmem:[%s275 + $0x68] sm:$0xff] %vm4165, %v4146
      %4180 = vst.msk [vmem:[%s275 + $0x70] sm:$0xff] %vm4165, %v4147
      %4181 = vst.msk [vmem:[%s275 + $0x78] sm:$0xff] %vm4165, %v4148
      %4182 = vst.msk [vmem:[%s275 + $0x80] sm:$0xff] %vm4165, %v4149
      %4183 = vst.msk [vmem:[%s275 + $0x88] sm:$0xff] %vm4165, %v4150
      %4184 = vst.msk [vmem:[%s275 + $0x90] sm:$0xff] %vm4165, %v4151
      %4185 = vst.msk [vmem:[%s275 + $0x98] sm:$0xff] %vm4165, %v4152
      %4186 = vst.msk [vmem:[%s275 + $0xa0] sm:$0xff] %vm4165, %v4153
      %4187 = vst.msk [vmem:[%s275 + $0xa8] sm:$0xff] %vm4165, %v4154
      %4188 = vst.msk [vmem:[%s275 + $0xb0] sm:$0xff] %vm4165, %v4155
      %4189 = vst.msk [vmem:[%s275 + $0xb8] sm:$0xff] %vm4165, %v4156
      %4190 = vst.msk [vmem:[%s275 + $0xc0] sm:$0xff] %vm4165, %v4157
      %4191 = vst.msk [vmem:[%s275 + $0xc8] sm:$0xff] %vm4165, %v4158
      %4192 = vst.msk [vmem:[%s275 + $0xd0] sm:$0xff] %vm4165, %v4159
      %4193 = vst.msk [vmem:[%s275 + $0xd8] sm:$0xff] %vm4165, %v4160
      %4194 = vst.msk [vmem:[%s275 + $0xe0] sm:$0xff] %vm4165, %v4161
      %4195 = vst.msk [vmem:[%s275 + $0xe8] sm:$0xff] %vm4165, %v4162
      %4196 = vst.msk [vmem:[%s275 + $0xf0] sm:$0xff] %vm4165, %v4163
      %4197 = vst.msk [vmem:[%s275 + $0xf8] sm:$0xff] %vm4165, %v4164
      %s4198 = smul.u32 16, %s22
      %p4199 = scmp.lt.s32.totalorder %s21, 1
      %s4200 = scalar_select %p4199, %s21, 1
      %p4201 = scmp.lt.s32.totalorder %s4198, 15
      %s4202 = scalar_select %p4201, %s4198, 15
      %s4203 = smul.addr %s4202, 2
      %s4204 = smul.addr %s4200, 32
      %s4205 = sadd.s32 %s4203, %s4204
      %s4206 = smul.addr %s4205, 8
      %s4207 = scalar_lea.vmem %s6, %s4206
      // Predicated region
      $region49: #{invres_forward.1} parent=43 // pred_check
        %p4208 = pneg %p180
      $region50: #{invres_forward.1} parent=43 // pred_check_branch
        %4210 = sbr.rel (%p4208) target = $region52
      $region51: #{invres_forward.1} parent=43 // pred_region
        %s4211 = smul.u32 16, %s22
      $region52: #{invres_forward.1} parent=43 // pred_fallthru
        _
    $region44: #{invres_forward.1} parent=5 // pred_fallthru
      _
    %p4212 = scmp.le.s32.totalorder 2, %s12
    // Predicated region
    $region53: #{invres_forward.1} parent=5 // pred_check
      %p4213 = pneg %p4212
    $region54: #{invres_forward.1} parent=5 // pred_check_branch
      %4215 = sbr.rel (%p4213) target = $region56
    $region55: #{invres_forward.1} parent=5 // pred_region
      %s4216 = ssub.s32 %s12, 2
      // Predicated region
      $region57: #{invres_forward.1} parent=55 // pred_check
        %p4217 = pneg %p186
      $region58: #{invres_forward.1} parent=55 // pred_check_branch
        %4219 = sbr.rel (%p4217) target = $region60
      $region59: #{invres_forward.1} parent=55 // pred_region
        %s4220 = smul.u32 16, %s24
        %p4221 = scmp.lt.s32.totalorder %s23, 1
        %s4222 = scalar_select %p4221, %s23, 1
        %p4223 = scmp.lt.s32.totalorder %s4220, 15
        %s4224 = scalar_select %p4223, %s4220, 15
        %s4225 = smul.addr %s4224, 2
        %s4226 = smul.addr %s4222, 32
        %s4227 = sadd.s32 %s4225, %s4226
        %s4228 = smul.addr %s4227, 8
        %s4229 = scalar_lea.vmem %s6, %s4228
      $region60: #{invres_forward.1} parent=55 // pred_fallthru
        _
    $region56: #{invres_forward.1} parent=5 // pred_fallthru
      _
  $region6: #{invres_forward.1} parent=0 // loop_footer
    %s16 = sadd.s32 1, %s12
  $region7: #{invres_forward.1} parent=0 // loop_footer_branch
    %11 = sbr.rel target = $region3
  $region8: #{invres_forward.1} parent=0 // loop_exit
    _

</llo_original>
